<compile_context>
chip_gen: v5e
topology: v5e:2x2
jax: 0.10.0
libtpu: 0.0.40
codegen_flags: <defaults>
</compile_context>

<pallas_src>
import jax
import jax.numpy as jnp
import numpy as np
from jax import lax
from jax.experimental import pallas as pl


# --------------------------------------------------------------------------
# In-kernel helpers (operate on loaded values; all shapes are static).
# --------------------------------------------------------------------------
def _conv_relu(x, w_ref, b_ref):
    """VALID Conv2d (stride 1) + bias + ReLU.

    x:      (N, H, W, Cin) NHWC value
    w_ref:  (KH, KW*Cin, Cout) ref  -- taps pre-merged over (kw, cin)
    b_ref:  (1, Cout) ref
    returns (N, HO, WO, Cout)
    """
    n, hc, wc, cin = x.shape
    kh_n = w_ref.shape[0]
    kw_n = w_ref.shape[1] // cin
    cout = w_ref.shape[2]
    ho, wo = hc - kh_n + 1, wc - kw_n + 1

    # One channel-axis concat per conv layer: lane index of xcat is
    # (kw, cin), matching the prepared weight layout.
    xcat = jnp.concatenate([x[:, :, kw:kw + wo, :] for kw in range(kw_n)],
                           axis=-1)                       # (N, H, WO, KW*Cin)

    def tap(kh):
        patch = xcat[:, kh:kh + ho, :, :].reshape(n * ho * wo, kw_n * cin)
        return jnp.dot(patch, w_ref[kh], preferred_element_type=jnp.float32)

    acc = tap(0)
    for kh in range(1, kh_n):
        acc = acc + tap(kh)
    y = jnp.maximum(acc + b_ref[...], 0.0)
    return y.reshape(n, ho, wo, cout)


def _maxpool2x2(y):
    """nn.MaxPool2d(kernel_size=2, stride=2), floor mode, on an NHWC value."""
    n, hc, wc, c = y.shape
    hp, wp = hc // 2, wc // 2
    y = y[:, :2 * hp, :2 * wp, :]
    yw = y.reshape(n, 2 * hp, wp, 2, c)
    y = jnp.maximum(yw[:, :, :, 0, :], yw[:, :, :, 1, :])     # pool along W
    yh = y.reshape(n, hp, 2, wp, c)
    return jnp.maximum(yh[:, :, 0, :, :], yh[:, :, 1, :, :])  # pool along H


# --------------------------------------------------------------------------
# The single fused forward kernel (no grid; everything fits easily in VMEM).
# --------------------------------------------------------------------------
def _fused_forward_kernel(x_ref, lidar_ref,
                          w1_ref, b1_ref, w2_ref, b2_ref,
                          wcam_ref, bcam_ref,
                          wl1_ref, bl1_ref, wl2_ref, bl2_ref,
                          wc1c_ref, wc1l_ref, bc1_ref,
                          wc2_ref, bc2_ref, wc3_ref, bc3_ref,
                          o_ref):
    relu = lambda v: jnp.maximum(v, 0.0)
    dot = lambda a, b: jnp.dot(a, b, preferred_element_type=jnp.float32)

    # ---- camera conv stack (activations never leave VMEM/vregs) ----
    y = _maxpool2x2(_conv_relu(x_ref[...], w1_ref, b1_ref))   # (N, 6, 6, 32)
    y = _maxpool2x2(_conv_relu(y, w2_ref, b2_ref))            # (N, 2, 2, 64)

    # Flatten -> Linear(flat, 64) as a sum of per-spatial-position matmuls
    # (weight columns were regrouped per (hp, wp) in prepare_params), which
    # avoids a lane-fold reshape of the pooled activations.
    n, hp2, wp2, _ = y.shape
    cam = jnp.zeros((n, wcam_ref.shape[-1]), jnp.float32)
    for i in range(hp2):
        for j in range(wp2):
            cam = cam + dot(y[:, i, j, :], wcam_ref[i, j])
    cam = relu(cam + bcam_ref[...])

    # ---- lidar branch ----
    lid = relu(dot(lidar_ref[...], wl1_ref[...]) + bl1_ref[...])
    # nn.Dropout(0.2): eval-mode identity
    lid = relu(dot(lid, wl2_ref[...]) + bl2_ref[...])

    # ---- combined head: torch.cat((cam, lid), 1) @ Wc1 expressed with a
    #      pre-split weight (no lane concat needed) ----
    h = relu(dot(cam, wc1c_ref[...]) + dot(lid, wc1l_ref[...]) + bc1_ref[...])
    # nn.Dropout(0.3): eval-mode identity
    h = relu(dot(h, wc2_ref[...]) + bc2_ref[...])
    # Final (N, 2) write is a single masked store; negligible once fused.
    o_ref[...] = jnp.tanh(dot(h, wc3_ref[...]) + bc3_ref[...])


# --------------------------------------------------------------------------
# One-time parameter preparation: all layout work hoisted out of the forward.
# --------------------------------------------------------------------------
def prepare_params(p, img_shape):
    C, H, W = img_shape
    cout1, cin1, kh1, kw1 = p["conv1_w"].shape
    cout2, cin2, kh2, kw2 = p["conv2_w"].shape
    assert cin1 == C and cin2 == cout1

    ho1, wo1 = H - kh1 + 1, W - kw1 + 1
    hp1, wp1 = ho1 // 2, wo1 // 2
    ho2, wo2 = hp1 - kh2 + 1, wp1 - kw2 + 1
    hp2, wp2 = ho2 // 2, wo2 // 2

    # OIHW -> HWIO -> (KH, KW*Cin, Cout); contraction index = (kw, cin),
    # matching the in-kernel patch concat order.
    w1 = jnp.transpose(p["conv1_w"], (2, 3, 1, 0)).reshape(kh1, kw1 * cin1, cout1)
    w2 = jnp.transpose(p["conv2_w"], (2, 3, 1, 0)).reshape(kh2, kw2 * cin2, cout2)

    # torch Flatten() of the NCHW conv output is (c, hp, wp)-ordered; regroup
    # the Linear weight into per-(hp, wp) blocks of shape (c_in, c_out).
    ncam = p["fc_cam_w"].shape[0]
    wcam = (p["fc_cam_w"].reshape(ncam, cout2, hp2, wp2)
            .transpose(2, 3, 1, 0))                       # (hp2, wp2, c, 64)

    wc1 = p["head1_w"].T                                  # (128_in, 128_out)
    row = lambda b: b.reshape(1, -1)
    return dict(
        w1=w1, b1=row(p["conv1_b"]),
        w2=w2, b2=row(p["conv2_b"]),
        wcam=wcam, bcam=row(p["fc_cam_b"]),
        wl1=p["lid1_w"].T, bl1=row(p["lid1_b"]),
        wl2=p["lid2_w"].T, bl2=row(p["lid2_b"]),
        wc1_cam=wc1[:ncam, :], wc1_lid=wc1[ncam:, :], bc1=row(p["head1_b"]),
        wc2=p["head2_w"].T, bc2=row(p["head2_b"]),
        wc3=p["head3_w"].T, bc3=row(p["head3_b"]),
    )


# --------------------------------------------------------------------------
# Forward pass: one NCHW->NHWC transpose of the input data + ONE pallas_call.
# --------------------------------------------------------------------------
@jax.jit
def forward_pallas(cam_nchw, lidar, prep):
    x = jnp.transpose(cam_nchw, (0, 2, 3, 1))             # NCHW -> NHWC glue
    n = x.shape[0]
    return pl.pallas_call(
        _fused_forward_kernel,
        out_shape=jax.ShapeDtypeStruct((n, 2), jnp.float32),
    )(x, lidar,
      prep["w1"], prep["b1"], prep["w2"], prep["b2"],
      prep["wcam"], prep["bcam"],
      prep["wl1"], prep["bl1"], prep["wl2"], prep["bl2"],
      prep["wc1_cam"], prep["wc1_lid"], prep["bc1"],
      prep["wc2"], prep["bc2"], prep["wc3"], prep["bc3"])


# --------------------------------------------------------------------------
# Parameter init (deterministic, Kaiming-normal-like, torch layouts).
# --------------------------------------------------------------------------
def init_params(key, lidar_in, img_shape):
    C, H, W = img_shape
    H1, W1 = H - 4, W - 4
    H1p, W1p = H1 // 2, W1 // 2
    H2, W2 = H1p - 2, W1p - 2
    H2p, W2p = H2 // 2, W2 // 2
    flat = 64 * H2p * W2p

    ks = jax.random.split(key, 8)

    def kaiming(k, shape, fan_in):
        return jax.random.normal(k, shape, jnp.float32) * jnp.sqrt(2.0 / fan_in)

    return dict(
        conv1_w=kaiming(ks[0], (32, C, 5, 5), C * 25),
        conv1_b=jnp.zeros((32,), jnp.float32),
        conv2_w=kaiming(ks[1], (64, 32, 3, 3), 32 * 9),
        conv2_b=jnp.zeros((64,), jnp.float32),
        fc_cam_w=kaiming(ks[2], (64, flat), flat),
        fc_cam_b=jnp.zeros((64,), jnp.float32),
        lid1_w=kaiming(ks[3], (128, lidar_in), lidar_in),
        lid1_b=jnp.zeros((128,), jnp.float32),
        lid2_w=kaiming(ks[4], (64, 128), 128),
        lid2_b=jnp.zeros((64,), jnp.float32),
        head1_w=kaiming(ks[5], (128, 128), 128),
        head1_b=jnp.zeros((128,), jnp.float32),
        head2_w=kaiming(ks[6], (64, 128), 128),
        head2_b=jnp.zeros((64,), jnp.float32),
        head3_w=kaiming(ks[7], (2, 64), 64),
        head3_b=jnp.zeros((2,), jnp.float32),
    )


# --------------------------------------------------------------------------
# Pure-JAX NCHW reference (mirrors the PyTorch forward, eval-mode dropout).
# --------------------------------------------------------------------------
def forward_reference(cam_nchw, lidar, p):
    hp = jax.lax.Precision.HIGHEST

    def conv(x, w, b):
        y = lax.conv_general_dilated(x, w, (1, 1), "VALID",
                                     dimension_numbers=("NCHW", "OIHW", "NCHW"),
                                     precision=hp)
        return jnp.maximum(y + b[None, :, None, None], 0.0)

    def pool(x):
        return lax.reduce_window(x, -jnp.inf, lax.max,
                                 (1, 1, 2, 2), (1, 1, 2, 2), "VALID")

    x = pool(conv(cam_nchw, p["conv1_w"], p["conv1_b"]))
    x = pool(conv(x, p["conv2_w"], p["conv2_b"]))
    x = x.reshape(x.shape[0], -1)                         # (c,h,w) torch flatten

    relu = lambda v: jnp.maximum(v, 0.0)
    mm = lambda a, w: jnp.dot(a, w.T, precision=hp)

    cam_f = relu(mm(x, p["fc_cam_w"]) + p["fc_cam_b"])
    l = relu(mm(lidar, p["lid1_w"]) + p["lid1_b"])
    l = relu(mm(l, p["lid2_w"]) + p["lid2_b"])
    c = jnp.concatenate([cam_f, l], axis=1)
    h = relu(mm(c, p["head1_w"]) + p["head1_b"])
    h = relu(mm(h, p["head2_w"]) + p["head2_b"])
    return jnp.tanh(mm(h, p["head3_w"]) + p["head3_b"])


if __name__ == "__main__":
    # Small shapes consistent with the module (C=4 camera channels).
    N, C, H, W = 2, 4, 16, 16
    LIDAR_IN = 32

    key = jax.random.PRNGKey(0)
    k_cam, k_lidar, k_param = jax.random.split(key, 3)
    cam = jax.random.normal(k_cam, (N, C, H, W), jnp.float32)       # NCHW
    lidar = jax.random.normal(k_lidar, (N, LIDAR_IN), jnp.float32)

    params = init_params(k_param, LIDAR_IN, (C, H, W))
    prep = prepare_params(params, (C, H, W))   # one-time layout prep (hoisted)

    out = forward_pallas(cam, lidar, prep)
    out = jax.block_until_ready(out)
    assert out.shape == (N, 2)

    ref = forward_reference(cam, lidar, params)
    np.testing.assert_allclose(np.asarray(out), np.asarray(ref),
                               atol=1e-4, rtol=1e-4)

    # TODO(synk): nn.Dropout train-mode RNG not reproduced; kernel runs eval-mode (identity).
    print("KERNEL_OK")
</pallas_src>

<mosaic_0001>
module attributes {stable_mosaic.version = 11 : i64} {
  func.func @_fused_forward_kernel(%arg0: memref<2x16x16x4xf32, #tpu.memory_space<vmem>>, %arg1: memref<2x32xf32, #tpu.memory_space<vmem>>, %arg2: memref<5x20x32xf32, #tpu.memory_space<vmem>>, %arg3: memref<1x32xf32, #tpu.memory_space<vmem>>, %arg4: memref<3x96x64xf32, #tpu.memory_space<vmem>>, %arg5: memref<1x64xf32, #tpu.memory_space<vmem>>, %arg6: memref<2x2x64x64xf32, #tpu.memory_space<vmem>>, %arg7: memref<1x64xf32, #tpu.memory_space<vmem>>, %arg8: memref<32x128xf32, #tpu.memory_space<vmem>>, %arg9: memref<1x128xf32, #tpu.memory_space<vmem>>, %arg10: memref<128x64xf32, #tpu.memory_space<vmem>>, %arg11: memref<1x64xf32, #tpu.memory_space<vmem>>, %arg12: memref<64x128xf32, #tpu.memory_space<vmem>>, %arg13: memref<64x128xf32, #tpu.memory_space<vmem>>, %arg14: memref<1x128xf32, #tpu.memory_space<vmem>>, %arg15: memref<128x64xf32, #tpu.memory_space<vmem>>, %arg16: memref<1x64xf32, #tpu.memory_space<vmem>>, %arg17: memref<64x2xf32, #tpu.memory_space<vmem>>, %arg18: memref<1x2xf32, #tpu.memory_space<vmem>>, %arg19: memref<2x2xf32, #tpu.memory_space<vmem>>) attributes {dimension_semantics = [], scalar_prefetch = 0 : i64, scratch_operands = 0 : i64, tpu.core_type = #tpu.core_type<tc>} {
    %c0 = arith.constant 0 : index
    %c0_0 = arith.constant 0 : index
    %c0_1 = arith.constant 0 : index
    %c0_2 = arith.constant 0 : index
    %0 = vector.load %arg0[%c0, %c0_0, %c0_1, %c0_2] : memref<2x16x16x4xf32, #tpu.memory_space<vmem>>, vector<2x16x16x4xf32>
    %1 = vector.extract_strided_slice %0 {offsets = [0, 0, 0, 0], sizes = [2, 16, 12, 4], strides = [1, 1, 1, 1]} : vector<2x16x16x4xf32> to vector<2x16x12x4xf32>
    %2 = vector.extract_strided_slice %0 {offsets = [0, 0, 1, 0], sizes = [2, 16, 12, 4], strides = [1, 1, 1, 1]} : vector<2x16x16x4xf32> to vector<2x16x12x4xf32>
    %3 = vector.extract_strided_slice %0 {offsets = [0, 0, 2, 0], sizes = [2, 16, 12, 4], strides = [1, 1, 1, 1]} : vector<2x16x16x4xf32> to vector<2x16x12x4xf32>
    %4 = vector.extract_strided_slice %0 {offsets = [0, 0, 3, 0], sizes = [2, 16, 12, 4], strides = [1, 1, 1, 1]} : vector<2x16x16x4xf32> to vector<2x16x12x4xf32>
    %5 = vector.extract_strided_slice %0 {offsets = [0, 0, 4, 0], sizes = [2, 16, 12, 4], strides = [1, 1, 1, 1]} : vector<2x16x16x4xf32> to vector<2x16x12x4xf32>
    %6 = tpu.concatenate %1, %2, %3, %4, %5 in 3 : vector<2x16x12x4xf32>, vector<2x16x12x4xf32>, vector<2x16x12x4xf32>, vector<2x16x12x4xf32>, vector<2x16x12x4xf32> -> vector<2x16x12x20xf32>
    %7 = vector.extract_strided_slice %6 {offsets = [0, 0, 0, 0], sizes = [2, 12, 12, 20], strides = [1, 1, 1, 1]} : vector<2x16x12x20xf32> to vector<2x12x12x20xf32>
    %8 = vector.shape_cast %7 : vector<2x12x12x20xf32> to vector<288x20xf32>
    %c0_3 = arith.constant 0 : index
    %c0_4 = arith.constant 0 : index
    %c0_5 = arith.constant 0 : index
    %9 = vector.load %arg2[%c0_3, %c0_4, %c0_5] : memref<5x20x32xf32, #tpu.memory_space<vmem>>, vector<1x20x32xf32>
    %10 = vector.shape_cast %9 : vector<1x20x32xf32> to vector<20x32xf32>
    %cst = arith.constant dense<0.000000e+00> : vector<288x32xf32>
    %11 = tpu.matmul %8, %10, %cst {dimension_numbers = #tpu.dot_dimension_numbers<[1], [0], [0], [1], [0, 0, 1, 1], [], []>} : vector<288x20xf32>, vector<20x32xf32>, vector<288x32xf32> -> vector<288x32xf32>
    %12 = vector.extract_strided_slice %6 {offsets = [0, 1, 0, 0], sizes = [2, 12, 12, 20], strides = [1, 1, 1, 1]} : vector<2x16x12x20xf32> to vector<2x12x12x20xf32>
    %13 = vector.shape_cast %12 : vector<2x12x12x20xf32> to vector<288x20xf32>
    %c1 = arith.constant 1 : index
    %c0_6 = arith.constant 0 : index
    %c0_7 = arith.constant 0 : index
    %14 = vector.load %arg2[%c1, %c0_6, %c0_7] : memref<5x20x32xf32, #tpu.memory_space<vmem>>, vector<1x20x32xf32>
    %15 = vector.shape_cast %14 : vector<1x20x32xf32> to vector<20x32xf32>
    %cst_8 = arith.constant dense<0.000000e+00> : vector<288x32xf32>
    %16 = tpu.matmul %13, %15, %cst_8 {dimension_numbers = #tpu.dot_dimension_numbers<[1], [0], [0], [1], [0, 0, 1, 1], [], []>} : vector<288x20xf32>, vector<20x32xf32>, vector<288x32xf32> -> vector<288x32xf32>
    %17 = arith.addf %11, %16 : vector<288x32xf32>
    %18 = vector.extract_strided_slice %6 {offsets = [0, 2, 0, 0], sizes = [2, 12, 12, 20], strides = [1, 1, 1, 1]} : vector<2x16x12x20xf32> to vector<2x12x12x20xf32>
    %19 = vector.shape_cast %18 : vector<2x12x12x20xf32> to vector<288x20xf32>
    %c2 = arith.constant 2 : index
    %c0_9 = arith.constant 0 : index
    %c0_10 = arith.constant 0 : index
    %20 = vector.load %arg2[%c2, %c0_9, %c0_10] : memref<5x20x32xf32, #tpu.memory_space<vmem>>, vector<1x20x32xf32>
    %21 = vector.shape_cast %20 : vector<1x20x32xf32> to vector<20x32xf32>
    %cst_11 = arith.constant dense<0.000000e+00> : vector<288x32xf32>
    %22 = tpu.matmul %19, %21, %cst_11 {dimension_numbers = #tpu.dot_dimension_numbers<[1], [0], [0], [1], [0, 0, 1, 1], [], []>} : vector<288x20xf32>, vector<20x32xf32>, vector<288x32xf32> -> vector<288x32xf32>
    %23 = arith.addf %17, %22 : vector<288x32xf32>
    %24 = vector.extract_strided_slice %6 {offsets = [0, 3, 0, 0], sizes = [2, 12, 12, 20], strides = [1, 1, 1, 1]} : vector<2x16x12x20xf32> to vector<2x12x12x20xf32>
    %25 = vector.shape_cast %24 : vector<2x12x12x20xf32> to vector<288x20xf32>
    %c3 = arith.constant 3 : index
    %c0_12 = arith.constant 0 : index
    %c0_13 = arith.constant 0 : index
    %26 = vector.load %arg2[%c3, %c0_12, %c0_13] : memref<5x20x32xf32, #tpu.memory_space<vmem>>, vector<1x20x32xf32>
    %27 = vector.shape_cast %26 : vector<1x20x32xf32> to vector<20x32xf32>
    %cst_14 = arith.constant dense<0.000000e+00> : vector<288x32xf32>
    %28 = tpu.matmul %25, %27, %cst_14 {dimension_numbers = #tpu.dot_dimension_numbers<[1], [0], [0], [1], [0, 0, 1, 1], [], []>} : vector<288x20xf32>, vector<20x32xf32>, vector<288x32xf32> -> vector<288x32xf32>
    %29 = arith.addf %23, %28 : vector<288x32xf32>
    %30 = vector.extract_strided_slice %6 {offsets = [0, 4, 0, 0], sizes = [2, 12, 12, 20], strides = [1, 1, 1, 1]} : vector<2x16x12x20xf32> to vector<2x12x12x20xf32>
    %31 = vector.shape_cast %30 : vector<2x12x12x20xf32> to vector<288x20xf32>
    %c4 = arith.constant 4 : index
    %c0_15 = arith.constant 0 : index
    %c0_16 = arith.constant 0 : index
    %32 = vector.load %arg2[%c4, %c0_15, %c0_16] : memref<5x20x32xf32, #tpu.memory_space<vmem>>, vector<1x20x32xf32>
    %33 = vector.shape_cast %32 : vector<1x20x32xf32> to vector<20x32xf32>
    %cst_17 = arith.constant dense<0.000000e+00> : vector<288x32xf32>
    %34 = tpu.matmul %31, %33, %cst_17 {dimension_numbers = #tpu.dot_dimension_numbers<[1], [0], [0], [1], [0, 0, 1, 1], [], []>} : vector<288x20xf32>, vector<20x32xf32>, vector<288x32xf32> -> vector<288x32xf32>
    %35 = arith.addf %29, %34 : vector<288x32xf32>
    %c0_18 = arith.constant 0 : index
    %c0_19 = arith.constant 0 : index
    %36 = vector.load %arg3[%c0_18, %c0_19] : memref<1x32xf32, #tpu.memory_space<vmem>>, vector<1x32xf32>
    %37 = vector.broadcast %36 : vector<1x32xf32> to vector<288x32xf32>
    %38 = arith.addf %35, %37 : vector<288x32xf32>
    %cst_20 = arith.constant 0.000000e+00 : f32
    %39 = vector.broadcast %cst_20 : f32 to vector<288x32xf32>
    %40 = arith.maximumf %38, %39 : vector<288x32xf32>
    %41 = vector.shape_cast %40 : vector<288x32xf32> to vector<2x12x12x32xf32>
    %42 = vector.shape_cast %41 : vector<2x12x12x32xf32> to vector<2x12x6x2x32xf32>
    %43 = vector.extract_strided_slice %42 {offsets = [0, 0, 0, 0, 0], sizes = [2, 12, 6, 1, 32], strides = [1, 1, 1, 1, 1]} : vector<2x12x6x2x32xf32> to vector<2x12x6x1x32xf32>
    %44 = vector.shape_cast %43 : vector<2x12x6x1x32xf32> to vector<2x12x6x32xf32>
    %45 = vector.extract_strided_slice %42 {offsets = [0, 0, 0, 1, 0], sizes = [2, 12, 6, 1, 32], strides = [1, 1, 1, 1, 1]} : vector<2x12x6x2x32xf32> to vector<2x12x6x1x32xf32>
    %46 = vector.shape_cast %45 : vector<2x12x6x1x32xf32> to vector<2x12x6x32xf32>
    %47 = arith.maximumf %44, %46 : vector<2x12x6x32xf32>
    %48 = vector.shape_cast %47 : vector<2x12x6x32xf32> to vector<2x6x2x6x32xf32>
    %49 = vector.extract_strided_slice %48 {offsets = [0, 0, 0, 0, 0], sizes = [2, 6, 1, 6, 32], strides = [1, 1, 1, 1, 1]} : vector<2x6x2x6x32xf32> to vector<2x6x1x6x32xf32>
    %50 = vector.shape_cast %49 : vector<2x6x1x6x32xf32> to vector<2x6x6x32xf32>
    %51 = vector.extract_strided_slice %48 {offsets = [0, 0, 1, 0, 0], sizes = [2, 6, 1, 6, 32], strides = [1, 1, 1, 1, 1]} : vector<2x6x2x6x32xf32> to vector<2x6x1x6x32xf32>
    %52 = vector.shape_cast %51 : vector<2x6x1x6x32xf32> to vector<2x6x6x32xf32>
    %53 = arith.maximumf %50, %52 : vector<2x6x6x32xf32>
    %54 = vector.extract_strided_slice %53 {offsets = [0, 0, 0, 0], sizes = [2, 6, 4, 32], strides = [1, 1, 1, 1]} : vector<2x6x6x32xf32> to vector<2x6x4x32xf32>
    %55 = vector.extract_strided_slice %53 {offsets = [0, 0, 1, 0], sizes = [2, 6, 4, 32], strides = [1, 1, 1, 1]} : vector<2x6x6x32xf32> to vector<2x6x4x32xf32>
    %56 = vector.extract_strided_slice %53 {offsets = [0, 0, 2, 0], sizes = [2, 6, 4, 32], strides = [1, 1, 1, 1]} : vector<2x6x6x32xf32> to vector<2x6x4x32xf32>
    %57 = tpu.concatenate %54, %55, %56 in 3 : vector<2x6x4x32xf32>, vector<2x6x4x32xf32>, vector<2x6x4x32xf32> -> vector<2x6x4x96xf32>
    %58 = vector.extract_strided_slice %57 {offsets = [0, 0, 0, 0], sizes = [2, 4, 4, 96], strides = [1, 1, 1, 1]} : vector<2x6x4x96xf32> to vector<2x4x4x96xf32>
    %59 = vector.shape_cast %58 : vector<2x4x4x96xf32> to vector<32x96xf32>
    %c0_21 = arith.constant 0 : index
    %c0_22 = arith.constant 0 : index
    %c0_23 = arith.constant 0 : index
    %60 = vector.load %arg4[%c0_21, %c0_22, %c0_23] : memref<3x96x64xf32, #tpu.memory_space<vmem>>, vector<1x96x64xf32>
    %61 = vector.shape_cast %60 : vector<1x96x64xf32> to vector<96x64xf32>
    %cst_24 = arith.constant dense<0.000000e+00> : vector<32x64xf32>
    %62 = tpu.matmul %59, %61, %cst_24 {dimension_numbers = #tpu.dot_dimension_numbers<[1], [0], [0], [1], [0, 0, 1, 1], [], []>} : vector<32x96xf32>, vector<96x64xf32>, vector<32x64xf32> -> vector<32x64xf32>
    %63 = vector.extract_strided_slice %57 {offsets = [0, 1, 0, 0], sizes = [2, 4, 4, 96], strides = [1, 1, 1, 1]} : vector<2x6x4x96xf32> to vector<2x4x4x96xf32>
    %64 = vector.shape_cast %63 : vector<2x4x4x96xf32> to vector<32x96xf32>
    %c1_25 = arith.constant 1 : index
    %c0_26 = arith.constant 0 : index
    %c0_27 = arith.constant 0 : index
    %65 = vector.load %arg4[%c1_25, %c0_26, %c0_27] : memref<3x96x64xf32, #tpu.memory_space<vmem>>, vector<1x96x64xf32>
    %66 = vector.shape_cast %65 : vector<1x96x64xf32> to vector<96x64xf32>
    %cst_28 = arith.constant dense<0.000000e+00> : vector<32x64xf32>
    %67 = tpu.matmul %64, %66, %cst_28 {dimension_numbers = #tpu.dot_dimension_numbers<[1], [0], [0], [1], [0, 0, 1, 1], [], []>} : vector<32x96xf32>, vector<96x64xf32>, vector<32x64xf32> -> vector<32x64xf32>
    %68 = arith.addf %62, %67 : vector<32x64xf32>
    %69 = vector.extract_strided_slice %57 {offsets = [0, 2, 0, 0], sizes = [2, 4, 4, 96], strides = [1, 1, 1, 1]} : vector<2x6x4x96xf32> to vector<2x4x4x96xf32>
    %70 = vector.shape_cast %69 : vector<2x4x4x96xf32> to vector<32x96xf32>
    %c2_29 = arith.constant 2 : index
    %c0_30 = arith.constant 0 : index
    %c0_31 = arith.constant 0 : index
    %71 = vector.load %arg4[%c2_29, %c0_30, %c0_31] : memref<3x96x64xf32, #tpu.memory_space<vmem>>, vector<1x96x64xf32>
    %72 = vector.shape_cast %71 : vector<1x96x64xf32> to vector<96x64xf32>
    %cst_32 = arith.constant dense<0.000000e+00> : vector<32x64xf32>
    %73 = tpu.matmul %70, %72, %cst_32 {dimension_numbers = #tpu.dot_dimension_numbers<[1], [0], [0], [1], [0, 0, 1, 1], [], []>} : vector<32x96xf32>, vector<96x64xf32>, vector<32x64xf32> -> vector<32x64xf32>
    %74 = arith.addf %68, %73 : vector<32x64xf32>
    %c0_33 = arith.constant 0 : index
    %c0_34 = arith.constant 0 : index
    %75 = vector.load %arg5[%c0_33, %c0_34] : memref<1x64xf32, #tpu.memory_space<vmem>>, vector<1x64xf32>
    %76 = vector.broadcast %75 : vector<1x64xf32> to vector<32x64xf32>
    %77 = arith.addf %74, %76 : vector<32x64xf32>
    %cst_35 = arith.constant 0.000000e+00 : f32
    %78 = vector.broadcast %cst_35 : f32 to vector<32x64xf32>
    %79 = arith.maximumf %77, %78 : vector<32x64xf32>
    %80 = vector.shape_cast %79 : vector<32x64xf32> to vector<2x4x4x64xf32>
    %81 = vector.shape_cast %80 : vector<2x4x4x64xf32> to vector<2x4x2x2x64xf32>
    %82 = vector.extract_strided_slice %81 {offsets = [0, 0, 0, 0, 0], sizes = [2, 4, 2, 1, 64], strides = [1, 1, 1, 1, 1]} : vector<2x4x2x2x64xf32> to vector<2x4x2x1x64xf32>
    %83 = vector.shape_cast %82 : vector<2x4x2x1x64xf32> to vector<2x4x2x64xf32>
    %84 = vector.extract_strided_slice %81 {offsets = [0, 0, 0, 1, 0], sizes = [2, 4, 2, 1, 64], strides = [1, 1, 1, 1, 1]} : vector<2x4x2x2x64xf32> to vector<2x4x2x1x64xf32>
    %85 = vector.shape_cast %84 : vector<2x4x2x1x64xf32> to vector<2x4x2x64xf32>
    %86 = arith.maximumf %83, %85 : vector<2x4x2x64xf32>
    %87 = vector.shape_cast %86 : vector<2x4x2x64xf32> to vector<2x2x2x2x64xf32>
    %88 = vector.extract_strided_slice %87 {offsets = [0, 0, 0, 0, 0], sizes = [2, 2, 1, 2, 64], strides = [1, 1, 1, 1, 1]} : vector<2x2x2x2x64xf32> to vector<2x2x1x2x64xf32>
    %89 = vector.shape_cast %88 : vector<2x2x1x2x64xf32> to vector<2x2x2x64xf32>
    %90 = vector.extract_strided_slice %87 {offsets = [0, 0, 1, 0, 0], sizes = [2, 2, 1, 2, 64], strides = [1, 1, 1, 1, 1]} : vector<2x2x2x2x64xf32> to vector<2x2x1x2x64xf32>
    %91 = vector.shape_cast %90 : vector<2x2x1x2x64xf32> to vector<2x2x2x64xf32>
    %92 = arith.maximumf %89, %91 : vector<2x2x2x64xf32>
    %cst_36 = arith.constant 0.000000e+00 : f32
    %93 = vector.broadcast %cst_36 : f32 to vector<2x64xf32>
    %94 = vector.extract_strided_slice %92 {offsets = [0, 0, 0, 0], sizes = [2, 1, 1, 64], strides = [1, 1, 1, 1]} : vector<2x2x2x64xf32> to vector<2x1x1x64xf32>
    %95 = vector.shape_cast %94 : vector<2x1x1x64xf32> to vector<2x64xf32>
    %c0_37 = arith.constant 0 : index
    %c0_38 = arith.constant 0 : index
    %c0_39 = arith.constant 0 : index
    %c0_40 = arith.constant 0 : index
    %96 = vector.load %arg6[%c0_37, %c0_38, %c0_39, %c0_40] : memref<2x2x64x64xf32, #tpu.memory_space<vmem>>, vector<1x1x64x64xf32>
    %97 = vector.shape_cast %96 : vector<1x1x64x64xf32> to vector<64x64xf32>
    %cst_41 = arith.constant dense<0.000000e+00> : vector<2x64xf32>
    %98 = tpu.matmul %95, %97, %cst_41 {dimension_numbers = #tpu.dot_dimension_numbers<[1], [0], [0], [1], [0, 0, 1, 1], [], []>} : vector<2x64xf32>, vector<64x64xf32>, vector<2x64xf32> -> vector<2x64xf32>
    %99 = arith.addf %93, %98 : vector<2x64xf32>
    %100 = vector.extract_strided_slice %92 {offsets = [0, 0, 1, 0], sizes = [2, 1, 1, 64], strides = [1, 1, 1, 1]} : vector<2x2x2x64xf32> to vector<2x1x1x64xf32>
    %101 = vector.shape_cast %100 : vector<2x1x1x64xf32> to vector<2x64xf32>
    %c0_42 = arith.constant 0 : index
    %c1_43 = arith.constant 1 : index
    %c0_44 = arith.constant 0 : index
    %c0_45 = arith.constant 0 : index
    %102 = vector.load %arg6[%c0_42, %c1_43, %c0_44, %c0_45] : memref<2x2x64x64xf32, #tpu.memory_space<vmem>>, vector<1x1x64x64xf32>
    %103 = vector.shape_cast %102 : vector<1x1x64x64xf32> to vector<64x64xf32>
    %cst_46 = arith.constant dense<0.000000e+00> : vector<2x64xf32>
    %104 = tpu.matmul %101, %103, %cst_46 {dimension_numbers = #tpu.dot_dimension_numbers<[1], [0], [0], [1], [0, 0, 1, 1], [], []>} : vector<2x64xf32>, vector<64x64xf32>, vector<2x64xf32> -> vector<2x64xf32>
    %105 = arith.addf %99, %104 : vector<2x64xf32>
    %106 = vector.extract_strided_slice %92 {offsets = [0, 1, 0, 0], sizes = [2, 1, 1, 64], strides = [1, 1, 1, 1]} : vector<2x2x2x64xf32> to vector<2x1x1x64xf32>
    %107 = vector.shape_cast %106 : vector<2x1x1x64xf32> to vector<2x64xf32>
    %c1_47 = arith.constant 1 : index
    %c0_48 = arith.constant 0 : index
    %c0_49 = arith.constant 0 : index
    %c0_50 = arith.constant 0 : index
    %108 = vector.load %arg6[%c1_47, %c0_48, %c0_49, %c0_50] : memref<2x2x64x64xf32, #tpu.memory_space<vmem>>, vector<1x1x64x64xf32>
    %109 = vector.shape_cast %108 : vector<1x1x64x64xf32> to vector<64x64xf32>
    %cst_51 = arith.constant dense<0.000000e+00> : vector<2x64xf32>
    %110 = tpu.matmul %107, %109, %cst_51 {dimension_numbers = #tpu.dot_dimension_numbers<[1], [0], [0], [1], [0, 0, 1, 1], [], []>} : vector<2x64xf32>, vector<64x64xf32>, vector<2x64xf32> -> vector<2x64xf32>
    %111 = arith.addf %105, %110 : vector<2x64xf32>
    %112 = vector.extract_strided_slice %92 {offsets = [0, 1, 1, 0], sizes = [2, 1, 1, 64], strides = [1, 1, 1, 1]} : vector<2x2x2x64xf32> to vector<2x1x1x64xf32>
    %113 = vector.shape_cast %112 : vector<2x1x1x64xf32> to vector<2x64xf32>
    %c1_52 = arith.constant 1 : index
    %c1_53 = arith.constant 1 : index
    %c0_54 = arith.constant 0 : index
    %c0_55 = arith.constant 0 : index
    %114 = vector.load %arg6[%c1_52, %c1_53, %c0_54, %c0_55] : memref<2x2x64x64xf32, #tpu.memory_space<vmem>>, vector<1x1x64x64xf32>
    %115 = vector.shape_cast %114 : vector<1x1x64x64xf32> to vector<64x64xf32>
    %cst_56 = arith.constant dense<0.000000e+00> : vector<2x64xf32>
    %116 = tpu.matmul %113, %115, %cst_56 {dimension_numbers = #tpu.dot_dimension_numbers<[1], [0], [0], [1], [0, 0, 1, 1], [], []>} : vector<2x64xf32>, vector<64x64xf32>, vector<2x64xf32> -> vector<2x64xf32>
    %117 = arith.addf %111, %116 : vector<2x64xf32>
    %c0_57 = arith.constant 0 : index
    %c0_58 = arith.constant 0 : index
    %118 = vector.load %arg7[%c0_57, %c0_58] : memref<1x64xf32, #tpu.memory_space<vmem>>, vector<1x64xf32>
    %119 = vector.broadcast %118 : vector<1x64xf32> to vector<2x64xf32>
    %120 = arith.addf %117, %119 : vector<2x64xf32>
    %cst_59 = arith.constant 0.000000e+00 : f32
    %121 = vector.broadcast %cst_59 : f32 to vector<2x64xf32>
    %122 = arith.maximumf %120, %121 : vector<2x64xf32>
    %c0_60 = arith.constant 0 : index
    %c0_61 = arith.constant 0 : index
    %123 = vector.load %arg1[%c0_60, %c0_61] : memref<2x32xf32, #tpu.memory_space<vmem>>, vector<2x32xf32>
    %c0_62 = arith.constant 0 : index
    %c0_63 = arith.constant 0 : index
    %124 = vector.load %arg8[%c0_62, %c0_63] : memref<32x128xf32, #tpu.memory_space<vmem>>, vector<32x128xf32>
    %cst_64 = arith.constant dense<0.000000e+00> : vector<2x128xf32>
    %125 = tpu.matmul %123, %124, %cst_64 {dimension_numbers = #tpu.dot_dimension_numbers<[1], [0], [0], [1], [0, 0, 1, 1], [], []>} : vector<2x32xf32>, vector<32x128xf32>, vector<2x128xf32> -> vector<2x128xf32>
    %c0_65 = arith.constant 0 : index
    %c0_66 = arith.constant 0 : index
    %126 = vector.load %arg9[%c0_65, %c0_66] : memref<1x128xf32, #tpu.memory_space<vmem>>, vector<1x128xf32>
    %127 = vector.broadcast %126 : vector<1x128xf32> to vector<2x128xf32>
    %128 = arith.addf %125, %127 : vector<2x128xf32>
    %cst_67 = arith.constant 0.000000e+00 : f32
    %129 = vector.broadcast %cst_67 : f32 to vector<2x128xf32>
    %130 = arith.maximumf %128, %129 : vector<2x128xf32>
    %c0_68 = arith.constant 0 : index
    %c0_69 = arith.constant 0 : index
    %131 = vector.load %arg10[%c0_68, %c0_69] : memref<128x64xf32, #tpu.memory_space<vmem>>, vector<128x64xf32>
    %cst_70 = arith.constant dense<0.000000e+00> : vector<2x64xf32>
    %132 = tpu.matmul %130, %131, %cst_70 {dimension_numbers = #tpu.dot_dimension_numbers<[1], [0], [0], [1], [0, 0, 1, 1], [], []>} : vector<2x128xf32>, vector<128x64xf32>, vector<2x64xf32> -> vector<2x64xf32>
    %c0_71 = arith.constant 0 : index
    %c0_72 = arith.constant 0 : index
    %133 = vector.load %arg11[%c0_71, %c0_72] : memref<1x64xf32, #tpu.memory_space<vmem>>, vector<1x64xf32>
    %134 = vector.broadcast %133 : vector<1x64xf32> to vector<2x64xf32>
    %135 = arith.addf %132, %134 : vector<2x64xf32>
    %cst_73 = arith.constant 0.000000e+00 : f32
    %136 = vector.broadcast %cst_73 : f32 to vector<2x64xf32>
    %137 = arith.maximumf %135, %136 : vector<2x64xf32>
    %c0_74 = arith.constant 0 : index
    %c0_75 = arith.constant 0 : index
    %138 = vector.load %arg12[%c0_74, %c0_75] : memref<64x128xf32, #tpu.memory_space<vmem>>, vector<64x128xf32>
    %cst_76 = arith.constant dense<0.000000e+00> : vector<2x128xf32>
    %139 = tpu.matmul %122, %138, %cst_76 {dimension_numbers = #tpu.dot_dimension_numbers<[1], [0], [0], [1], [0, 0, 1, 1], [], []>} : vector<2x64xf32>, vector<64x128xf32>, vector<2x128xf32> -> vector<2x128xf32>
    %c0_77 = arith.constant 0 : index
    %c0_78 = arith.constant 0 : index
    %140 = vector.load %arg13[%c0_77, %c0_78] : memref<64x128xf32, #tpu.memory_space<vmem>>, vector<64x128xf32>
    %cst_79 = arith.constant dense<0.000000e+00> : vector<2x128xf32>
    %141 = tpu.matmul %137, %140, %cst_79 {dimension_numbers = #tpu.dot_dimension_numbers<[1], [0], [0], [1], [0, 0, 1, 1], [], []>} : vector<2x64xf32>, vector<64x128xf32>, vector<2x128xf32> -> vector<2x128xf32>
    %142 = arith.addf %139, %141 : vector<2x128xf32>
    %c0_80 = arith.constant 0 : index
    %c0_81 = arith.constant 0 : index
    %143 = vector.load %arg14[%c0_80, %c0_81] : memref<1x128xf32, #tpu.memory_space<vmem>>, vector<1x128xf32>
    %144 = vector.broadcast %143 : vector<1x128xf32> to vector<2x128xf32>
    %145 = arith.addf %142, %144 : vector<2x128xf32>
    %cst_82 = arith.constant 0.000000e+00 : f32
    %146 = vector.broadcast %cst_82 : f32 to vector<2x128xf32>
    %147 = arith.maximumf %145, %146 : vector<2x128xf32>
    %c0_83 = arith.constant 0 : index
    %c0_84 = arith.constant 0 : index
    %148 = vector.load %arg15[%c0_83, %c0_84] : memref<128x64xf32, #tpu.memory_space<vmem>>, vector<128x64xf32>
    %cst_85 = arith.constant dense<0.000000e+00> : vector<2x64xf32>
    %149 = tpu.matmul %147, %148, %cst_85 {dimension_numbers = #tpu.dot_dimension_numbers<[1], [0], [0], [1], [0, 0, 1, 1], [], []>} : vector<2x128xf32>, vector<128x64xf32>, vector<2x64xf32> -> vector<2x64xf32>
    %c0_86 = arith.constant 0 : index
    %c0_87 = arith.constant 0 : index
    %150 = vector.load %arg16[%c0_86, %c0_87] : memref<1x64xf32, #tpu.memory_space<vmem>>, vector<1x64xf32>
    %151 = vector.broadcast %150 : vector<1x64xf32> to vector<2x64xf32>
    %152 = arith.addf %149, %151 : vector<2x64xf32>
    %cst_88 = arith.constant 0.000000e+00 : f32
    %153 = vector.broadcast %cst_88 : f32 to vector<2x64xf32>
    %154 = arith.maximumf %152, %153 : vector<2x64xf32>
    %c0_89 = arith.constant 0 : index
    %c0_90 = arith.constant 0 : index
    %155 = vector.load %arg17[%c0_89, %c0_90] : memref<64x2xf32, #tpu.memory_space<vmem>>, vector<64x2xf32>
    %cst_91 = arith.constant dense<0.000000e+00> : vector<2x2xf32>
    %156 = tpu.matmul %154, %155, %cst_91 {dimension_numbers = #tpu.dot_dimension_numbers<[1], [0], [0], [1], [0, 0, 1, 1], [], []>} : vector<2x64xf32>, vector<64x2xf32>, vector<2x2xf32> -> vector<2x2xf32>
    %c0_92 = arith.constant 0 : index
    %c0_93 = arith.constant 0 : index
    %157 = vector.load %arg18[%c0_92, %c0_93] : memref<1x2xf32, #tpu.memory_space<vmem>>, vector<1x2xf32>
    %158 = vector.broadcast %157 : vector<1x2xf32> to vector<2x2xf32>
    %159 = arith.addf %156, %158 : vector<2x2xf32>
    %160 = math.tanh %159 : vector<2x2xf32>
    %c0_94 = arith.constant 0 : index
    %c0_95 = arith.constant 0 : index
    %161 = vector.load %arg19[%c0_94, %c0_95] : memref<2x2xf32, #tpu.memory_space<vmem>>, vector<2x2xf32>
    tpu.vector_store %arg19[%c0_94, %c0_95], %160 {strides = array<i32>} : memref<2x2xf32, #tpu.memory_space<vmem>>, vector<2x2xf32>,
    return
  }
}

</mosaic_0001>

<llo_original>
// kernel: forward_pallas.1
$region0: #{forward_pallas.1}
  #allocation0 [shape = 'u32[]', space=smem, size = 0x4, offset = 0x4, fixed_abs, tag = 'smem constant byte address 0x4 - core index']
  #allocation1 [shape = 'u32[72,128]{1,0:T(1,128)}', space=vmem, size = 0x9000, scoped, tag = 'internal scratch']
  %s0 = inlined_call_operand.vmem [shape: f32[2,16,16,4], index: 0, kind: input, shape index: {}]
  %s1 = inlined_call_operand.vmem [shape: f32[2,32], index: 1, kind: input, shape index: {}]
  %s2 = inlined_call_operand.vmem [shape: f32[5,20,32], index: 2, kind: input, shape index: {}]
  %s3 = inlined_call_operand.vmem [shape: f32[1,32], index: 3, kind: input, shape index: {}]
  %s4 = inlined_call_operand.vmem [shape: f32[3,96,64], index: 4, kind: input, shape index: {}]
  %s5 = inlined_call_operand.vmem [shape: f32[1,64], index: 5, kind: input, shape index: {}]
  %s6 = inlined_call_operand.vmem [shape: f32[2,2,64,64], index: 6, kind: input, shape index: {}]
  %s7 = inlined_call_operand.vmem [shape: f32[1,64], index: 7, kind: input, shape index: {}]
  %s8 = inlined_call_operand.vmem [shape: f32[32,128], index: 8, kind: input, shape index: {}]
  %s9 = inlined_call_operand.vmem [shape: f32[1,128], index: 9, kind: input, shape index: {}]
  %s10 = inlined_call_operand.vmem [shape: f32[128,64], index: 10, kind: input, shape index: {}]
  %s11 = inlined_call_operand.vmem [shape: f32[1,64], index: 11, kind: input, shape index: {}]
  %s12 = inlined_call_operand.vmem [shape: f32[64,128], index: 12, kind: input, shape index: {}]
  %s13 = inlined_call_operand.vmem [shape: f32[64,128], index: 13, kind: input, shape index: {}]
  %s14 = inlined_call_operand.vmem [shape: f32[1,128], index: 14, kind: input, shape index: {}]
  %s15 = inlined_call_operand.vmem [shape: f32[128,64], index: 15, kind: input, shape index: {}]
  %s16 = inlined_call_operand.vmem [shape: f32[1,64], index: 16, kind: input, shape index: {}]
  %s17 = inlined_call_operand.vmem [shape: f32[64,2], index: 17, kind: input, shape index: {}]
  %s18 = inlined_call_operand.vmem [shape: f32[1,2], index: 18, kind: input, shape index: {}]
  %s19 = inlined_call_operand.hbm [shape: f32[2,2], index: 19, kind: output, shape index: {}]
  %s20 = sld [smem:[#allocation0]]
  $region86: #{forward_pallas.1} parent=0
    _
  %s22 = ssub.s32 1, %s20
  %s23 = scalar_select 0, %s22, %s20
  $region1: #{forward_pallas.1} parent=0
    #allocation2 [shape = 'u8[1024]{0}', space=vmem, size = 0x400, scoped, tag = 'output window, operand 0, single buffered']
    #allocation3 [shape = 's32[1]{0}', space=sflag, size = 0x4, scoped, tag = 'scoped memory for forward_pallas.1']
    %24 = vsyncpa [#allocation3], 0
    // Predicated region
    $region2: #{forward_pallas.1} parent=1 // pred_check
      _
    $region3: #{forward_pallas.1} parent=1 // pred_check_branch
      %26 = sbr.rel (0) target = $region5
    $region4: #{forward_pallas.1} parent=1 // pred_region
      _
    $region5: #{forward_pallas.1} parent=1 // pred_fallthru
      _
    // Predicated region
    $region6: #{forward_pallas.1} parent=1 // pred_check
      _
    $region7: #{forward_pallas.1} parent=1 // pred_check_branch
      %28 = sbr.rel (0) target = $region9
    $region8: #{forward_pallas.1} parent=1 // pred_region
      _
    $region9: #{forward_pallas.1} parent=1 // pred_fallthru
      _
    // Predicated region
    $region10: #{forward_pallas.1} parent=1 // pred_check
      _
    $region11: #{forward_pallas.1} parent=1 // pred_check_branch
      %30 = sbr.rel (0) target = $region13
    $region12: #{forward_pallas.1} parent=1 // pred_region
      _
    $region13: #{forward_pallas.1} parent=1 // pred_fallthru
      _
    // Predicated region
    $region14: #{forward_pallas.1} parent=1 // pred_check
      _
    $region15: #{forward_pallas.1} parent=1 // pred_check_branch
      %32 = sbr.rel (0) target = $region17
    $region16: #{forward_pallas.1} parent=1 // pred_region
      _
    $region17: #{forward_pallas.1} parent=1 // pred_fallthru
      _
    // Predicated region
    $region18: #{forward_pallas.1} parent=1 // pred_check
      _
    $region19: #{forward_pallas.1} parent=1 // pred_check_branch
      %34 = sbr.rel (0) target = $region21
    $region20: #{forward_pallas.1} parent=1 // pred_region
      _
    $region21: #{forward_pallas.1} parent=1 // pred_fallthru
      _
    // Predicated region
    $region22: #{forward_pallas.1} parent=1 // pred_check
      _
    $region23: #{forward_pallas.1} parent=1 // pred_check_branch
      %36 = sbr.rel (0) target = $region25
    $region24: #{forward_pallas.1} parent=1 // pred_region
      _
    $region25: #{forward_pallas.1} parent=1 // pred_fallthru
      _
    // Predicated region
    $region26: #{forward_pallas.1} parent=1 // pred_check
      _
    $region27: #{forward_pallas.1} parent=1 // pred_check_branch
      %38 = sbr.rel (0) target = $region29
    $region28: #{forward_pallas.1} parent=1 // pred_region
      _
    $region29: #{forward_pallas.1} parent=1 // pred_fallthru
      _
    // Predicated region
    $region30: #{forward_pallas.1} parent=1 // pred_check
      _
    $region31: #{forward_pallas.1} parent=1 // pred_check_branch
      %40 = sbr.rel (0) target = $region33
    $region32: #{forward_pallas.1} parent=1 // pred_region
      _
    $region33: #{forward_pallas.1} parent=1 // pred_fallthru
      _
    // Predicated region
    $region34: #{forward_pallas.1} parent=1 // pred_check
      _
    $region35: #{forward_pallas.1} parent=1 // pred_check_branch
      %42 = sbr.rel (0) target = $region37
    $region36: #{forward_pallas.1} parent=1 // pred_region
      _
    $region37: #{forward_pallas.1} parent=1 // pred_fallthru
      _
    // Predicated region
    $region38: #{forward_pallas.1} parent=1 // pred_check
      _
    $region39: #{forward_pallas.1} parent=1 // pred_check_branch
      %44 = sbr.rel (0) target = $region41
    $region40: #{forward_pallas.1} parent=1 // pred_region
      _
    $region41: #{forward_pallas.1} parent=1 // pred_fallthru
      _
    // Predicated region
    $region42: #{forward_pallas.1} parent=1 // pred_check
      _
    $region43: #{forward_pallas.1} parent=1 // pred_check_branch
      %46 = sbr.rel (0) target = $region45
    $region44: #{forward_pallas.1} parent=1 // pred_region
      _
    $region45: #{forward_pallas.1} parent=1 // pred_fallthru
      _
    // Predicated region
    $region46: #{forward_pallas.1} parent=1 // pred_check
      _
    $region47: #{forward_pallas.1} parent=1 // pred_check_branch
      %48 = sbr.rel (0) target = $region49
    $region48: #{forward_pallas.1} parent=1 // pred_region
      _
    $region49: #{forward_pallas.1} parent=1 // pred_fallthru
      _
    // Predicated region
    $region50: #{forward_pallas.1} parent=1 // pred_check
      _
    $region51: #{forward_pallas.1} parent=1 // pred_check_branch
      %50 = sbr.rel (0) target = $region53
    $region52: #{forward_pallas.1} parent=1 // pred_region
      _
    $region53: #{forward_pallas.1} parent=1 // pred_fallthru
      _
    // Predicated region
    $region54: #{forward_pallas.1} parent=1 // pred_check
      _
    $region55: #{forward_pallas.1} parent=1 // pred_check_branch
      %52 = sbr.rel (0) target = $region57
    $region56: #{forward_pallas.1} parent=1 // pred_region
      _
    $region57: #{forward_pallas.1} parent=1 // pred_fallthru
      _
    // Predicated region
    $region58: #{forward_pallas.1} parent=1 // pred_check
      _
    $region59: #{forward_pallas.1} parent=1 // pred_check_branch
      %54 = sbr.rel (0) target = $region61
    $region60: #{forward_pallas.1} parent=1 // pred_region
      _
    $region61: #{forward_pallas.1} parent=1 // pred_fallthru
      _
    // Predicated region
    $region62: #{forward_pallas.1} parent=1 // pred_check
      _
    $region63: #{forward_pallas.1} parent=1 // pred_check_branch
      %56 = sbr.rel (0) target = $region65
    $region64: #{forward_pallas.1} parent=1 // pred_region
      _
    $region65: #{forward_pallas.1} parent=1 // pred_fallthru
      _
    // Predicated region
    $region66: #{forward_pallas.1} parent=1 // pred_check
      _
    $region67: #{forward_pallas.1} parent=1 // pred_check_branch
      %58 = sbr.rel (0) target = $region69
    $region68: #{forward_pallas.1} parent=1 // pred_region
      _
    $region69: #{forward_pallas.1} parent=1 // pred_fallthru
      _
    // Predicated region
    $region70: #{forward_pallas.1} parent=1 // pred_check
      _
    $region71: #{forward_pallas.1} parent=1 // pred_check_branch
      %60 = sbr.rel (0) target = $region73
    $region72: #{forward_pallas.1} parent=1 // pred_region
      _
    $region73: #{forward_pallas.1} parent=1 // pred_fallthru
      _
    // Predicated region
    $region74: #{forward_pallas.1} parent=1 // pred_check
      _
    $region75: #{forward_pallas.1} parent=1 // pred_check_branch
      %62 = sbr.rel (0) target = $region77
    $region76: #{forward_pallas.1} parent=1 // pred_region
      _
    $region77: #{forward_pallas.1} parent=1 // pred_fallthru
      _
    %v63 = vld [vmem:[%s0] sm:$0xff]
    %v64 = vld [vmem:[%s0 + $0x8] sm:$0xff]
    %v65 = vld [vmem:[%s0 + $0x10] sm:$0xff]
    %v66 = vld [vmem:[%s0 + $0x18] sm:$0xff]
    %v67 = vld [vmem:[%s0 + $0x20] sm:$0xff]
    %v68 = vld [vmem:[%s0 + $0x28] sm:$0xff]
    %v69 = vld [vmem:[%s0 + $0x30] sm:$0xff]
    %v70 = vld [vmem:[%s0 + $0x38] sm:$0xff]
    %v71 = vld [vmem:[%s0 + $0x40] sm:$0xff]
    %v72 = vld [vmem:[%s0 + $0x48] sm:$0xff]
    %v73 = vld [vmem:[%s0 + $0x50] sm:$0xff]
    %v74 = vld [vmem:[%s0 + $0x58] sm:$0xff]
    %v75 = vld [vmem:[%s0 + $0x60] sm:$0xff]
    %v76 = vld [vmem:[%s0 + $0x68] sm:$0xff]
    %v77 = vld [vmem:[%s0 + $0x70] sm:$0xff]
    %v78 = vld [vmem:[%s0 + $0x78] sm:$0xff]
    %v79 = vld [vmem:[%s0 + $0x80] sm:$0xff]
    %v80 = vld [vmem:[%s0 + $0x88] sm:$0xff]
    %v81 = vld [vmem:[%s0 + $0x90] sm:$0xff]
    %v82 = vld [vmem:[%s0 + $0x98] sm:$0xff]
    %v83 = vld [vmem:[%s0 + $0xa0] sm:$0xff]
    %v84 = vld [vmem:[%s0 + $0xa8] sm:$0xff]
    %v85 = vld [vmem:[%s0 + $0xb0] sm:$0xff]
    %v86 = vld [vmem:[%s0 + $0xb8] sm:$0xff]
    %v87 = vld [vmem:[%s0 + $0xc0] sm:$0xff]
    %v88 = vld [vmem:[%s0 + $0xc8] sm:$0xff]
    %v89 = vld [vmem:[%s0 + $0xd0] sm:$0xff]
    %v90 = vld [vmem:[%s0 + $0xd8] sm:$0xff]
    %v91 = vld [vmem:[%s0 + $0xe0] sm:$0xff]
    %v92 = vld [vmem:[%s0 + $0xe8] sm:$0xff]
    %v93 = vld [vmem:[%s0 + $0xf0] sm:$0xff]
    %v94 = vld [vmem:[%s0 + $0xf8] sm:$0xff]
    %v95 = vld [vmem:[%s0 + $0x100] sm:$0xff]
    %v96 = vld [vmem:[%s0 + $0x108] sm:$0xff]
    %v97 = vld [vmem:[%s0 + $0x110] sm:$0xff]
    %v98 = vld [vmem:[%s0 + $0x118] sm:$0xff]
    %v99 = vld [vmem:[%s0 + $0x120] sm:$0xff]
    %v100 = vld [vmem:[%s0 + $0x128] sm:$0xff]
    %v101 = vld [vmem:[%s0 + $0x130] sm:$0xff]
    %v102 = vld [vmem:[%s0 + $0x138] sm:$0xff]
    %v103 = vld [vmem:[%s0 + $0x140] sm:$0xff]
    %v104 = vld [vmem:[%s0 + $0x148] sm:$0xff]
    %v105 = vld [vmem:[%s0 + $0x150] sm:$0xff]
    %v106 = vld [vmem:[%s0 + $0x158] sm:$0xff]
    %v107 = vld [vmem:[%s0 + $0x160] sm:$0xff]
    %v108 = vld [vmem:[%s0 + $0x168] sm:$0xff]
    %v109 = vld [vmem:[%s0 + $0x170] sm:$0xff]
    %v110 = vld [vmem:[%s0 + $0x178] sm:$0xff]
    %v111 = vld [vmem:[%s0 + $0x180] sm:$0xff]
    %v112 = vld [vmem:[%s0 + $0x188] sm:$0xff]
    %v113 = vld [vmem:[%s0 + $0x190] sm:$0xff]
    %v114 = vld [vmem:[%s0 + $0x198] sm:$0xff]
    %v115 = vld [vmem:[%s0 + $0x1a0] sm:$0xff]
    %v116 = vld [vmem:[%s0 + $0x1a8] sm:$0xff]
    %v117 = vld [vmem:[%s0 + $0x1b0] sm:$0xff]
    %v118 = vld [vmem:[%s0 + $0x1b8] sm:$0xff]
    %v119 = vld [vmem:[%s0 + $0x1c0] sm:$0xff]
    %v120 = vld [vmem:[%s0 + $0x1c8] sm:$0xff]
    %v121 = vld [vmem:[%s0 + $0x1d0] sm:$0xff]
    %v122 = vld [vmem:[%s0 + $0x1d8] sm:$0xff]
    %v123 = vld [vmem:[%s0 + $0x1e0] sm:$0xff]
    %v124 = vld [vmem:[%s0 + $0x1e8] sm:$0xff]
    %v125 = vld [vmem:[%s0 + $0x1f0] sm:$0xff]
    %v126 = vld [vmem:[%s0 + $0x1f8] sm:$0xff]
    %vm191 = vcmask 1046528
    %v192 = vrot.slane %v63, 1
    %v193 = vrot.slane %v64, 1
    %v194 = vsel %vm191, %v192, %v193
    %v195 = vrot.slane %v65, 1
    %v196 = vrot.slane %v66, 1
    %v197 = vsel %vm191, %v195, %v196
    %v198 = vrot.slane %v67, 1
    %v199 = vrot.slane %v68, 1
    %v200 = vsel %vm191, %v198, %v199
    %v201 = vrot.slane %v69, 1
    %v202 = vrot.slane %v70, 1
    %v203 = vsel %vm191, %v201, %v202
    %v204 = vrot.slane %v71, 1
    %v205 = vrot.slane %v72, 1
    %v206 = vsel %vm191, %v204, %v205
    %v207 = vrot.slane %v73, 1
    %v208 = vrot.slane %v74, 1
    %v209 = vsel %vm191, %v207, %v208
    %v210 = vrot.slane %v75, 1
    %v211 = vrot.slane %v76, 1
    %v212 = vsel %vm191, %v210, %v211
    %v213 = vrot.slane %v77, 1
    %v214 = vrot.slane %v78, 1
    %v215 = vsel %vm191, %v213, %v214
    %v216 = vrot.slane %v79, 1
    %v217 = vrot.slane %v80, 1
    %v218 = vsel %vm191, %v216, %v217
    %v219 = vrot.slane %v81, 1
    %v220 = vrot.slane %v82, 1
    %v221 = vsel %vm191, %v219, %v220
    %v222 = vrot.slane %v83, 1
    %v223 = vrot.slane %v84, 1
    %v224 = vsel %vm191, %v222, %v223
    %v225 = vrot.slane %v85, 1
    %v226 = vrot.slane %v86, 1
    %v227 = vsel %vm191, %v225, %v226
    %v228 = vrot.slane %v87, 1
    %v229 = vrot.slane %v88, 1
    %v230 = vsel %vm191, %v228, %v229
    %v231 = vrot.slane %v89, 1
    %v232 = vrot.slane %v90, 1
    %v233 = vsel %vm191, %v231, %v232
    %v234 = vrot.slane %v91, 1
    %v235 = vrot.slane %v92, 1
    %v236 = vsel %vm191, %v234, %v235
    %v237 = vrot.slane %v93, 1
    %v238 = vrot.slane %v94, 1
    %v239 = vsel %vm191, %v237, %v238
    %v240 = vrot.slane %v95, 1
    %v241 = vrot.slane %v96, 1
    %v242 = vsel %vm191, %v240, %v241
    %v243 = vrot.slane %v97, 1
    %v244 = vrot.slane %v98, 1
    %v245 = vsel %vm191, %v243, %v244
    %v246 = vrot.slane %v99, 1
    %v247 = vrot.slane %v100, 1
    %v248 = vsel %vm191, %v246, %v247
    %v249 = vrot.slane %v101, 1
    %v250 = vrot.slane %v102, 1
    %v251 = vsel %vm191, %v249, %v250
    %v252 = vrot.slane %v103, 1
    %v253 = vrot.slane %v104, 1
    %v254 = vsel %vm191, %v252, %v253
    %v255 = vrot.slane %v105, 1
    %v256 = vrot.slane %v106, 1
    %v257 = vsel %vm191, %v255, %v256
    %v258 = vrot.slane %v107, 1
    %v259 = vrot.slane %v108, 1
    %v260 = vsel %vm191, %v258, %v259
    %v261 = vrot.slane %v109, 1
    %v262 = vrot.slane %v110, 1
    %v263 = vsel %vm191, %v261, %v262
    %v264 = vrot.slane %v111, 1
    %v265 = vrot.slane %v112, 1
    %v266 = vsel %vm191, %v264, %v265
    %v267 = vrot.slane %v113, 1
    %v268 = vrot.slane %v114, 1
    %v269 = vsel %vm191, %v267, %v268
    %v270 = vrot.slane %v115, 1
    %v271 = vrot.slane %v116, 1
    %v272 = vsel %vm191, %v270, %v271
    %v273 = vrot.slane %v117, 1
    %v274 = vrot.slane %v118, 1
    %v275 = vsel %vm191, %v273, %v274
    %v276 = vrot.slane %v119, 1
    %v277 = vrot.slane %v120, 1
    %v278 = vsel %vm191, %v276, %v277
    %v279 = vrot.slane %v121, 1
    %v280 = vrot.slane %v122, 1
    %v281 = vsel %vm191, %v279, %v280
    %v282 = vrot.slane %v123, 1
    %v283 = vrot.slane %v124, 1
    %v284 = vsel %vm191, %v282, %v283
    %v285 = vrot.slane %v125, 1
    %v286 = vrot.slane %v126, 1
    %v287 = vsel %vm191, %v285, %v286
    %288 = vrot.lane.b32.xlu0 %v194, 4
    %v289 = vpop.permute.xlu0 %288
    %290 = vrot.lane.b32.xlu0 %v193, 4
    %v291 = vpop.permute.xlu0 %290
    %292 = vrot.lane.b32.xlu0 %v197, 4
    %v293 = vpop.permute.xlu0 %292
    %294 = vrot.lane.b32.xlu0 %v196, 4
    %v295 = vpop.permute.xlu0 %294
    %296 = vrot.lane.b32.xlu0 %v200, 4
    %v297 = vpop.permute.xlu0 %296
    %298 = vrot.lane.b32.xlu0 %v199, 4
    %v299 = vpop.permute.xlu0 %298
    %300 = vrot.lane.b32.xlu0 %v203, 4
    %v301 = vpop.permute.xlu0 %300
    %302 = vrot.lane.b32.xlu0 %v202, 4
    %v303 = vpop.permute.xlu0 %302
    %304 = vrot.lane.b32.xlu0 %v206, 4
    %v305 = vpop.permute.xlu0 %304
    %306 = vrot.lane.b32.xlu0 %v205, 4
    %v307 = vpop.permute.xlu0 %306
    %308 = vrot.lane.b32.xlu0 %v209, 4
    %v309 = vpop.permute.xlu0 %308
    %310 = vrot.lane.b32.xlu0 %v208, 4
    %v311 = vpop.permute.xlu0 %310
    %312 = vrot.lane.b32.xlu0 %v212, 4
    %v313 = vpop.permute.xlu0 %312
    %314 = vrot.lane.b32.xlu0 %v211, 4
    %v315 = vpop.permute.xlu0 %314
    %316 = vrot.lane.b32.xlu0 %v215, 4
    %v317 = vpop.permute.xlu0 %316
    %318 = vrot.lane.b32.xlu0 %v214, 4
    %v319 = vpop.permute.xlu0 %318
    %320 = vrot.lane.b32.xlu0 %v218, 4
    %v321 = vpop.permute.xlu0 %320
    %322 = vrot.lane.b32.xlu0 %v217, 4
    %v323 = vpop.permute.xlu0 %322
    %324 = vrot.lane.b32.xlu0 %v221, 4
    %v325 = vpop.permute.xlu0 %324
    %326 = vrot.lane.b32.xlu0 %v220, 4
    %v327 = vpop.permute.xlu0 %326
    %328 = vrot.lane.b32.xlu0 %v224, 4
    %v329 = vpop.permute.xlu0 %328
    %330 = vrot.lane.b32.xlu0 %v223, 4
    %v331 = vpop.permute.xlu0 %330
    %332 = vrot.lane.b32.xlu0 %v227, 4
    %v333 = vpop.permute.xlu0 %332
    %334 = vrot.lane.b32.xlu0 %v226, 4
    %v335 = vpop.permute.xlu0 %334
    %336 = vrot.lane.b32.xlu0 %v230, 4
    %v337 = vpop.permute.xlu0 %336
    %338 = vrot.lane.b32.xlu0 %v229, 4
    %v339 = vpop.permute.xlu0 %338
    %340 = vrot.lane.b32.xlu0 %v233, 4
    %v341 = vpop.permute.xlu0 %340
    %342 = vrot.lane.b32.xlu0 %v232, 4
    %v343 = vpop.permute.xlu0 %342
    %344 = vrot.lane.b32.xlu0 %v236, 4
    %v345 = vpop.permute.xlu0 %344
    %346 = vrot.lane.b32.xlu0 %v235, 4
    %v347 = vpop.permute.xlu0 %346
    %348 = vrot.lane.b32.xlu0 %v239, 4
    %v349 = vpop.permute.xlu0 %348
    %350 = vrot.lane.b32.xlu0 %v238, 4
    %v351 = vpop.permute.xlu0 %350
    %352 = vrot.lane.b32.xlu0 %v242, 4
    %v353 = vpop.permute.xlu0 %352
    %354 = vrot.lane.b32.xlu0 %v241, 4
    %v355 = vpop.permute.xlu0 %354
    %356 = vrot.lane.b32.xlu0 %v245, 4
    %v357 = vpop.permute.xlu0 %356
    %358 = vrot.lane.b32.xlu0 %v244, 4
    %v359 = vpop.permute.xlu0 %358
    %360 = vrot.lane.b32.xlu0 %v248, 4
    %v361 = vpop.permute.xlu0 %360
    %362 = vrot.lane.b32.xlu0 %v247, 4
    %v363 = vpop.permute.xlu0 %362
    %364 = vrot.lane.b32.xlu0 %v251, 4
    %v365 = vpop.permute.xlu0 %364
    %366 = vrot.lane.b32.xlu0 %v250, 4
    %v367 = vpop.permute.xlu0 %366
    %368 = vrot.lane.b32.xlu0 %v254, 4
    %v369 = vpop.permute.xlu0 %368
    %370 = vrot.lane.b32.xlu0 %v253, 4
    %v371 = vpop.permute.xlu0 %370
    %372 = vrot.lane.b32.xlu0 %v257, 4
    %v373 = vpop.permute.xlu0 %372
    %374 = vrot.lane.b32.xlu0 %v256, 4
    %v375 = vpop.permute.xlu0 %374
    %376 = vrot.lane.b32.xlu0 %v260, 4
    %v377 = vpop.permute.xlu0 %376
    %378 = vrot.lane.b32.xlu0 %v259, 4
    %v379 = vpop.permute.xlu0 %378
    %380 = vrot.lane.b32.xlu0 %v263, 4
    %v381 = vpop.permute.xlu0 %380
    %382 = vrot.lane.b32.xlu0 %v262, 4
    %v383 = vpop.permute.xlu0 %382
    %384 = vrot.lane.b32.xlu0 %v266, 4
    %v385 = vpop.permute.xlu0 %384
    %386 = vrot.lane.b32.xlu0 %v265, 4
    %v387 = vpop.permute.xlu0 %386
    %388 = vrot.lane.b32.xlu0 %v269, 4
    %v389 = vpop.permute.xlu0 %388
    %390 = vrot.lane.b32.xlu0 %v268, 4
    %v391 = vpop.permute.xlu0 %390
    %392 = vrot.lane.b32.xlu0 %v272, 4
    %v393 = vpop.permute.xlu0 %392
    %394 = vrot.lane.b32.xlu0 %v271, 4
    %v395 = vpop.permute.xlu0 %394
    %396 = vrot.lane.b32.xlu0 %v275, 4
    %v397 = vpop.permute.xlu0 %396
    %398 = vrot.lane.b32.xlu0 %v274, 4
    %v399 = vpop.permute.xlu0 %398
    %400 = vrot.lane.b32.xlu0 %v278, 4
    %v401 = vpop.permute.xlu0 %400
    %402 = vrot.lane.b32.xlu0 %v277, 4
    %v403 = vpop.permute.xlu0 %402
    %404 = vrot.lane.b32.xlu0 %v281, 4
    %v405 = vpop.permute.xlu0 %404
    %406 = vrot.lane.b32.xlu0 %v280, 4
    %v407 = vpop.permute.xlu0 %406
    %408 = vrot.lane.b32.xlu0 %v284, 4
    %v409 = vpop.permute.xlu0 %408
    %410 = vrot.lane.b32.xlu0 %v283, 4
    %v411 = vpop.permute.xlu0 %410
    %412 = vrot.lane.b32.xlu0 %v287, 4
    %v413 = vpop.permute.xlu0 %412
    %414 = vrot.lane.b32.xlu0 %v286, 4
    %v415 = vpop.permute.xlu0 %414
    %vm480 = vcmask 1045504
    %v481 = vrot.slane %v63, 2
    %v482 = vrot.slane %v64, 2
    %v483 = vsel %vm480, %v481, %v482
    %v484 = vrot.slane %v65, 2
    %v485 = vrot.slane %v66, 2
    %v486 = vsel %vm480, %v484, %v485
    %v487 = vrot.slane %v67, 2
    %v488 = vrot.slane %v68, 2
    %v489 = vsel %vm480, %v487, %v488
    %v490 = vrot.slane %v69, 2
    %v491 = vrot.slane %v70, 2
    %v492 = vsel %vm480, %v490, %v491
    %v493 = vrot.slane %v71, 2
    %v494 = vrot.slane %v72, 2
    %v495 = vsel %vm480, %v493, %v494
    %v496 = vrot.slane %v73, 2
    %v497 = vrot.slane %v74, 2
    %v498 = vsel %vm480, %v496, %v497
    %v499 = vrot.slane %v75, 2
    %v500 = vrot.slane %v76, 2
    %v501 = vsel %vm480, %v499, %v500
    %v502 = vrot.slane %v77, 2
    %v503 = vrot.slane %v78, 2
    %v504 = vsel %vm480, %v502, %v503
    %v505 = vrot.slane %v79, 2
    %v506 = vrot.slane %v80, 2
    %v507 = vsel %vm480, %v505, %v506
    %v508 = vrot.slane %v81, 2
    %v509 = vrot.slane %v82, 2
    %v510 = vsel %vm480, %v508, %v509
    %v511 = vrot.slane %v83, 2
    %v512 = vrot.slane %v84, 2
    %v513 = vsel %vm480, %v511, %v512
    %v514 = vrot.slane %v85, 2
    %v515 = vrot.slane %v86, 2
    %v516 = vsel %vm480, %v514, %v515
    %v517 = vrot.slane %v87, 2
    %v518 = vrot.slane %v88, 2
    %v519 = vsel %vm480, %v517, %v518
    %v520 = vrot.slane %v89, 2
    %v521 = vrot.slane %v90, 2
    %v522 = vsel %vm480, %v520, %v521
    %v523 = vrot.slane %v91, 2
    %v524 = vrot.slane %v92, 2
    %v525 = vsel %vm480, %v523, %v524
    %v526 = vrot.slane %v93, 2
    %v527 = vrot.slane %v94, 2
    %v528 = vsel %vm480, %v526, %v527
    %v529 = vrot.slane %v95, 2
    %v530 = vrot.slane %v96, 2
    %v531 = vsel %vm480, %v529, %v530
    %v532 = vrot.slane %v97, 2
    %v533 = vrot.slane %v98, 2
    %v534 = vsel %vm480, %v532, %v533
    %v535 = vrot.slane %v99, 2
    %v536 = vrot.slane %v100, 2
    %v537 = vsel %vm480, %v535, %v536
    %v538 = vrot.slane %v101, 2
    %v539 = vrot.slane %v102, 2
    %v540 = vsel %vm480, %v538, %v539
    %v541 = vrot.slane %v103, 2
    %v542 = vrot.slane %v104, 2
    %v543 = vsel %vm480, %v541, %v542
    %v544 = vrot.slane %v105, 2
    %v545 = vrot.slane %v106, 2
    %v546 = vsel %vm480, %v544, %v545
    %v547 = vrot.slane %v107, 2
    %v548 = vrot.slane %v108, 2
    %v549 = vsel %vm480, %v547, %v548
    %v550 = vrot.slane %v109, 2
    %v551 = vrot.slane %v110, 2
    %v552 = vsel %vm480, %v550, %v551
    %v553 = vrot.slane %v111, 2
    %v554 = vrot.slane %v112, 2
    %v555 = vsel %vm480, %v553, %v554
    %v556 = vrot.slane %v113, 2
    %v557 = vrot.slane %v114, 2
    %v558 = vsel %vm480, %v556, %v557
    %v559 = vrot.slane %v115, 2
    %v560 = vrot.slane %v116, 2
    %v561 = vsel %vm480, %v559, %v560
    %v562 = vrot.slane %v117, 2
    %v563 = vrot.slane %v118, 2
    %v564 = vsel %vm480, %v562, %v563
    %v565 = vrot.slane %v119, 2
    %v566 = vrot.slane %v120, 2
    %v567 = vsel %vm480, %v565, %v566
    %v568 = vrot.slane %v121, 2
    %v569 = vrot.slane %v122, 2
    %v570 = vsel %vm480, %v568, %v569
    %v571 = vrot.slane %v123, 2
    %v572 = vrot.slane %v124, 2
    %v573 = vsel %vm480, %v571, %v572
    %v574 = vrot.slane %v125, 2
    %v575 = vrot.slane %v126, 2
    %v576 = vsel %vm480, %v574, %v575
    %577 = vrot.lane.b32.xlu0 %v483, 8
    %v578 = vpop.permute.xlu0 %577
    %579 = vrot.lane.b32.xlu0 %v482, 8
    %v580 = vpop.permute.xlu0 %579
    %581 = vrot.lane.b32.xlu0 %v486, 8
    %v582 = vpop.permute.xlu0 %581
    %583 = vrot.lane.b32.xlu0 %v485, 8
    %v584 = vpop.permute.xlu0 %583
    %585 = vrot.lane.b32.xlu0 %v489, 8
    %v586 = vpop.permute.xlu0 %585
    %587 = vrot.lane.b32.xlu0 %v488, 8
    %v588 = vpop.permute.xlu0 %587
    %589 = vrot.lane.b32.xlu0 %v492, 8
    %v590 = vpop.permute.xlu0 %589
    %591 = vrot.lane.b32.xlu0 %v491, 8
    %v592 = vpop.permute.xlu0 %591
    %593 = vrot.lane.b32.xlu0 %v495, 8
    %v594 = vpop.permute.xlu0 %593
    %595 = vrot.lane.b32.xlu0 %v494, 8
    %v596 = vpop.permute.xlu0 %595
    %597 = vrot.lane.b32.xlu0 %v498, 8
    %v598 = vpop.permute.xlu0 %597
    %599 = vrot.lane.b32.xlu0 %v497, 8
    %v600 = vpop.permute.xlu0 %599
    %601 = vrot.lane.b32.xlu0 %v501, 8
    %v602 = vpop.permute.xlu0 %601
    %603 = vrot.lane.b32.xlu0 %v500, 8
    %v604 = vpop.permute.xlu0 %603
    %605 = vrot.lane.b32.xlu0 %v504, 8
    %v606 = vpop.permute.xlu0 %605
    %607 = vrot.lane.b32.xlu0 %v503, 8
    %v608 = vpop.permute.xlu0 %607
    %609 = vrot.lane.b32.xlu0 %v507, 8
    %v610 = vpop.permute.xlu0 %609
    %611 = vrot.lane.b32.xlu0 %v506, 8
    %v612 = vpop.permute.xlu0 %611
    %613 = vrot.lane.b32.xlu0 %v510, 8
    %v614 = vpop.permute.xlu0 %613
    %615 = vrot.lane.b32.xlu0 %v509, 8
    %v616 = vpop.permute.xlu0 %615
    %617 = vrot.lane.b32.xlu0 %v513, 8
    %v618 = vpop.permute.xlu0 %617
    %619 = vrot.lane.b32.xlu0 %v512, 8
    %v620 = vpop.permute.xlu0 %619
    %621 = vrot.lane.b32.xlu0 %v516, 8
    %v622 = vpop.permute.xlu0 %621
    %623 = vrot.lane.b32.xlu0 %v515, 8
    %v624 = vpop.permute.xlu0 %623
    %625 = vrot.lane.b32.xlu0 %v519, 8
    %v626 = vpop.permute.xlu0 %625
    %627 = vrot.lane.b32.xlu0 %v518, 8
    %v628 = vpop.permute.xlu0 %627
    %629 = vrot.lane.b32.xlu0 %v522, 8
    %v630 = vpop.permute.xlu0 %629
    %631 = vrot.lane.b32.xlu0 %v521, 8
    %v632 = vpop.permute.xlu0 %631
    %633 = vrot.lane.b32.xlu0 %v525, 8
    %v634 = vpop.permute.xlu0 %633
    %635 = vrot.lane.b32.xlu0 %v524, 8
    %v636 = vpop.permute.xlu0 %635
    %637 = vrot.lane.b32.xlu0 %v528, 8
    %v638 = vpop.permute.xlu0 %637
    %639 = vrot.lane.b32.xlu0 %v527, 8
    %v640 = vpop.permute.xlu0 %639
    %641 = vrot.lane.b32.xlu0 %v531, 8
    %v642 = vpop.permute.xlu0 %641
    %643 = vrot.lane.b32.xlu0 %v530, 8
    %v644 = vpop.permute.xlu0 %643
    %645 = vrot.lane.b32.xlu0 %v534, 8
    %v646 = vpop.permute.xlu0 %645
    %647 = vrot.lane.b32.xlu0 %v533, 8
    %v648 = vpop.permute.xlu0 %647
    %649 = vrot.lane.b32.xlu0 %v537, 8
    %v650 = vpop.permute.xlu0 %649
    %651 = vrot.lane.b32.xlu0 %v536, 8
    %v652 = vpop.permute.xlu0 %651
    %653 = vrot.lane.b32.xlu0 %v540, 8
    %v654 = vpop.permute.xlu0 %653
    %655 = vrot.lane.b32.xlu0 %v539, 8
    %v656 = vpop.permute.xlu0 %655
    %657 = vrot.lane.b32.xlu0 %v543, 8
    %v658 = vpop.permute.xlu0 %657
    %659 = vrot.lane.b32.xlu0 %v542, 8
    %v660 = vpop.permute.xlu0 %659
    %661 = vrot.lane.b32.xlu0 %v546, 8
    %v662 = vpop.permute.xlu0 %661
    %663 = vrot.lane.b32.xlu0 %v545, 8
    %v664 = vpop.permute.xlu0 %663
    %665 = vrot.lane.b32.xlu0 %v549, 8
    %v666 = vpop.permute.xlu0 %665
    %667 = vrot.lane.b32.xlu0 %v548, 8
    %v668 = vpop.permute.xlu0 %667
    %669 = vrot.lane.b32.xlu0 %v552, 8
    %v670 = vpop.permute.xlu0 %669
    %671 = vrot.lane.b32.xlu0 %v551, 8
    %v672 = vpop.permute.xlu0 %671
    %673 = vrot.lane.b32.xlu0 %v555, 8
    %v674 = vpop.permute.xlu0 %673
    %675 = vrot.lane.b32.xlu0 %v554, 8
    %v676 = vpop.permute.xlu0 %675
    %677 = vrot.lane.b32.xlu0 %v558, 8
    %v678 = vpop.permute.xlu0 %677
    %679 = vrot.lane.b32.xlu0 %v557, 8
    %v680 = vpop.permute.xlu0 %679
    %681 = vrot.lane.b32.xlu0 %v561, 8
    %v682 = vpop.permute.xlu0 %681
    %683 = vrot.lane.b32.xlu0 %v560, 8
    %v684 = vpop.permute.xlu0 %683
    %685 = vrot.lane.b32.xlu0 %v564, 8
    %v686 = vpop.permute.xlu0 %685
    %687 = vrot.lane.b32.xlu0 %v563, 8
    %v688 = vpop.permute.xlu0 %687
    %689 = vrot.lane.b32.xlu0 %v567, 8
    %v690 = vpop.permute.xlu0 %689
    %691 = vrot.lane.b32.xlu0 %v566, 8
    %v692 = vpop.permute.xlu0 %691
    %693 = vrot.lane.b32.xlu0 %v570, 8
    %v694 = vpop.permute.xlu0 %693
    %695 = vrot.lane.b32.xlu0 %v569, 8
    %v696 = vpop.permute.xlu0 %695
    %697 = vrot.lane.b32.xlu0 %v573, 8
    %v698 = vpop.permute.xlu0 %697
    %699 = vrot.lane.b32.xlu0 %v572, 8
    %v700 = vpop.permute.xlu0 %699
    %701 = vrot.lane.b32.xlu0 %v576, 8
    %v702 = vpop.permute.xlu0 %701
    %703 = vrot.lane.b32.xlu0 %v575, 8
    %v704 = vpop.permute.xlu0 %703
    %vm769 = vcmask 1044480
    %v770 = vrot.slane %v63, 3
    %v771 = vrot.slane %v64, 3
    %v772 = vsel %vm769, %v770, %v771
    %v773 = vrot.slane %v65, 3
    %v774 = vrot.slane %v66, 3
    %v775 = vsel %vm769, %v773, %v774
    %v776 = vrot.slane %v67, 3
    %v777 = vrot.slane %v68, 3
    %v778 = vsel %vm769, %v776, %v777
    %v779 = vrot.slane %v69, 3
    %v780 = vrot.slane %v70, 3
    %v781 = vsel %vm769, %v779, %v780
    %v782 = vrot.slane %v71, 3
    %v783 = vrot.slane %v72, 3
    %v784 = vsel %vm769, %v782, %v783
    %v785 = vrot.slane %v73, 3
    %v786 = vrot.slane %v74, 3
    %v787 = vsel %vm769, %v785, %v786
    %v788 = vrot.slane %v75, 3
    %v789 = vrot.slane %v76, 3
    %v790 = vsel %vm769, %v788, %v789
    %v791 = vrot.slane %v77, 3
    %v792 = vrot.slane %v78, 3
    %v793 = vsel %vm769, %v791, %v792
    %v794 = vrot.slane %v79, 3
    %v795 = vrot.slane %v80, 3
    %v796 = vsel %vm769, %v794, %v795
    %v797 = vrot.slane %v81, 3
    %v798 = vrot.slane %v82, 3
    %v799 = vsel %vm769, %v797, %v798
    %v800 = vrot.slane %v83, 3
    %v801 = vrot.slane %v84, 3
    %v802 = vsel %vm769, %v800, %v801
    %v803 = vrot.slane %v85, 3
    %v804 = vrot.slane %v86, 3
    %v805 = vsel %vm769, %v803, %v804
    %v806 = vrot.slane %v87, 3
    %v807 = vrot.slane %v88, 3
    %v808 = vsel %vm769, %v806, %v807
    %v809 = vrot.slane %v89, 3
    %v810 = vrot.slane %v90, 3
    %v811 = vsel %vm769, %v809, %v810
    %v812 = vrot.slane %v91, 3
    %v813 = vrot.slane %v92, 3
    %v814 = vsel %vm769, %v812, %v813
    %v815 = vrot.slane %v93, 3
    %v816 = vrot.slane %v94, 3
    %v817 = vsel %vm769, %v815, %v816
    %v818 = vrot.slane %v95, 3
    %v819 = vrot.slane %v96, 3
    %v820 = vsel %vm769, %v818, %v819
    %v821 = vrot.slane %v97, 3
    %v822 = vrot.slane %v98, 3
    %v823 = vsel %vm769, %v821, %v822
    %v824 = vrot.slane %v99, 3
    %v825 = vrot.slane %v100, 3
    %v826 = vsel %vm769, %v824, %v825
    %v827 = vrot.slane %v101, 3
    %v828 = vrot.slane %v102, 3
    %v829 = vsel %vm769, %v827, %v828
    %v830 = vrot.slane %v103, 3
    %v831 = vrot.slane %v104, 3
    %v832 = vsel %vm769, %v830, %v831
    %v833 = vrot.slane %v105, 3
    %v834 = vrot.slane %v106, 3
    %v835 = vsel %vm769, %v833, %v834
    %v836 = vrot.slane %v107, 3
    %v837 = vrot.slane %v108, 3
    %v838 = vsel %vm769, %v836, %v837
    %v839 = vrot.slane %v109, 3
    %v840 = vrot.slane %v110, 3
    %v841 = vsel %vm769, %v839, %v840
    %v842 = vrot.slane %v111, 3
    %v843 = vrot.slane %v112, 3
    %v844 = vsel %vm769, %v842, %v843
    %v845 = vrot.slane %v113, 3
    %v846 = vrot.slane %v114, 3
    %v847 = vsel %vm769, %v845, %v846
    %v848 = vrot.slane %v115, 3
    %v849 = vrot.slane %v116, 3
    %v850 = vsel %vm769, %v848, %v849
    %v851 = vrot.slane %v117, 3
    %v852 = vrot.slane %v118, 3
    %v853 = vsel %vm769, %v851, %v852
    %v854 = vrot.slane %v119, 3
    %v855 = vrot.slane %v120, 3
    %v856 = vsel %vm769, %v854, %v855
    %v857 = vrot.slane %v121, 3
    %v858 = vrot.slane %v122, 3
    %v859 = vsel %vm769, %v857, %v858
    %v860 = vrot.slane %v123, 3
    %v861 = vrot.slane %v124, 3
    %v862 = vsel %vm769, %v860, %v861
    %v863 = vrot.slane %v125, 3
    %v864 = vrot.slane %v126, 3
    %v865 = vsel %vm769, %v863, %v864
    %866 = vrot.lane.b32.xlu0 %v772, 12
    %v867 = vpop.permute.xlu0 %866
    %868 = vrot.lane.b32.xlu0 %v771, 12
    %v869 = vpop.permute.xlu0 %868
    %870 = vrot.lane.b32.xlu0 %v775, 12
    %v871 = vpop.permute.xlu0 %870
    %872 = vrot.lane.b32.xlu0 %v774, 12
    %v873 = vpop.permute.xlu0 %872
    %874 = vrot.lane.b32.xlu0 %v778, 12
    %v875 = vpop.permute.xlu0 %874
    %876 = vrot.lane.b32.xlu0 %v777, 12
    %v877 = vpop.permute.xlu0 %876
    %878 = vrot.lane.b32.xlu0 %v781, 12
    %v879 = vpop.permute.xlu0 %878
    %880 = vrot.lane.b32.xlu0 %v780, 12
    %v881 = vpop.permute.xlu0 %880
    %882 = vrot.lane.b32.xlu0 %v784, 12
    %v883 = vpop.permute.xlu0 %882
    %884 = vrot.lane.b32.xlu0 %v783, 12
    %v885 = vpop.permute.xlu0 %884
    %886 = vrot.lane.b32.xlu0 %v787, 12
    %v887 = vpop.permute.xlu0 %886
    %888 = vrot.lane.b32.xlu0 %v786, 12
    %v889 = vpop.permute.xlu0 %888
    %890 = vrot.lane.b32.xlu0 %v790, 12
    %v891 = vpop.permute.xlu0 %890
    %892 = vrot.lane.b32.xlu0 %v789, 12
    %v893 = vpop.permute.xlu0 %892
    %894 = vrot.lane.b32.xlu0 %v793, 12
    %v895 = vpop.permute.xlu0 %894
    %896 = vrot.lane.b32.xlu0 %v792, 12
    %v897 = vpop.permute.xlu0 %896
    %898 = vrot.lane.b32.xlu0 %v796, 12
    %v899 = vpop.permute.xlu0 %898
    %900 = vrot.lane.b32.xlu0 %v795, 12
    %v901 = vpop.permute.xlu0 %900
    %902 = vrot.lane.b32.xlu0 %v799, 12
    %v903 = vpop.permute.xlu0 %902
    %904 = vrot.lane.b32.xlu0 %v798, 12
    %v905 = vpop.permute.xlu0 %904
    %906 = vrot.lane.b32.xlu0 %v802, 12
    %v907 = vpop.permute.xlu0 %906
    %908 = vrot.lane.b32.xlu0 %v801, 12
    %v909 = vpop.permute.xlu0 %908
    %910 = vrot.lane.b32.xlu0 %v805, 12
    %v911 = vpop.permute.xlu0 %910
    %912 = vrot.lane.b32.xlu0 %v804, 12
    %v913 = vpop.permute.xlu0 %912
    %914 = vrot.lane.b32.xlu0 %v808, 12
    %v915 = vpop.permute.xlu0 %914
    %916 = vrot.lane.b32.xlu0 %v807, 12
    %v917 = vpop.permute.xlu0 %916
    %918 = vrot.lane.b32.xlu0 %v811, 12
    %v919 = vpop.permute.xlu0 %918
    %920 = vrot.lane.b32.xlu0 %v810, 12
    %v921 = vpop.permute.xlu0 %920
    %922 = vrot.lane.b32.xlu0 %v814, 12
    %v923 = vpop.permute.xlu0 %922
    %924 = vrot.lane.b32.xlu0 %v813, 12
    %v925 = vpop.permute.xlu0 %924
    %926 = vrot.lane.b32.xlu0 %v817, 12
    %v927 = vpop.permute.xlu0 %926
    %928 = vrot.lane.b32.xlu0 %v816, 12
    %v929 = vpop.permute.xlu0 %928
    %930 = vrot.lane.b32.xlu0 %v820, 12
    %v931 = vpop.permute.xlu0 %930
    %932 = vrot.lane.b32.xlu0 %v819, 12
    %v933 = vpop.permute.xlu0 %932
    %934 = vrot.lane.b32.xlu0 %v823, 12
    %v935 = vpop.permute.xlu0 %934
    %936 = vrot.lane.b32.xlu0 %v822, 12
    %v937 = vpop.permute.xlu0 %936
    %938 = vrot.lane.b32.xlu0 %v826, 12
    %v939 = vpop.permute.xlu0 %938
    %940 = vrot.lane.b32.xlu0 %v825, 12
    %v941 = vpop.permute.xlu0 %940
    %942 = vrot.lane.b32.xlu0 %v829, 12
    %v943 = vpop.permute.xlu0 %942
    %944 = vrot.lane.b32.xlu0 %v828, 12
    %v945 = vpop.permute.xlu0 %944
    %946 = vrot.lane.b32.xlu0 %v832, 12
    %v947 = vpop.permute.xlu0 %946
    %948 = vrot.lane.b32.xlu0 %v831, 12
    %v949 = vpop.permute.xlu0 %948
    %950 = vrot.lane.b32.xlu0 %v835, 12
    %v951 = vpop.permute.xlu0 %950
    %952 = vrot.lane.b32.xlu0 %v834, 12
    %v953 = vpop.permute.xlu0 %952
    %954 = vrot.lane.b32.xlu0 %v838, 12
    %v955 = vpop.permute.xlu0 %954
    %956 = vrot.lane.b32.xlu0 %v837, 12
    %v957 = vpop.permute.xlu0 %956
    %958 = vrot.lane.b32.xlu0 %v841, 12
    %v959 = vpop.permute.xlu0 %958
    %960 = vrot.lane.b32.xlu0 %v840, 12
    %v961 = vpop.permute.xlu0 %960
    %962 = vrot.lane.b32.xlu0 %v844, 12
    %v963 = vpop.permute.xlu0 %962
    %964 = vrot.lane.b32.xlu0 %v843, 12
    %v965 = vpop.permute.xlu0 %964
    %966 = vrot.lane.b32.xlu0 %v847, 12
    %v967 = vpop.permute.xlu0 %966
    %968 = vrot.lane.b32.xlu0 %v846, 12
    %v969 = vpop.permute.xlu0 %968
    %970 = vrot.lane.b32.xlu0 %v850, 12
    %v971 = vpop.permute.xlu0 %970
    %972 = vrot.lane.b32.xlu0 %v849, 12
    %v973 = vpop.permute.xlu0 %972
    %974 = vrot.lane.b32.xlu0 %v853, 12
    %v975 = vpop.permute.xlu0 %974
    %976 = vrot.lane.b32.xlu0 %v852, 12
    %v977 = vpop.permute.xlu0 %976
    %978 = vrot.lane.b32.xlu0 %v856, 12
    %v979 = vpop.permute.xlu0 %978
    %980 = vrot.lane.b32.xlu0 %v855, 12
    %v981 = vpop.permute.xlu0 %980
    %982 = vrot.lane.b32.xlu0 %v859, 12
    %v983 = vpop.permute.xlu0 %982
    %984 = vrot.lane.b32.xlu0 %v858, 12
    %v985 = vpop.permute.xlu0 %984
    %986 = vrot.lane.b32.xlu0 %v862, 12
    %v987 = vpop.permute.xlu0 %986
    %988 = vrot.lane.b32.xlu0 %v861, 12
    %v989 = vpop.permute.xlu0 %988
    %990 = vrot.lane.b32.xlu0 %v865, 12
    %v991 = vpop.permute.xlu0 %990
    %992 = vrot.lane.b32.xlu0 %v864, 12
    %v993 = vpop.permute.xlu0 %992
    %vm1058 = vcmask 1043456
    %v1059 = vrot.slane %v63, 4
    %v1060 = vrot.slane %v64, 4
    %v1061 = vsel %vm1058, %v1059, %v1060
    %v1062 = vrot.slane %v65, 4
    %v1063 = vrot.slane %v66, 4
    %v1064 = vsel %vm1058, %v1062, %v1063
    %v1065 = vrot.slane %v67, 4
    %v1066 = vrot.slane %v68, 4
    %v1067 = vsel %vm1058, %v1065, %v1066
    %v1068 = vrot.slane %v69, 4
    %v1069 = vrot.slane %v70, 4
    %v1070 = vsel %vm1058, %v1068, %v1069
    %v1071 = vrot.slane %v71, 4
    %v1072 = vrot.slane %v72, 4
    %v1073 = vsel %vm1058, %v1071, %v1072
    %v1074 = vrot.slane %v73, 4
    %v1075 = vrot.slane %v74, 4
    %v1076 = vsel %vm1058, %v1074, %v1075
    %v1077 = vrot.slane %v75, 4
    %v1078 = vrot.slane %v76, 4
    %v1079 = vsel %vm1058, %v1077, %v1078
    %v1080 = vrot.slane %v77, 4
    %v1081 = vrot.slane %v78, 4
    %v1082 = vsel %vm1058, %v1080, %v1081
    %v1083 = vrot.slane %v79, 4
    %v1084 = vrot.slane %v80, 4
    %v1085 = vsel %vm1058, %v1083, %v1084
    %v1086 = vrot.slane %v81, 4
    %v1087 = vrot.slane %v82, 4
    %v1088 = vsel %vm1058, %v1086, %v1087
    %v1089 = vrot.slane %v83, 4
    %v1090 = vrot.slane %v84, 4
    %v1091 = vsel %vm1058, %v1089, %v1090
    %v1092 = vrot.slane %v85, 4
    %v1093 = vrot.slane %v86, 4
    %v1094 = vsel %vm1058, %v1092, %v1093
    %v1095 = vrot.slane %v87, 4
    %v1096 = vrot.slane %v88, 4
    %v1097 = vsel %vm1058, %v1095, %v1096
    %v1098 = vrot.slane %v89, 4
    %v1099 = vrot.slane %v90, 4
    %v1100 = vsel %vm1058, %v1098, %v1099
    %v1101 = vrot.slane %v91, 4
    %v1102 = vrot.slane %v92, 4
    %v1103 = vsel %vm1058, %v1101, %v1102
    %v1104 = vrot.slane %v93, 4
    %v1105 = vrot.slane %v94, 4
    %v1106 = vsel %vm1058, %v1104, %v1105
    %v1107 = vrot.slane %v95, 4
    %v1108 = vrot.slane %v96, 4
    %v1109 = vsel %vm1058, %v1107, %v1108
    %v1110 = vrot.slane %v97, 4
    %v1111 = vrot.slane %v98, 4
    %v1112 = vsel %vm1058, %v1110, %v1111
    %v1113 = vrot.slane %v99, 4
    %v1114 = vrot.slane %v100, 4
    %v1115 = vsel %vm1058, %v1113, %v1114
    %v1116 = vrot.slane %v101, 4
    %v1117 = vrot.slane %v102, 4
    %v1118 = vsel %vm1058, %v1116, %v1117
    %v1119 = vrot.slane %v103, 4
    %v1120 = vrot.slane %v104, 4
    %v1121 = vsel %vm1058, %v1119, %v1120
    %v1122 = vrot.slane %v105, 4
    %v1123 = vrot.slane %v106, 4
    %v1124 = vsel %vm1058, %v1122, %v1123
    %v1125 = vrot.slane %v107, 4
    %v1126 = vrot.slane %v108, 4
    %v1127 = vsel %vm1058, %v1125, %v1126
    %v1128 = vrot.slane %v109, 4
    %v1129 = vrot.slane %v110, 4
    %v1130 = vsel %vm1058, %v1128, %v1129
    %v1131 = vrot.slane %v111, 4
    %v1132 = vrot.slane %v112, 4
    %v1133 = vsel %vm1058, %v1131, %v1132
    %v1134 = vrot.slane %v113, 4
    %v1135 = vrot.slane %v114, 4
    %v1136 = vsel %vm1058, %v1134, %v1135
    %v1137 = vrot.slane %v115, 4
    %v1138 = vrot.slane %v116, 4
    %v1139 = vsel %vm1058, %v1137, %v1138
    %v1140 = vrot.slane %v117, 4
    %v1141 = vrot.slane %v118, 4
    %v1142 = vsel %vm1058, %v1140, %v1141
    %v1143 = vrot.slane %v119, 4
    %v1144 = vrot.slane %v120, 4
    %v1145 = vsel %vm1058, %v1143, %v1144
    %v1146 = vrot.slane %v121, 4
    %v1147 = vrot.slane %v122, 4
    %v1148 = vsel %vm1058, %v1146, %v1147
    %v1149 = vrot.slane %v123, 4
    %v1150 = vrot.slane %v124, 4
    %v1151 = vsel %vm1058, %v1149, %v1150
    %v1152 = vrot.slane %v125, 4
    %v1153 = vrot.slane %v126, 4
    %v1154 = vsel %vm1058, %v1152, %v1153
    %1155 = vrot.lane.b32.xlu0 %v1061, 16
    %v1156 = vpop.permute.xlu0 %1155
    %1157 = vrot.lane.b32.xlu0 %v1060, 16
    %v1158 = vpop.permute.xlu0 %1157
    %1159 = vrot.lane.b32.xlu0 %v1064, 16
    %v1160 = vpop.permute.xlu0 %1159
    %1161 = vrot.lane.b32.xlu0 %v1063, 16
    %v1162 = vpop.permute.xlu0 %1161
    %1163 = vrot.lane.b32.xlu0 %v1067, 16
    %v1164 = vpop.permute.xlu0 %1163
    %1165 = vrot.lane.b32.xlu0 %v1066, 16
    %v1166 = vpop.permute.xlu0 %1165
    %1167 = vrot.lane.b32.xlu0 %v1070, 16
    %v1168 = vpop.permute.xlu0 %1167
    %1169 = vrot.lane.b32.xlu0 %v1069, 16
    %v1170 = vpop.permute.xlu0 %1169
    %1171 = vrot.lane.b32.xlu0 %v1073, 16
    %v1172 = vpop.permute.xlu0 %1171
    %1173 = vrot.lane.b32.xlu0 %v1072, 16
    %v1174 = vpop.permute.xlu0 %1173
    %1175 = vrot.lane.b32.xlu0 %v1076, 16
    %v1176 = vpop.permute.xlu0 %1175
    %1177 = vrot.lane.b32.xlu0 %v1075, 16
    %v1178 = vpop.permute.xlu0 %1177
    %1179 = vrot.lane.b32.xlu0 %v1079, 16
    %v1180 = vpop.permute.xlu0 %1179
    %1181 = vrot.lane.b32.xlu0 %v1078, 16
    %v1182 = vpop.permute.xlu0 %1181
    %1183 = vrot.lane.b32.xlu0 %v1082, 16
    %v1184 = vpop.permute.xlu0 %1183
    %1185 = vrot.lane.b32.xlu0 %v1081, 16
    %v1186 = vpop.permute.xlu0 %1185
    %1187 = vrot.lane.b32.xlu0 %v1085, 16
    %v1188 = vpop.permute.xlu0 %1187
    %1189 = vrot.lane.b32.xlu0 %v1084, 16
    %v1190 = vpop.permute.xlu0 %1189
    %1191 = vrot.lane.b32.xlu0 %v1088, 16
    %v1192 = vpop.permute.xlu0 %1191
    %1193 = vrot.lane.b32.xlu0 %v1087, 16
    %v1194 = vpop.permute.xlu0 %1193
    %1195 = vrot.lane.b32.xlu0 %v1091, 16
    %v1196 = vpop.permute.xlu0 %1195
    %1197 = vrot.lane.b32.xlu0 %v1090, 16
    %v1198 = vpop.permute.xlu0 %1197
    %1199 = vrot.lane.b32.xlu0 %v1094, 16
    %v1200 = vpop.permute.xlu0 %1199
    %1201 = vrot.lane.b32.xlu0 %v1093, 16
    %v1202 = vpop.permute.xlu0 %1201
    %1203 = vrot.lane.b32.xlu0 %v1097, 16
    %v1204 = vpop.permute.xlu0 %1203
    %1205 = vrot.lane.b32.xlu0 %v1096, 16
    %v1206 = vpop.permute.xlu0 %1205
    %1207 = vrot.lane.b32.xlu0 %v1100, 16
    %v1208 = vpop.permute.xlu0 %1207
    %1209 = vrot.lane.b32.xlu0 %v1099, 16
    %v1210 = vpop.permute.xlu0 %1209
    %1211 = vrot.lane.b32.xlu0 %v1103, 16
    %v1212 = vpop.permute.xlu0 %1211
    %1213 = vrot.lane.b32.xlu0 %v1102, 16
    %v1214 = vpop.permute.xlu0 %1213
    %1215 = vrot.lane.b32.xlu0 %v1106, 16
    %v1216 = vpop.permute.xlu0 %1215
    %1217 = vrot.lane.b32.xlu0 %v1105, 16
    %v1218 = vpop.permute.xlu0 %1217
    %1219 = vrot.lane.b32.xlu0 %v1109, 16
    %v1220 = vpop.permute.xlu0 %1219
    %1221 = vrot.lane.b32.xlu0 %v1108, 16
    %v1222 = vpop.permute.xlu0 %1221
    %1223 = vrot.lane.b32.xlu0 %v1112, 16
    %v1224 = vpop.permute.xlu0 %1223
    %1225 = vrot.lane.b32.xlu0 %v1111, 16
    %v1226 = vpop.permute.xlu0 %1225
    %1227 = vrot.lane.b32.xlu0 %v1115, 16
    %v1228 = vpop.permute.xlu0 %1227
    %1229 = vrot.lane.b32.xlu0 %v1114, 16
    %v1230 = vpop.permute.xlu0 %1229
    %1231 = vrot.lane.b32.xlu0 %v1118, 16
    %v1232 = vpop.permute.xlu0 %1231
    %1233 = vrot.lane.b32.xlu0 %v1117, 16
    %v1234 = vpop.permute.xlu0 %1233
    %1235 = vrot.lane.b32.xlu0 %v1121, 16
    %v1236 = vpop.permute.xlu0 %1235
    %1237 = vrot.lane.b32.xlu0 %v1120, 16
    %v1238 = vpop.permute.xlu0 %1237
    %1239 = vrot.lane.b32.xlu0 %v1124, 16
    %v1240 = vpop.permute.xlu0 %1239
    %1241 = vrot.lane.b32.xlu0 %v1123, 16
    %v1242 = vpop.permute.xlu0 %1241
    %1243 = vrot.lane.b32.xlu0 %v1127, 16
    %v1244 = vpop.permute.xlu0 %1243
    %1245 = vrot.lane.b32.xlu0 %v1126, 16
    %v1246 = vpop.permute.xlu0 %1245
    %1247 = vrot.lane.b32.xlu0 %v1130, 16
    %v1248 = vpop.permute.xlu0 %1247
    %1249 = vrot.lane.b32.xlu0 %v1129, 16
    %v1250 = vpop.permute.xlu0 %1249
    %1251 = vrot.lane.b32.xlu0 %v1133, 16
    %v1252 = vpop.permute.xlu0 %1251
    %1253 = vrot.lane.b32.xlu0 %v1132, 16
    %v1254 = vpop.permute.xlu0 %1253
    %1255 = vrot.lane.b32.xlu0 %v1136, 16
    %v1256 = vpop.permute.xlu0 %1255
    %1257 = vrot.lane.b32.xlu0 %v1135, 16
    %v1258 = vpop.permute.xlu0 %1257
    %1259 = vrot.lane.b32.xlu0 %v1139, 16
    %v1260 = vpop.permute.xlu0 %1259
    %1261 = vrot.lane.b32.xlu0 %v1138, 16
    %v1262 = vpop.permute.xlu0 %1261
    %1263 = vrot.lane.b32.xlu0 %v1142, 16
    %v1264 = vpop.permute.xlu0 %1263
    %1265 = vrot.lane.b32.xlu0 %v1141, 16
    %v1266 = vpop.permute.xlu0 %1265
    %1267 = vrot.lane.b32.xlu0 %v1145, 16
    %v1268 = vpop.permute.xlu0 %1267
    %1269 = vrot.lane.b32.xlu0 %v1144, 16
    %v1270 = vpop.permute.xlu0 %1269
    %1271 = vrot.lane.b32.xlu0 %v1148, 16
    %v1272 = vpop.permute.xlu0 %1271
    %1273 = vrot.lane.b32.xlu0 %v1147, 16
    %v1274 = vpop.permute.xlu0 %1273
    %1275 = vrot.lane.b32.xlu0 %v1151, 16
    %v1276 = vpop.permute.xlu0 %1275
    %1277 = vrot.lane.b32.xlu0 %v1150, 16
    %v1278 = vpop.permute.xlu0 %1277
    %1279 = vrot.lane.b32.xlu0 %v1154, 16
    %v1280 = vpop.permute.xlu0 %1279
    %1281 = vrot.lane.b32.xlu0 %v1153, 16
    %v1282 = vpop.permute.xlu0 %1281
    %vm1347 = vcmask 31744
    %v1348 = vsel %vm1347, %v63, %v289
    %v1349 = vsel %vm1347, %v64, %v291
    %v1350 = vsel %vm1347, %v65, %v293
    %v1351 = vsel %vm1347, %v66, %v295
    %v1352 = vsel %vm1347, %v67, %v297
    %v1353 = vsel %vm1347, %v68, %v299
    %v1354 = vsel %vm1347, %v69, %v301
    %v1355 = vsel %vm1347, %v70, %v303
    %v1356 = vsel %vm1347, %v71, %v305
    %v1357 = vsel %vm1347, %v72, %v307
    %v1358 = vsel %vm1347, %v73, %v309
    %v1359 = vsel %vm1347, %v74, %v311
    %v1360 = vsel %vm1347, %v75, %v313
    %v1361 = vsel %vm1347, %v76, %v315
    %v1362 = vsel %vm1347, %v77, %v317
    %v1363 = vsel %vm1347, %v78, %v319
    %v1364 = vsel %vm1347, %v79, %v321
    %v1365 = vsel %vm1347, %v80, %v323
    %v1366 = vsel %vm1347, %v81, %v325
    %v1367 = vsel %vm1347, %v82, %v327
    %v1368 = vsel %vm1347, %v83, %v329
    %v1369 = vsel %vm1347, %v84, %v331
    %v1370 = vsel %vm1347, %v85, %v333
    %v1371 = vsel %vm1347, %v86, %v335
    %v1372 = vsel %vm1347, %v87, %v337
    %v1373 = vsel %vm1347, %v88, %v339
    %v1374 = vsel %vm1347, %v89, %v341
    %v1375 = vsel %vm1347, %v90, %v343
    %v1376 = vsel %vm1347, %v91, %v345
    %v1377 = vsel %vm1347, %v92, %v347
    %v1378 = vsel %vm1347, %v93, %v349
    %v1379 = vsel %vm1347, %v94, %v351
    %v1380 = vsel %vm1347, %v95, %v353
    %v1381 = vsel %vm1347, %v96, %v355
    %v1382 = vsel %vm1347, %v97, %v357
    %v1383 = vsel %vm1347, %v98, %v359
    %v1384 = vsel %vm1347, %v99, %v361
    %v1385 = vsel %vm1347, %v100, %v363
    %v1386 = vsel %vm1347, %v101, %v365
    %v1387 = vsel %vm1347, %v102, %v367
    %v1388 = vsel %vm1347, %v103, %v369
    %v1389 = vsel %vm1347, %v104, %v371
    %v1390 = vsel %vm1347, %v105, %v373
    %v1391 = vsel %vm1347, %v106, %v375
    %v1392 = vsel %vm1347, %v107, %v377
    %v1393 = vsel %vm1347, %v108, %v379
    %v1394 = vsel %vm1347, %v109, %v381
    %v1395 = vsel %vm1347, %v110, %v383
    %v1396 = vsel %vm1347, %v111, %v385
    %v1397 = vsel %vm1347, %v112, %v387
    %v1398 = vsel %vm1347, %v113, %v389
    %v1399 = vsel %vm1347, %v114, %v391
    %v1400 = vsel %vm1347, %v115, %v393
    %v1401 = vsel %vm1347, %v116, %v395
    %v1402 = vsel %vm1347, %v117, %v397
    %v1403 = vsel %vm1347, %v118, %v399
    %v1404 = vsel %vm1347, %v119, %v401
    %v1405 = vsel %vm1347, %v120, %v403
    %v1406 = vsel %vm1347, %v121, %v405
    %v1407 = vsel %vm1347, %v122, %v407
    %v1408 = vsel %vm1347, %v123, %v409
    %v1409 = vsel %vm1347, %v124, %v411
    %v1410 = vsel %vm1347, %v125, %v413
    %v1411 = vsel %vm1347, %v126, %v415
    %vm1412 = vcmask 64512
    %v1413 = vsel %vm1412, %v1348, %v578
    %v1414 = vsel %vm1412, %v1349, %v580
    %v1415 = vsel %vm1412, %v1350, %v582
    %v1416 = vsel %vm1412, %v1351, %v584
    %v1417 = vsel %vm1412, %v1352, %v586
    %v1418 = vsel %vm1412, %v1353, %v588
    %v1419 = vsel %vm1412, %v1354, %v590
    %v1420 = vsel %vm1412, %v1355, %v592
    %v1421 = vsel %vm1412, %v1356, %v594
    %v1422 = vsel %vm1412, %v1357, %v596
    %v1423 = vsel %vm1412, %v1358, %v598
    %v1424 = vsel %vm1412, %v1359, %v600
    %v1425 = vsel %vm1412, %v1360, %v602
    %v1426 = vsel %vm1412, %v1361, %v604
    %v1427 = vsel %vm1412, %v1362, %v606
    %v1428 = vsel %vm1412, %v1363, %v608
    %v1429 = vsel %vm1412, %v1364, %v610
    %v1430 = vsel %vm1412, %v1365, %v612
    %v1431 = vsel %vm1412, %v1366, %v614
    %v1432 = vsel %vm1412, %v1367, %v616
    %v1433 = vsel %vm1412, %v1368, %v618
    %v1434 = vsel %vm1412, %v1369, %v620
    %v1435 = vsel %vm1412, %v1370, %v622
    %v1436 = vsel %vm1412, %v1371, %v624
    %v1437 = vsel %vm1412, %v1372, %v626
    %v1438 = vsel %vm1412, %v1373, %v628
    %v1439 = vsel %vm1412, %v1374, %v630
    %v1440 = vsel %vm1412, %v1375, %v632
    %v1441 = vsel %vm1412, %v1376, %v634
    %v1442 = vsel %vm1412, %v1377, %v636
    %v1443 = vsel %vm1412, %v1378, %v638
    %v1444 = vsel %vm1412, %v1379, %v640
    %v1445 = vsel %vm1412, %v1380, %v642
    %v1446 = vsel %vm1412, %v1381, %v644
    %v1447 = vsel %vm1412, %v1382, %v646
    %v1448 = vsel %vm1412, %v1383, %v648
    %v1449 = vsel %vm1412, %v1384, %v650
    %v1450 = vsel %vm1412, %v1385, %v652
    %v1451 = vsel %vm1412, %v1386, %v654
    %v1452 = vsel %vm1412, %v1387, %v656
    %v1453 = vsel %vm1412, %v1388, %v658
    %v1454 = vsel %vm1412, %v1389, %v660
    %v1455 = vsel %vm1412, %v1390, %v662
    %v1456 = vsel %vm1412, %v1391, %v664
    %v1457 = vsel %vm1412, %v1392, %v666
    %v1458 = vsel %vm1412, %v1393, %v668
    %v1459 = vsel %vm1412, %v1394, %v670
    %v1460 = vsel %vm1412, %v1395, %v672
    %v1461 = vsel %vm1412, %v1396, %v674
    %v1462 = vsel %vm1412, %v1397, %v676
    %v1463 = vsel %vm1412, %v1398, %v678
    %v1464 = vsel %vm1412, %v1399, %v680
    %v1465 = vsel %vm1412, %v1400, %v682
    %v1466 = vsel %vm1412, %v1401, %v684
    %v1467 = vsel %vm1412, %v1402, %v686
    %v1468 = vsel %vm1412, %v1403, %v688
    %v1469 = vsel %vm1412, %v1404, %v690
    %v1470 = vsel %vm1412, %v1405, %v692
    %v1471 = vsel %vm1412, %v1406, %v694
    %v1472 = vsel %vm1412, %v1407, %v696
    %v1473 = vsel %vm1412, %v1408, %v698
    %v1474 = vsel %vm1412, %v1409, %v700
    %v1475 = vsel %vm1412, %v1410, %v702
    %v1476 = vsel %vm1412, %v1411, %v704
    %vm1477 = vcmask 97280
    %v1478 = vsel %vm1477, %v1413, %v867
    %v1479 = vsel %vm1477, %v1414, %v869
    %v1480 = vsel %vm1477, %v1415, %v871
    %v1481 = vsel %vm1477, %v1416, %v873
    %v1482 = vsel %vm1477, %v1417, %v875
    %v1483 = vsel %vm1477, %v1418, %v877
    %v1484 = vsel %vm1477, %v1419, %v879
    %v1485 = vsel %vm1477, %v1420, %v881
    %v1486 = vsel %vm1477, %v1421, %v883
    %v1487 = vsel %vm1477, %v1422, %v885
    %v1488 = vsel %vm1477, %v1423, %v887
    %v1489 = vsel %vm1477, %v1424, %v889
    %v1490 = vsel %vm1477, %v1425, %v891
    %v1491 = vsel %vm1477, %v1426, %v893
    %v1492 = vsel %vm1477, %v1427, %v895
    %v1493 = vsel %vm1477, %v1428, %v897
    %v1494 = vsel %vm1477, %v1429, %v899
    %v1495 = vsel %vm1477, %v1430, %v901
    %v1496 = vsel %vm1477, %v1431, %v903
    %v1497 = vsel %vm1477, %v1432, %v905
    %v1498 = vsel %vm1477, %v1433, %v907
    %v1499 = vsel %vm1477, %v1434, %v909
    %v1500 = vsel %vm1477, %v1435, %v911
    %v1501 = vsel %vm1477, %v1436, %v913
    %v1502 = vsel %vm1477, %v1437, %v915
    %v1503 = vsel %vm1477, %v1438, %v917
    %v1504 = vsel %vm1477, %v1439, %v919
    %v1505 = vsel %vm1477, %v1440, %v921
    %v1506 = vsel %vm1477, %v1441, %v923
    %v1507 = vsel %vm1477, %v1442, %v925
    %v1508 = vsel %vm1477, %v1443, %v927
    %v1509 = vsel %vm1477, %v1444, %v929
    %v1510 = vsel %vm1477, %v1445, %v931
    %v1511 = vsel %vm1477, %v1446, %v933
    %v1512 = vsel %vm1477, %v1447, %v935
    %v1513 = vsel %vm1477, %v1448, %v937
    %v1514 = vsel %vm1477, %v1449, %v939
    %v1515 = vsel %vm1477, %v1450, %v941
    %v1516 = vsel %vm1477, %v1451, %v943
    %v1517 = vsel %vm1477, %v1452, %v945
    %v1518 = vsel %vm1477, %v1453, %v947
    %v1519 = vsel %vm1477, %v1454, %v949
    %v1520 = vsel %vm1477, %v1455, %v951
    %v1521 = vsel %vm1477, %v1456, %v953
    %v1522 = vsel %vm1477, %v1457, %v955
    %v1523 = vsel %vm1477, %v1458, %v957
    %v1524 = vsel %vm1477, %v1459, %v959
    %v1525 = vsel %vm1477, %v1460, %v961
    %v1526 = vsel %vm1477, %v1461, %v963
    %v1527 = vsel %vm1477, %v1462, %v965
    %v1528 = vsel %vm1477, %v1463, %v967
    %v1529 = vsel %vm1477, %v1464, %v969
    %v1530 = vsel %vm1477, %v1465, %v971
    %v1531 = vsel %vm1477, %v1466, %v973
    %v1532 = vsel %vm1477, %v1467, %v975
    %v1533 = vsel %vm1477, %v1468, %v977
    %v1534 = vsel %vm1477, %v1469, %v979
    %v1535 = vsel %vm1477, %v1470, %v981
    %v1536 = vsel %vm1477, %v1471, %v983
    %v1537 = vsel %vm1477, %v1472, %v985
    %v1538 = vsel %vm1477, %v1473, %v987
    %v1539 = vsel %vm1477, %v1474, %v989
    %v1540 = vsel %vm1477, %v1475, %v991
    %v1541 = vsel %vm1477, %v1476, %v993
    %vm1542 = vcmask 130048
    %v1543 = vsel %vm1542, %v1478, %v1156
    %v1544 = vsel %vm1542, %v1479, %v1158
    %v1545 = vsel %vm1542, %v1480, %v1160
    %v1546 = vsel %vm1542, %v1481, %v1162
    %v1547 = vsel %vm1542, %v1482, %v1164
    %v1548 = vsel %vm1542, %v1483, %v1166
    %v1549 = vsel %vm1542, %v1484, %v1168
    %v1550 = vsel %vm1542, %v1485, %v1170
    %v1551 = vsel %vm1542, %v1486, %v1172
    %v1552 = vsel %vm1542, %v1487, %v1174
    %v1553 = vsel %vm1542, %v1488, %v1176
    %v1554 = vsel %vm1542, %v1489, %v1178
    %v1555 = vsel %vm1542, %v1490, %v1180
    %v1556 = vsel %vm1542, %v1491, %v1182
    %v1557 = vsel %vm1542, %v1492, %v1184
    %v1558 = vsel %vm1542, %v1493, %v1186
    %v1559 = vsel %vm1542, %v1494, %v1188
    %v1560 = vsel %vm1542, %v1495, %v1190
    %v1561 = vsel %vm1542, %v1496, %v1192
    %v1562 = vsel %vm1542, %v1497, %v1194
    %v1563 = vsel %vm1542, %v1498, %v1196
    %v1564 = vsel %vm1542, %v1499, %v1198
    %v1565 = vsel %vm1542, %v1500, %v1200
    %v1566 = vsel %vm1542, %v1501, %v1202
    %v1567 = vsel %vm1542, %v1502, %v1204
    %v1568 = vsel %vm1542, %v1503, %v1206
    %v1569 = vsel %vm1542, %v1504, %v1208
    %v1570 = vsel %vm1542, %v1505, %v1210
    %v1571 = vsel %vm1542, %v1506, %v1212
    %v1572 = vsel %vm1542, %v1507, %v1214
    %v1573 = vsel %vm1542, %v1508, %v1216
    %v1574 = vsel %vm1542, %v1509, %v1218
    %v1575 = vsel %vm1542, %v1510, %v1220
    %v1576 = vsel %vm1542, %v1511, %v1222
    %v1577 = vsel %vm1542, %v1512, %v1224
    %v1578 = vsel %vm1542, %v1513, %v1226
    %v1579 = vsel %vm1542, %v1514, %v1228
    %v1580 = vsel %vm1542, %v1515, %v1230
    %v1581 = vsel %vm1542, %v1516, %v1232
    %v1582 = vsel %vm1542, %v1517, %v1234
    %v1583 = vsel %vm1542, %v1518, %v1236
    %v1584 = vsel %vm1542, %v1519, %v1238
    %v1585 = vsel %vm1542, %v1520, %v1240
    %v1586 = vsel %vm1542, %v1521, %v1242
    %v1587 = vsel %vm1542, %v1522, %v1244
    %v1588 = vsel %vm1542, %v1523, %v1246
    %v1589 = vsel %vm1542, %v1524, %v1248
    %v1590 = vsel %vm1542, %v1525, %v1250
    %v1591 = vsel %vm1542, %v1526, %v1252
    %v1592 = vsel %vm1542, %v1527, %v1254
    %v1593 = vsel %vm1542, %v1528, %v1256
    %v1594 = vsel %vm1542, %v1529, %v1258
    %v1595 = vsel %vm1542, %v1530, %v1260
    %v1596 = vsel %vm1542, %v1531, %v1262
    %v1597 = vsel %vm1542, %v1532, %v1264
    %v1598 = vsel %vm1542, %v1533, %v1266
    %v1599 = vsel %vm1542, %v1534, %v1268
    %v1600 = vsel %vm1542, %v1535, %v1270
    %v1601 = vsel %vm1542, %v1536, %v1272
    %v1602 = vsel %vm1542, %v1537, %v1274
    %v1603 = vsel %vm1542, %v1538, %v1276
    %v1604 = vsel %vm1542, %v1539, %v1278
    %v1605 = vsel %vm1542, %v1540, %v1280
    %v1606 = vsel %vm1542, %v1541, %v1282
    %v1655 = vrot.slane %v1543, 4
    %v1656 = vrot.slane %v1545, 4
    %v1657 = vrot.slane %v1547, 4
    %v1658 = vrot.slane %v1549, 4
    %v1659 = vrot.slane %v1551, 4
    %v1660 = vrot.slane %v1553, 4
    %v1661 = vrot.slane %v1555, 4
    %v1662 = vrot.slane %v1557, 4
    %v1663 = vrot.slane %v1559, 4
    %v1664 = vrot.slane %v1561, 4
    %v1665 = vrot.slane %v1563, 4
    %v1666 = vrot.slane %v1565, 4
    %v1667 = vrot.slane %v1575, 4
    %v1668 = vrot.slane %v1577, 4
    %v1669 = vrot.slane %v1579, 4
    %v1670 = vrot.slane %v1581, 4
    %v1671 = vrot.slane %v1583, 4
    %v1672 = vrot.slane %v1585, 4
    %v1673 = vrot.slane %v1587, 4
    %v1674 = vrot.slane %v1589, 4
    %v1675 = vrot.slane %v1591, 4
    %v1676 = vrot.slane %v1593, 4
    %v1677 = vrot.slane %v1595, 4
    %v1678 = vrot.slane %v1597, 4
    %v1679 = vld [vmem:[%s2] sm:$0xff]
    %v1680 = vld [vmem:[%s2 + $0x8] sm:$0xff]
    %v1681 = vld [vmem:[%s2 + $0x10] sm:$0xf]
    %v1686 = vrot.slane %v1567, 4
    %v1687 = vrot.slane %v1599, 4
    %s1688 = scalar_lea.vmem %s2, 24
    %v1689 = vld [vmem:[%s1688] sm:$0xff]
    %v1690 = vld [vmem:[%s1688 + $0x8] sm:$0xff]
    %v1691 = vld [vmem:[%s1688 + $0x10] sm:$0xf]
    %1692 = vst [vmem:[#allocation1] ss:$2 sm:$0xff] %v1545
    %s1693 = scalar_lea.vmem [#allocation1], 1
    %1694 = vst [vmem:[%s1693] ss:$2 sm:$0xff] %v1656
    %s1695 = scalar_lea.vmem [#allocation1], 16
    %1696 = vst [vmem:[%s1695] ss:$2 sm:$0xff] %v1546
    %s1697 = scalar_lea.vmem [#allocation1], 17
    %1698 = vst [vmem:[%s1697] ss:$2 sm:$0xff] %v1547
    %s1699 = scalar_lea.vmem [#allocation1], 32
    %1700 = vst [vmem:[%s1699] ss:$2 sm:$0xff] %v1657
    %s1701 = scalar_lea.vmem [#allocation1], 33
    %1702 = vst [vmem:[%s1701] ss:$2 sm:$0xff] %v1548
    %s1703 = scalar_lea.vmem [#allocation1], 48
    %1704 = vst [vmem:[%s1703] ss:$2 sm:$0xff] %v1549
    %s1705 = scalar_lea.vmem [#allocation1], 49
    %1706 = vst [vmem:[%s1705] ss:$2 sm:$0xff] %v1658
    %v1707 = vld.sshfl [vmem:[#allocation1] sm:$0xff pattern:$0x75316420]
    %v1708 = vld.sshfl [vmem:[#allocation1 + $0x10] sm:$0xff pattern:$0x75316420]
    %v1709 = vld.sshfl [vmem:[#allocation1 + $0x20] sm:$0xff pattern:$0x75316420]
    %v1710 = vld.sshfl [vmem:[#allocation1 + $0x30] sm:$0xff pattern:$0x75316420]
    %1711 = vst [vmem:[#allocation1] ss:$2 sm:$0xff] %v1550
    %1712 = vst [vmem:[%s1693] ss:$2 sm:$0xff] %v1551
    %1713 = vst [vmem:[%s1695] ss:$2 sm:$0xff] %v1659
    %1714 = vst [vmem:[%s1697] ss:$2 sm:$0xff] %v1552
    %1715 = vst [vmem:[%s1699] ss:$2 sm:$0xff] %v1553
    %1716 = vst [vmem:[%s1701] ss:$2 sm:$0xff] %v1660
    %1717 = vst [vmem:[%s1703] ss:$2 sm:$0xff] %v1554
    %1718 = vst [vmem:[%s1705] ss:$2 sm:$0xff] %v1555
    %v1719 = vld.sshfl [vmem:[#allocation1] sm:$0xff pattern:$0x75316420]
    %v1720 = vld.sshfl [vmem:[#allocation1 + $0x10] sm:$0xff pattern:$0x75316420]
    %v1721 = vld.sshfl [vmem:[#allocation1 + $0x20] sm:$0xff pattern:$0x75316420]
    %v1722 = vld.sshfl [vmem:[#allocation1 + $0x30] sm:$0xff pattern:$0x75316420]
    %1723 = vst [vmem:[#allocation1] ss:$2 sm:$0xff] %v1661
    %1724 = vst [vmem:[%s1693] ss:$2 sm:$0xff] %v1556
    %1725 = vst [vmem:[%s1695] ss:$2 sm:$0xff] %v1557
    %1726 = vst [vmem:[%s1697] ss:$2 sm:$0xff] %v1662
    %1727 = vst [vmem:[%s1699] ss:$2 sm:$0xff] %v1558
    %1728 = vst [vmem:[%s1701] ss:$2 sm:$0xff] %v1559
    %1729 = vst [vmem:[%s1703] ss:$2 sm:$0xff] %v1663
    %1730 = vst [vmem:[%s1705] ss:$2 sm:$0xff] %v1560
    %v1731 = vld.sshfl [vmem:[#allocation1] sm:$0xff pattern:$0x75316420]
    %v1732 = vld.sshfl [vmem:[#allocation1 + $0x10] sm:$0xff pattern:$0x75316420]
    %v1733 = vld.sshfl [vmem:[#allocation1 + $0x20] sm:$0xff pattern:$0x75316420]
    %v1734 = vld.sshfl [vmem:[#allocation1 + $0x30] sm:$0xff pattern:$0x75316420]
    %1735 = vst [vmem:[#allocation1] ss:$2 sm:$0xff] %v1561
    %1736 = vst [vmem:[%s1693] ss:$2 sm:$0xff] %v1664
    %1737 = vst [vmem:[%s1695] ss:$2 sm:$0xff] %v1562
    %1738 = vst [vmem:[%s1697] ss:$2 sm:$0xff] %v1563
    %1739 = vst [vmem:[%s1699] ss:$2 sm:$0xff] %v1665
    %1740 = vst [vmem:[%s1701] ss:$2 sm:$0xff] %v1564
    %1741 = vst [vmem:[%s1703] ss:$2 sm:$0xff] %v1565
    %1742 = vst [vmem:[%s1705] ss:$2 sm:$0xff] %v1666
    %v1743 = vld.sshfl [vmem:[#allocation1] sm:$0xff pattern:$0x75316420]
    %v1744 = vld.sshfl [vmem:[#allocation1 + $0x10] sm:$0xff pattern:$0x75316420]
    %v1745 = vld.sshfl [vmem:[#allocation1 + $0x20] sm:$0xff pattern:$0x75316420]
    %v1746 = vld.sshfl [vmem:[#allocation1 + $0x30] sm:$0xff pattern:$0x75316420]
    %1747 = vst [vmem:[#allocation1] ss:$2 sm:$0xff] %v1566
    %1748 = vst [vmem:[%s1693] ss:$2 sm:$0xff] %v1567
    %1749 = vst [vmem:[%s1695] ss:$2 sm:$0xff] %v1686
    %1750 = vst [vmem:[%s1697] ss:$2 sm:$0xff] %v1568
    %1751 = vst [vmem:[%s1699] ss:$2 sm:$0xff] %v1577
    %1752 = vst [vmem:[%s1701] ss:$2 sm:$0xff] %v1668
    %1753 = vst [vmem:[%s1703] ss:$2 sm:$0xff] %v1578
    %1754 = vst [vmem:[%s1705] ss:$2 sm:$0xff] %v1579
    %v1755 = vld.sshfl [vmem:[#allocation1] sm:$0xff pattern:$0x75316420]
    %v1756 = vld.sshfl [vmem:[#allocation1 + $0x10] sm:$0xff pattern:$0x75316420]
    %v1757 = vld.sshfl [vmem:[#allocation1 + $0x20] sm:$0xff pattern:$0x75316420]
    %v1758 = vld.sshfl [vmem:[#allocation1 + $0x30] sm:$0xff pattern:$0x75316420]
    %1759 = vst [vmem:[#allocation1] ss:$2 sm:$0xff] %v1669
    %1760 = vst [vmem:[%s1693] ss:$2 sm:$0xff] %v1580
    %1761 = vst [vmem:[%s1695] ss:$2 sm:$0xff] %v1581
    %1762 = vst [vmem:[%s1697] ss:$2 sm:$0xff] %v1670
    %1763 = vst [vmem:[%s1699] ss:$2 sm:$0xff] %v1582
    %1764 = vst [vmem:[%s1701] ss:$2 sm:$0xff] %v1583
    %1765 = vst [vmem:[%s1703] ss:$2 sm:$0xff] %v1671
    %1766 = vst [vmem:[%s1705] ss:$2 sm:$0xff] %v1584
    %v1767 = vld.sshfl [vmem:[#allocation1] sm:$0xff pattern:$0x75316420]
    %v1768 = vld.sshfl [vmem:[#allocation1 + $0x10] sm:$0xff pattern:$0x75316420]
    %v1769 = vld.sshfl [vmem:[#allocation1 + $0x20] sm:$0xff pattern:$0x75316420]
    %v1770 = vld.sshfl [vmem:[#allocation1 + $0x30] sm:$0xff pattern:$0x75316420]
    %1771 = vst [vmem:[#allocation1] ss:$2 sm:$0xff] %v1585
    %1772 = vst [vmem:[%s1693] ss:$2 sm:$0xff] %v1672
    %1773 = vst [vmem:[%s1695] ss:$2 sm:$0xff] %v1586
    %1774 = vst [vmem:[%s1697] ss:$2 sm:$0xff] %v1587
    %1775 = vst [vmem:[%s1699] ss:$2 sm:$0xff] %v1673
    %1776 = vst [vmem:[%s1701] ss:$2 sm:$0xff] %v1588
    %1777 = vst [vmem:[%s1703] ss:$2 sm:$0xff] %v1589
    %1778 = vst [vmem:[%s1705] ss:$2 sm:$0xff] %v1674
    %v1779 = vld.sshfl [vmem:[#allocation1] sm:$0xff pattern:$0x75316420]
    %v1780 = vld.sshfl [vmem:[#allocation1 + $0x10] sm:$0xff pattern:$0x75316420]
    %v1781 = vld.sshfl [vmem:[#allocation1 + $0x20] sm:$0xff pattern:$0x75316420]
    %v1782 = vld.sshfl [vmem:[#allocation1 + $0x30] sm:$0xff pattern:$0x75316420]
    %1783 = vst [vmem:[#allocation1] ss:$2 sm:$0xff] %v1590
    %1784 = vst [vmem:[%s1693] ss:$2 sm:$0xff] %v1591
    %1785 = vst [vmem:[%s1695] ss:$2 sm:$0xff] %v1675
    %1786 = vst [vmem:[%s1697] ss:$2 sm:$0xff] %v1592
    %1787 = vst [vmem:[%s1699] ss:$2 sm:$0xff] %v1593
    %1788 = vst [vmem:[%s1701] ss:$2 sm:$0xff] %v1676
    %1789 = vst [vmem:[%s1703] ss:$2 sm:$0xff] %v1594
    %1790 = vst [vmem:[%s1705] ss:$2 sm:$0xff] %v1595
    %v1791 = vld.sshfl [vmem:[#allocation1] sm:$0xff pattern:$0x75316420]
    %v1792 = vld.sshfl [vmem:[#allocation1 + $0x10] sm:$0xff pattern:$0x75316420]
    %v1793 = vld.sshfl [vmem:[#allocation1 + $0x20] sm:$0xff pattern:$0x75316420]
    %v1794 = vld.sshfl [vmem:[#allocation1 + $0x30] sm:$0xff pattern:$0x75316420]
    %1795 = vst [vmem:[#allocation1] ss:$2 sm:$0xff] %v1677
    %1796 = vst [vmem:[%s1693] ss:$2 sm:$0xff] %v1596
    %1797 = vst [vmem:[%s1695] ss:$2 sm:$0xff] %v1597
    %1798 = vst [vmem:[%s1697] ss:$2 sm:$0xff] %v1678
    %1799 = vst [vmem:[%s1699] ss:$2 sm:$0xff] %v1598
    %1800 = vst [vmem:[%s1701] ss:$2 sm:$0xff] %v1599
    %1801 = vst [vmem:[%s1703] ss:$2 sm:$0xff] %v1687
    %1802 = vst [vmem:[%s1705] ss:$2 sm:$0xff] %v1600
    %v1803 = vld.sshfl [vmem:[#allocation1] sm:$0xff pattern:$0x75316420]
    %v1804 = vld.sshfl [vmem:[#allocation1 + $0x10] sm:$0xff pattern:$0x75316420]
    %v1805 = vld.sshfl [vmem:[#allocation1 + $0x20] sm:$0xff pattern:$0x75316420]
    %v1806 = vld.sshfl [vmem:[#allocation1 + $0x30] sm:$0xff pattern:$0x75316420]
    %vm1807 = vcmask 162816
    %v1808 = vsel %vm1807, %v1707, 0
    %v1810 = vsel %vm1807, %v1708, 0
    %v1812 = vsel %vm1807, %v1709, 0
    %v1814 = vsel %vm1807, %v1710, 0
    %v1816 = vsel %vm1807, %v1719, 0
    %v1818 = vsel %vm1807, %v1720, 0
    %v1820 = vsel %vm1807, %v1721, 0
    %v1822 = vsel %vm1807, %v1722, 0
    %v1824 = vsel %vm1807, %v1731, 0
    %v1826 = vsel %vm1807, %v1732, 0
    %v1828 = vsel %vm1807, %v1733, 0
    %v1830 = vsel %vm1807, %v1734, 0
    %v1832 = vsel %vm1807, %v1743, 0
    %v1834 = vsel %vm1807, %v1744, 0
    %v1836 = vsel %vm1807, %v1745, 0
    %v1838 = vsel %vm1807, %v1746, 0
    %v1840 = vsel %vm1807, %v1755, 0
    %v1842 = vsel %vm1807, %v1756, 0
    %v1844 = vsel %vm1807, %v1757, 0
    %v1846 = vsel %vm1807, %v1758, 0
    %v1848 = vsel %vm1807, %v1767, 0
    %v1850 = vsel %vm1807, %v1768, 0
    %v1852 = vsel %vm1807, %v1769, 0
    %v1854 = vsel %vm1807, %v1770, 0
    %v1856 = vsel %vm1807, %v1779, 0
    %v1858 = vsel %vm1807, %v1780, 0
    %v1860 = vsel %vm1807, %v1781, 0
    %v1862 = vsel %vm1807, %v1782, 0
    %v1864 = vsel %vm1807, %v1791, 0
    %v1866 = vsel %vm1807, %v1792, 0
    %v1868 = vsel %vm1807, %v1793, 0
    %v1870 = vsel %vm1807, %v1794, 0
    %v1872 = vsel %vm1807, %v1803, 0
    %v1874 = vsel %vm1807, %v1804, 0
    %v1876 = vsel %vm1807, %v1805, 0
    %v1878 = vsel %vm1807, %v1806, 0
    %v1881 = vsel %vm1058, %v1691, 0
    %1883 = vmatpush.msra.mxu0 0.0
    %1884 = vmatpush.msra.mxu0 0.0
    %1885 = vmatpush.msra.mxu0 0.0
    %1886 = vmatpush.msra.mxu0 0.0
    %1887 = vmatpush.msra.mxu0 0.0
    %1888 = vmatpush.msra.mxu0 0.0
    %1889 = vmatpush.msra.mxu0 0.0
    %1890 = vmatpush.msra.mxu0 0.0
    %1891 = vmatpush.msra.mxu0 0.0
    %1892 = vmatpush.msra.mxu0 0.0
    %1893 = vmatpush.msra.mxu0 0.0
    %1894 = vmatpush.msra.mxu0 0.0
    %1895 = vmatpush.msra.mxu0 0.0
    %1896 = vmatpush.msra.mxu0 %v1881
    %1897 = vmatpush.msra.mxu0 %v1690
    %1898 = vmatpush.msra.mxu0 %v1689
    %1899 = vmatmul.f32.gmra.mxu0 %v1808
    %v1900 = vpop.f32.mrf.mxu0
    %v1901 = vadd.f32 0.0, %v1900
    %1902 = vmatmul.f32.gmra.mxu0 %v1810
    %v1903 = vpop.f32.mrf.mxu0
    %v1904 = vadd.f32 0.0, %v1903
    %1905 = vmatmul.f32.gmra.mxu0 %v1812
    %v1906 = vpop.f32.mrf.mxu0
    %v1907 = vadd.f32 0.0, %v1906
    %1908 = vmatmul.f32.gmra.mxu0 %v1814
    %v1909 = vpop.f32.mrf.mxu0
    %v1910 = vadd.f32 0.0, %v1909
    %1911 = vmatmul.f32.gmra.mxu0 %v1816
    %v1912 = vpop.f32.mrf.mxu0
    %v1913 = vadd.f32 0.0, %v1912
    %1914 = vmatmul.f32.gmra.mxu0 %v1818
    %v1915 = vpop.f32.mrf.mxu0
    %v1916 = vadd.f32 0.0, %v1915
    %1917 = vmatmul.f32.gmra.mxu0 %v1820
    %v1918 = vpop.f32.mrf.mxu0
    %v1919 = vadd.f32 0.0, %v1918
    %1920 = vmatmul.f32.gmra.mxu0 %v1822
    %v1921 = vpop.f32.mrf.mxu0
    %v1922 = vadd.f32 0.0, %v1921
    %1923 = vmatmul.f32.gmra.mxu0 %v1824
    %v1924 = vpop.f32.mrf.mxu0
    %v1925 = vadd.f32 0.0, %v1924
    %1926 = vmatmul.f32.gmra.mxu0 %v1826
    %v1927 = vpop.f32.mrf.mxu0
    %v1928 = vadd.f32 0.0, %v1927
    %1929 = vmatmul.f32.gmra.mxu0 %v1828
    %v1930 = vpop.f32.mrf.mxu0
    %v1931 = vadd.f32 0.0, %v1930
    %1932 = vmatmul.f32.gmra.mxu0 %v1830
    %v1933 = vpop.f32.mrf.mxu0
    %v1934 = vadd.f32 0.0, %v1933
    %1935 = vmatmul.f32.gmra.mxu0 %v1832
    %v1936 = vpop.f32.mrf.mxu0
    %v1937 = vadd.f32 0.0, %v1936
    %1938 = vmatmul.f32.gmra.mxu0 %v1834
    %v1939 = vpop.f32.mrf.mxu0
    %v1940 = vadd.f32 0.0, %v1939
    %1941 = vmatmul.f32.gmra.mxu0 %v1836
    %v1942 = vpop.f32.mrf.mxu0
    %v1943 = vadd.f32 0.0, %v1942
    %1944 = vmatmul.f32.gmra.mxu0 %v1838
    %v1945 = vpop.f32.mrf.mxu0
    %v1946 = vadd.f32 0.0, %v1945
    %1947 = vmatmul.f32.gmra.mxu0 %v1840
    %v1948 = vpop.f32.mrf.mxu0
    %v1949 = vadd.f32 0.0, %v1948
    %1950 = vmatmul.f32.gmra.mxu0 %v1842
    %v1951 = vpop.f32.mrf.mxu0
    %v1952 = vadd.f32 0.0, %v1951
    %1953 = vmatmul.f32.gmra.mxu0 %v1844
    %v1954 = vpop.f32.mrf.mxu0
    %v1955 = vadd.f32 0.0, %v1954
    %1956 = vmatmul.f32.gmra.mxu0 %v1846
    %v1957 = vpop.f32.mrf.mxu0
    %v1958 = vadd.f32 0.0, %v1957
    %1959 = vmatmul.f32.gmra.mxu0 %v1848
    %v1960 = vpop.f32.mrf.mxu0
    %v1961 = vadd.f32 0.0, %v1960
    %1962 = vmatmul.f32.gmra.mxu0 %v1850
    %v1963 = vpop.f32.mrf.mxu0
    %v1964 = vadd.f32 0.0, %v1963
    %1965 = vmatmul.f32.gmra.mxu0 %v1852
    %v1966 = vpop.f32.mrf.mxu0
    %v1967 = vadd.f32 0.0, %v1966
    %1968 = vmatmul.f32.gmra.mxu0 %v1854
    %v1969 = vpop.f32.mrf.mxu0
    %v1970 = vadd.f32 0.0, %v1969
    %1971 = vmatmul.f32.gmra.mxu0 %v1856
    %v1972 = vpop.f32.mrf.mxu0
    %v1973 = vadd.f32 0.0, %v1972
    %1974 = vmatmul.f32.gmra.mxu0 %v1858
    %v1975 = vpop.f32.mrf.mxu0
    %v1976 = vadd.f32 0.0, %v1975
    %1977 = vmatmul.f32.gmra.mxu0 %v1860
    %v1978 = vpop.f32.mrf.mxu0
    %v1979 = vadd.f32 0.0, %v1978
    %1980 = vmatmul.f32.gmra.mxu0 %v1862
    %v1981 = vpop.f32.mrf.mxu0
    %v1982 = vadd.f32 0.0, %v1981
    %1983 = vmatmul.f32.gmra.mxu0 %v1864
    %v1984 = vpop.f32.mrf.mxu0
    %v1985 = vadd.f32 0.0, %v1984
    %1986 = vmatmul.f32.gmra.mxu0 %v1866
    %v1987 = vpop.f32.mrf.mxu0
    %v1988 = vadd.f32 0.0, %v1987
    %1989 = vmatmul.f32.gmra.mxu0 %v1868
    %v1990 = vpop.f32.mrf.mxu0
    %v1991 = vadd.f32 0.0, %v1990
    %1992 = vmatmul.f32.gmra.mxu0 %v1870
    %v1993 = vpop.f32.mrf.mxu0
    %v1994 = vadd.f32 0.0, %v1993
    %1995 = vmatmul.f32.gmra.mxu0 %v1872
    %v1996 = vpop.f32.mrf.mxu0
    %v1997 = vadd.f32 0.0, %v1996
    %1998 = vmatmul.f32.gmra.mxu0 %v1874
    %v1999 = vpop.f32.mrf.mxu0
    %v2000 = vadd.f32 0.0, %v1999
    %2001 = vmatmul.f32.gmra.mxu0 %v1876
    %v2002 = vpop.f32.mrf.mxu0
    %v2003 = vadd.f32 0.0, %v2002
    %2004 = vmatmul.f32.gmra.mxu0 %v1878
    %v2005 = vpop.f32.mrf.mxu0
    %v2006 = vadd.f32 0.0, %v2005
    %2007 = vdwg.mxu0
    %2008 = vst [vmem:[#allocation1] ss:$2 sm:$0xff] %v1543
    %s2009 = scalar_lea.vmem [#allocation1], 1
    %2010 = vst [vmem:[%s2009] ss:$2 sm:$0xff] %v1655
    %s2011 = scalar_lea.vmem [#allocation1], 16
    %2012 = vst [vmem:[%s2011] ss:$2 sm:$0xff] %v1544
    %s2013 = scalar_lea.vmem [#allocation1], 17
    %2014 = vst [vmem:[%s2013] ss:$2 sm:$0xff] %v1545
    %s2015 = scalar_lea.vmem [#allocation1], 32
    %2016 = vst [vmem:[%s2015] ss:$2 sm:$0xff] %v1656
    %s2017 = scalar_lea.vmem [#allocation1], 33
    %2018 = vst [vmem:[%s2017] ss:$2 sm:$0xff] %v1546
    %s2019 = scalar_lea.vmem [#allocation1], 48
    %2020 = vst [vmem:[%s2019] ss:$2 sm:$0xff] %v1547
    %s2021 = scalar_lea.vmem [#allocation1], 49
    %2022 = vst [vmem:[%s2021] ss:$2 sm:$0xff] %v1657
    %v2023 = vld.sshfl [vmem:[#allocation1] sm:$0xff pattern:$0x75316420]
    %v2024 = vld.sshfl [vmem:[#allocation1 + $0x10] sm:$0xff pattern:$0x75316420]
    %v2025 = vld.sshfl [vmem:[#allocation1 + $0x20] sm:$0xff pattern:$0x75316420]
    %v2026 = vld.sshfl [vmem:[#allocation1 + $0x30] sm:$0xff pattern:$0x75316420]
    %2027 = vst [vmem:[#allocation1] ss:$2 sm:$0xff] %v1548
    %2028 = vst [vmem:[%s2009] ss:$2 sm:$0xff] %v1549
    %2029 = vst [vmem:[%s2011] ss:$2 sm:$0xff] %v1658
    %2030 = vst [vmem:[%s2013] ss:$2 sm:$0xff] %v1550
    %2031 = vst [vmem:[%s2015] ss:$2 sm:$0xff] %v1551
    %2032 = vst [vmem:[%s2017] ss:$2 sm:$0xff] %v1659
    %2033 = vst [vmem:[%s2019] ss:$2 sm:$0xff] %v1552
    %2034 = vst [vmem:[%s2021] ss:$2 sm:$0xff] %v1553
    %v2035 = vld.sshfl [vmem:[#allocation1] sm:$0xff pattern:$0x75316420]
    %v2036 = vld.sshfl [vmem:[#allocation1 + $0x10] sm:$0xff pattern:$0x75316420]
    %v2037 = vld.sshfl [vmem:[#allocation1 + $0x20] sm:$0xff pattern:$0x75316420]
    %v2038 = vld.sshfl [vmem:[#allocation1 + $0x30] sm:$0xff pattern:$0x75316420]
    %2039 = vst [vmem:[#allocation1] ss:$2 sm:$0xff] %v1660
    %2040 = vst [vmem:[%s2009] ss:$2 sm:$0xff] %v1554
    %2041 = vst [vmem:[%s2011] ss:$2 sm:$0xff] %v1555
    %2042 = vst [vmem:[%s2013] ss:$2 sm:$0xff] %v1661
    %2043 = vst [vmem:[%s2015] ss:$2 sm:$0xff] %v1556
    %2044 = vst [vmem:[%s2017] ss:$2 sm:$0xff] %v1557
    %2045 = vst [vmem:[%s2019] ss:$2 sm:$0xff] %v1662
    %2046 = vst [vmem:[%s2021] ss:$2 sm:$0xff] %v1558
    %v2047 = vld.sshfl [vmem:[#allocation1] sm:$0xff pattern:$0x75316420]
    %v2048 = vld.sshfl [vmem:[#allocation1 + $0x10] sm:$0xff pattern:$0x75316420]
    %v2049 = vld.sshfl [vmem:[#allocation1 + $0x20] sm:$0xff pattern:$0x75316420]
    %v2050 = vld.sshfl [vmem:[#allocation1 + $0x30] sm:$0xff pattern:$0x75316420]
    %2051 = vst [vmem:[#allocation1] ss:$2 sm:$0xff] %v1559
    %2052 = vst [vmem:[%s2009] ss:$2 sm:$0xff] %v1663
    %2053 = vst [vmem:[%s2011] ss:$2 sm:$0xff] %v1560
    %2054 = vst [vmem:[%s2013] ss:$2 sm:$0xff] %v1561
    %2055 = vst [vmem:[%s2015] ss:$2 sm:$0xff] %v1664
    %2056 = vst [vmem:[%s2017] ss:$2 sm:$0xff] %v1562
    %2057 = vst [vmem:[%s2019] ss:$2 sm:$0xff] %v1563
    %2058 = vst [vmem:[%s2021] ss:$2 sm:$0xff] %v1665
    %v2059 = vld.sshfl [vmem:[#allocation1] sm:$0xff pattern:$0x75316420]
    %v2060 = vld.sshfl [vmem:[#allocation1 + $0x10] sm:$0xff pattern:$0x75316420]
    %v2061 = vld.sshfl [vmem:[#allocation1 + $0x20] sm:$0xff pattern:$0x75316420]
    %v2062 = vld.sshfl [vmem:[#allocation1 + $0x30] sm:$0xff pattern:$0x75316420]
    %2063 = vst [vmem:[#allocation1] ss:$2 sm:$0xff] %v1564
    %2064 = vst [vmem:[%s2009] ss:$2 sm:$0xff] %v1565
    %2065 = vst [vmem:[%s2011] ss:$2 sm:$0xff] %v1666
    %2066 = vst [vmem:[%s2013] ss:$2 sm:$0xff] %v1566
    %2067 = vst [vmem:[%s2015] ss:$2 sm:$0xff] %v1575
    %2068 = vst [vmem:[%s2017] ss:$2 sm:$0xff] %v1667
    %2069 = vst [vmem:[%s2019] ss:$2 sm:$0xff] %v1576
    %2070 = vst [vmem:[%s2021] ss:$2 sm:$0xff] %v1577
    %v2071 = vld.sshfl [vmem:[#allocation1] sm:$0xff pattern:$0x75316420]
    %v2072 = vld.sshfl [vmem:[#allocation1 + $0x10] sm:$0xff pattern:$0x75316420]
    %v2073 = vld.sshfl [vmem:[#allocation1 + $0x20] sm:$0xff pattern:$0x75316420]
    %v2074 = vld.sshfl [vmem:[#allocation1 + $0x30] sm:$0xff pattern:$0x75316420]
    %2075 = vst [vmem:[#allocation1] ss:$2 sm:$0xff] %v1668
    %2076 = vst [vmem:[%s2009] ss:$2 sm:$0xff] %v1578
    %2077 = vst [vmem:[%s2011] ss:$2 sm:$0xff] %v1579
    %2078 = vst [vmem:[%s2013] ss:$2 sm:$0xff] %v1669
    %2079 = vst [vmem:[%s2015] ss:$2 sm:$0xff] %v1580
    %2080 = vst [vmem:[%s2017] ss:$2 sm:$0xff] %v1581
    %2081 = vst [vmem:[%s2019] ss:$2 sm:$0xff] %v1670
    %2082 = vst [vmem:[%s2021] ss:$2 sm:$0xff] %v1582
    %v2083 = vld.sshfl [vmem:[#allocation1] sm:$0xff pattern:$0x75316420]
    %v2084 = vld.sshfl [vmem:[#allocation1 + $0x10] sm:$0xff pattern:$0x75316420]
    %v2085 = vld.sshfl [vmem:[#allocation1 + $0x20] sm:$0xff pattern:$0x75316420]
    %v2086 = vld.sshfl [vmem:[#allocation1 + $0x30] sm:$0xff pattern:$0x75316420]
    %2087 = vst [vmem:[#allocation1] ss:$2 sm:$0xff] %v1583
    %2088 = vst [vmem:[%s2009] ss:$2 sm:$0xff] %v1671
    %2089 = vst [vmem:[%s2011] ss:$2 sm:$0xff] %v1584
    %2090 = vst [vmem:[%s2013] ss:$2 sm:$0xff] %v1585
    %2091 = vst [vmem:[%s2015] ss:$2 sm:$0xff] %v1672
    %2092 = vst [vmem:[%s2017] ss:$2 sm:$0xff] %v1586
    %2093 = vst [vmem:[%s2019] ss:$2 sm:$0xff] %v1587
    %2094 = vst [vmem:[%s2021] ss:$2 sm:$0xff] %v1673
    %v2095 = vld.sshfl [vmem:[#allocation1] sm:$0xff pattern:$0x75316420]
    %v2096 = vld.sshfl [vmem:[#allocation1 + $0x10] sm:$0xff pattern:$0x75316420]
    %v2097 = vld.sshfl [vmem:[#allocation1 + $0x20] sm:$0xff pattern:$0x75316420]
    %v2098 = vld.sshfl [vmem:[#allocation1 + $0x30] sm:$0xff pattern:$0x75316420]
    %2099 = vst [vmem:[#allocation1] ss:$2 sm:$0xff] %v1588
    %2100 = vst [vmem:[%s2009] ss:$2 sm:$0xff] %v1589
    %2101 = vst [vmem:[%s2011] ss:$2 sm:$0xff] %v1674
    %2102 = vst [vmem:[%s2013] ss:$2 sm:$0xff] %v1590
    %2103 = vst [vmem:[%s2015] ss:$2 sm:$0xff] %v1591
    %2104 = vst [vmem:[%s2017] ss:$2 sm:$0xff] %v1675
    %2105 = vst [vmem:[%s2019] ss:$2 sm:$0xff] %v1592
    %2106 = vst [vmem:[%s2021] ss:$2 sm:$0xff] %v1593
    %v2107 = vld.sshfl [vmem:[#allocation1] sm:$0xff pattern:$0x75316420]
    %v2108 = vld.sshfl [vmem:[#allocation1 + $0x10] sm:$0xff pattern:$0x75316420]
    %v2109 = vld.sshfl [vmem:[#allocation1 + $0x20] sm:$0xff pattern:$0x75316420]
    %v2110 = vld.sshfl [vmem:[#allocation1 + $0x30] sm:$0xff pattern:$0x75316420]
    %2111 = vst [vmem:[#allocation1] ss:$2 sm:$0xff] %v1676
    %2112 = vst [vmem:[%s2009] ss:$2 sm:$0xff] %v1594
    %2113 = vst [vmem:[%s2011] ss:$2 sm:$0xff] %v1595
    %2114 = vst [vmem:[%s2013] ss:$2 sm:$0xff] %v1677
    %2115 = vst [vmem:[%s2015] ss:$2 sm:$0xff] %v1596
    %2116 = vst [vmem:[%s2017] ss:$2 sm:$0xff] %v1597
    %2117 = vst [vmem:[%s2019] ss:$2 sm:$0xff] %v1678
    %2118 = vst [vmem:[%s2021] ss:$2 sm:$0xff] %v1598
    %v2119 = vld.sshfl [vmem:[#allocation1] sm:$0xff pattern:$0x75316420]
    %v2120 = vld.sshfl [vmem:[#allocation1 + $0x10] sm:$0xff pattern:$0x75316420]
    %v2121 = vld.sshfl [vmem:[#allocation1 + $0x20] sm:$0xff pattern:$0x75316420]
    %v2122 = vld.sshfl [vmem:[#allocation1 + $0x30] sm:$0xff pattern:$0x75316420]
    %v2123 = vsel %vm1807, %v2023, 0
    %v2125 = vsel %vm1807, %v2024, 0
    %v2127 = vsel %vm1807, %v2025, 0
    %v2129 = vsel %vm1807, %v2026, 0
    %v2131 = vsel %vm1807, %v2035, 0
    %v2133 = vsel %vm1807, %v2036, 0
    %v2135 = vsel %vm1807, %v2037, 0
    %v2137 = vsel %vm1807, %v2038, 0
    %v2139 = vsel %vm1807, %v2047, 0
    %v2141 = vsel %vm1807, %v2048, 0
    %v2143 = vsel %vm1807, %v2049, 0
    %v2145 = vsel %vm1807, %v2050, 0
    %v2147 = vsel %vm1807, %v2059, 0
    %v2149 = vsel %vm1807, %v2060, 0
    %v2151 = vsel %vm1807, %v2061, 0
    %v2153 = vsel %vm1807, %v2062, 0
    %v2155 = vsel %vm1807, %v2071, 0
    %v2157 = vsel %vm1807, %v2072, 0
    %v2159 = vsel %vm1807, %v2073, 0
    %v2161 = vsel %vm1807, %v2074, 0
    %v2163 = vsel %vm1807, %v2083, 0
    %v2165 = vsel %vm1807, %v2084, 0
    %v2167 = vsel %vm1807, %v2085, 0
    %v2169 = vsel %vm1807, %v2086, 0
    %v2171 = vsel %vm1807, %v2095, 0
    %v2173 = vsel %vm1807, %v2096, 0
    %v2175 = vsel %vm1807, %v2097, 0
    %v2177 = vsel %vm1807, %v2098, 0
    %v2179 = vsel %vm1807, %v2107, 0
    %v2181 = vsel %vm1807, %v2108, 0
    %v2183 = vsel %vm1807, %v2109, 0
    %v2185 = vsel %vm1807, %v2110, 0
    %v2187 = vsel %vm1807, %v2119, 0
    %v2189 = vsel %vm1807, %v2120, 0
    %v2191 = vsel %vm1807, %v2121, 0
    %v2193 = vsel %vm1807, %v2122, 0
    %v2196 = vsel %vm1058, %v1681, 0
    %2198 = vmatpush.msra.mxu0 0.0
    %2199 = vmatpush.msra.mxu0 0.0
    %2200 = vmatpush.msra.mxu0 0.0
    %2201 = vmatpush.msra.mxu0 0.0
    %2202 = vmatpush.msra.mxu0 0.0
    %2203 = vmatpush.msra.mxu0 0.0
    %2204 = vmatpush.msra.mxu0 0.0
    %2205 = vmatpush.msra.mxu0 0.0
    %2206 = vmatpush.msra.mxu0 0.0
    %2207 = vmatpush.msra.mxu0 0.0
    %2208 = vmatpush.msra.mxu0 0.0
    %2209 = vmatpush.msra.mxu0 0.0
    %2210 = vmatpush.msra.mxu0 0.0
    %2211 = vmatpush.msra.mxu0 %v2196
    %2212 = vmatpush.msra.mxu0 %v1680
    %2213 = vmatpush.msra.mxu0 %v1679
    %2214 = vmatmul.f32.gmra.mxu0 %v2123
    %v2215 = vpop.f32.mrf.mxu0
    %v2216 = vadd.f32 %v1901, %v2215
    %2217 = vmatmul.f32.gmra.mxu0 %v2125
    %v2218 = vpop.f32.mrf.mxu0
    %v2219 = vadd.f32 %v1904, %v2218
    %2220 = vmatmul.f32.gmra.mxu0 %v2127
    %v2221 = vpop.f32.mrf.mxu0
    %v2222 = vadd.f32 %v1907, %v2221
    %2223 = vmatmul.f32.gmra.mxu0 %v2129
    %v2224 = vpop.f32.mrf.mxu0
    %v2225 = vadd.f32 %v1910, %v2224
    %2226 = vmatmul.f32.gmra.mxu0 %v2131
    %v2227 = vpop.f32.mrf.mxu0
    %v2228 = vadd.f32 %v1913, %v2227
    %2229 = vmatmul.f32.gmra.mxu0 %v2133
    %v2230 = vpop.f32.mrf.mxu0
    %v2231 = vadd.f32 %v1916, %v2230
    %2232 = vmatmul.f32.gmra.mxu0 %v2135
    %v2233 = vpop.f32.mrf.mxu0
    %v2234 = vadd.f32 %v1919, %v2233
    %2235 = vmatmul.f32.gmra.mxu0 %v2137
    %v2236 = vpop.f32.mrf.mxu0
    %v2237 = vadd.f32 %v1922, %v2236
    %2238 = vmatmul.f32.gmra.mxu0 %v2139
    %v2239 = vpop.f32.mrf.mxu0
    %v2240 = vadd.f32 %v1925, %v2239
    %2241 = vmatmul.f32.gmra.mxu0 %v2141
    %v2242 = vpop.f32.mrf.mxu0
    %v2243 = vadd.f32 %v1928, %v2242
    %2244 = vmatmul.f32.gmra.mxu0 %v2143
    %v2245 = vpop.f32.mrf.mxu0
    %v2246 = vadd.f32 %v1931, %v2245
    %2247 = vmatmul.f32.gmra.mxu0 %v2145
    %v2248 = vpop.f32.mrf.mxu0
    %v2249 = vadd.f32 %v1934, %v2248
    %2250 = vmatmul.f32.gmra.mxu0 %v2147
    %v2251 = vpop.f32.mrf.mxu0
    %v2252 = vadd.f32 %v1937, %v2251
    %2253 = vmatmul.f32.gmra.mxu0 %v2149
    %v2254 = vpop.f32.mrf.mxu0
    %v2255 = vadd.f32 %v1940, %v2254
    %2256 = vmatmul.f32.gmra.mxu0 %v2151
    %v2257 = vpop.f32.mrf.mxu0
    %v2258 = vadd.f32 %v1943, %v2257
    %2259 = vmatmul.f32.gmra.mxu0 %v2153
    %v2260 = vpop.f32.mrf.mxu0
    %v2261 = vadd.f32 %v1946, %v2260
    %2262 = vmatmul.f32.gmra.mxu0 %v2155
    %v2263 = vpop.f32.mrf.mxu0
    %v2264 = vadd.f32 %v1949, %v2263
    %2265 = vmatmul.f32.gmra.mxu0 %v2157
    %v2266 = vpop.f32.mrf.mxu0
    %v2267 = vadd.f32 %v1952, %v2266
    %2268 = vmatmul.f32.gmra.mxu0 %v2159
    %v2269 = vpop.f32.mrf.mxu0
    %v2270 = vadd.f32 %v1955, %v2269
    %2271 = vmatmul.f32.gmra.mxu0 %v2161
    %v2272 = vpop.f32.mrf.mxu0
    %v2273 = vadd.f32 %v1958, %v2272
    %2274 = vmatmul.f32.gmra.mxu0 %v2163
    %v2275 = vpop.f32.mrf.mxu0
    %v2276 = vadd.f32 %v1961, %v2275
    %2277 = vmatmul.f32.gmra.mxu0 %v2165
    %v2278 = vpop.f32.mrf.mxu0
    %v2279 = vadd.f32 %v1964, %v2278
    %2280 = vmatmul.f32.gmra.mxu0 %v2167
    %v2281 = vpop.f32.mrf.mxu0
    %v2282 = vadd.f32 %v1967, %v2281
    %2283 = vmatmul.f32.gmra.mxu0 %v2169
    %v2284 = vpop.f32.mrf.mxu0
    %v2285 = vadd.f32 %v1970, %v2284
    %2286 = vmatmul.f32.gmra.mxu0 %v2171
    %v2287 = vpop.f32.mrf.mxu0
    %v2288 = vadd.f32 %v1973, %v2287
    %2289 = vmatmul.f32.gmra.mxu0 %v2173
    %v2290 = vpop.f32.mrf.mxu0
    %v2291 = vadd.f32 %v1976, %v2290
    %2292 = vmatmul.f32.gmra.mxu0 %v2175
    %v2293 = vpop.f32.mrf.mxu0
    %v2294 = vadd.f32 %v1979, %v2293
    %2295 = vmatmul.f32.gmra.mxu0 %v2177
    %v2296 = vpop.f32.mrf.mxu0
    %v2297 = vadd.f32 %v1982, %v2296
    %2298 = vmatmul.f32.gmra.mxu0 %v2179
    %v2299 = vpop.f32.mrf.mxu0
    %v2300 = vadd.f32 %v1985, %v2299
    %2301 = vmatmul.f32.gmra.mxu0 %v2181
    %v2302 = vpop.f32.mrf.mxu0
    %v2303 = vadd.f32 %v1988, %v2302
    %2304 = vmatmul.f32.gmra.mxu0 %v2183
    %v2305 = vpop.f32.mrf.mxu0
    %v2306 = vadd.f32 %v1991, %v2305
    %2307 = vmatmul.f32.gmra.mxu0 %v2185
    %v2308 = vpop.f32.mrf.mxu0
    %v2309 = vadd.f32 %v1994, %v2308
    %2310 = vmatmul.f32.gmra.mxu0 %v2187
    %v2311 = vpop.f32.mrf.mxu0
    %v2312 = vadd.f32 %v1997, %v2311
    %2313 = vmatmul.f32.gmra.mxu0 %v2189
    %v2314 = vpop.f32.mrf.mxu0
    %v2315 = vadd.f32 %v2000, %v2314
    %2316 = vmatmul.f32.gmra.mxu0 %v2191
    %v2317 = vpop.f32.mrf.mxu0
    %v2318 = vadd.f32 %v2003, %v2317
    %2319 = vmatmul.f32.gmra.mxu0 %v2193
    %v2320 = vpop.f32.mrf.mxu0
    %v2321 = vadd.f32 %v2006, %v2320
    %2322 = vdwg.mxu0
    %v2327 = vrot.slane %v1569, 4
    %v2328 = vrot.slane %v1601, 4
    %s2329 = scalar_lea.vmem %s2, 48
    %v2330 = vld [vmem:[%s2329] sm:$0xff]
    %v2331 = vld [vmem:[%s2329 + $0x8] sm:$0xff]
    %v2332 = vld [vmem:[%s2329 + $0x10] sm:$0xf]
    %2333 = vst [vmem:[#allocation1] ss:$2 sm:$0xff] %v1547
    %s2334 = scalar_lea.vmem [#allocation1], 1
    %2335 = vst [vmem:[%s2334] ss:$2 sm:$0xff] %v1657
    %s2336 = scalar_lea.vmem [#allocation1], 16
    %2337 = vst [vmem:[%s2336] ss:$2 sm:$0xff] %v1548
    %s2338 = scalar_lea.vmem [#allocation1], 17
    %2339 = vst [vmem:[%s2338] ss:$2 sm:$0xff] %v1549
    %s2340 = scalar_lea.vmem [#allocation1], 32
    %2341 = vst [vmem:[%s2340] ss:$2 sm:$0xff] %v1658
    %s2342 = scalar_lea.vmem [#allocation1], 33
    %2343 = vst [vmem:[%s2342] ss:$2 sm:$0xff] %v1550
    %s2344 = scalar_lea.vmem [#allocation1], 48
    %2345 = vst [vmem:[%s2344] ss:$2 sm:$0xff] %v1551
    %s2346 = scalar_lea.vmem [#allocation1], 49
    %2347 = vst [vmem:[%s2346] ss:$2 sm:$0xff] %v1659
    %v2348 = vld.sshfl [vmem:[#allocation1] sm:$0xff pattern:$0x75316420]
    %v2349 = vld.sshfl [vmem:[#allocation1 + $0x10] sm:$0xff pattern:$0x75316420]
    %v2350 = vld.sshfl [vmem:[#allocation1 + $0x20] sm:$0xff pattern:$0x75316420]
    %v2351 = vld.sshfl [vmem:[#allocation1 + $0x30] sm:$0xff pattern:$0x75316420]
    %2352 = vst [vmem:[#allocation1] ss:$2 sm:$0xff] %v1552
    %2353 = vst [vmem:[%s2334] ss:$2 sm:$0xff] %v1553
    %2354 = vst [vmem:[%s2336] ss:$2 sm:$0xff] %v1660
    %2355 = vst [vmem:[%s2338] ss:$2 sm:$0xff] %v1554
    %2356 = vst [vmem:[%s2340] ss:$2 sm:$0xff] %v1555
    %2357 = vst [vmem:[%s2342] ss:$2 sm:$0xff] %v1661
    %2358 = vst [vmem:[%s2344] ss:$2 sm:$0xff] %v1556
    %2359 = vst [vmem:[%s2346] ss:$2 sm:$0xff] %v1557
    %v2360 = vld.sshfl [vmem:[#allocation1] sm:$0xff pattern:$0x75316420]
    %v2361 = vld.sshfl [vmem:[#allocation1 + $0x10] sm:$0xff pattern:$0x75316420]
    %v2362 = vld.sshfl [vmem:[#allocation1 + $0x20] sm:$0xff pattern:$0x75316420]
    %v2363 = vld.sshfl [vmem:[#allocation1 + $0x30] sm:$0xff pattern:$0x75316420]
    %2364 = vst [vmem:[#allocation1] ss:$2 sm:$0xff] %v1662
    %2365 = vst [vmem:[%s2334] ss:$2 sm:$0xff] %v1558
    %2366 = vst [vmem:[%s2336] ss:$2 sm:$0xff] %v1559
    %2367 = vst [vmem:[%s2338] ss:$2 sm:$0xff] %v1663
    %2368 = vst [vmem:[%s2340] ss:$2 sm:$0xff] %v1560
    %2369 = vst [vmem:[%s2342] ss:$2 sm:$0xff] %v1561
    %2370 = vst [vmem:[%s2344] ss:$2 sm:$0xff] %v1664
    %2371 = vst [vmem:[%s2346] ss:$2 sm:$0xff] %v1562
    %v2372 = vld.sshfl [vmem:[#allocation1] sm:$0xff pattern:$0x75316420]
    %v2373 = vld.sshfl [vmem:[#allocation1 + $0x10] sm:$0xff pattern:$0x75316420]
    %v2374 = vld.sshfl [vmem:[#allocation1 + $0x20] sm:$0xff pattern:$0x75316420]
    %v2375 = vld.sshfl [vmem:[#allocation1 + $0x30] sm:$0xff pattern:$0x75316420]
    %2376 = vst [vmem:[#allocation1] ss:$2 sm:$0xff] %v1563
    %2377 = vst [vmem:[%s2334] ss:$2 sm:$0xff] %v1665
    %2378 = vst [vmem:[%s2336] ss:$2 sm:$0xff] %v1564
    %2379 = vst [vmem:[%s2338] ss:$2 sm:$0xff] %v1565
    %2380 = vst [vmem:[%s2340] ss:$2 sm:$0xff] %v1666
    %2381 = vst [vmem:[%s2342] ss:$2 sm:$0xff] %v1566
    %2382 = vst [vmem:[%s2344] ss:$2 sm:$0xff] %v1567
    %2383 = vst [vmem:[%s2346] ss:$2 sm:$0xff] %v1686
    %v2384 = vld.sshfl [vmem:[#allocation1] sm:$0xff pattern:$0x75316420]
    %v2385 = vld.sshfl [vmem:[#allocation1 + $0x10] sm:$0xff pattern:$0x75316420]
    %v2386 = vld.sshfl [vmem:[#allocation1 + $0x20] sm:$0xff pattern:$0x75316420]
    %v2387 = vld.sshfl [vmem:[#allocation1 + $0x30] sm:$0xff pattern:$0x75316420]
    %2388 = vst [vmem:[#allocation1] ss:$2 sm:$0xff] %v1568
    %2389 = vst [vmem:[%s2334] ss:$2 sm:$0xff] %v1569
    %2390 = vst [vmem:[%s2336] ss:$2 sm:$0xff] %v2327
    %2391 = vst [vmem:[%s2338] ss:$2 sm:$0xff] %v1570
    %2392 = vst [vmem:[%s2340] ss:$2 sm:$0xff] %v1579
    %2393 = vst [vmem:[%s2342] ss:$2 sm:$0xff] %v1669
    %2394 = vst [vmem:[%s2344] ss:$2 sm:$0xff] %v1580
    %2395 = vst [vmem:[%s2346] ss:$2 sm:$0xff] %v1581
    %v2396 = vld.sshfl [vmem:[#allocation1] sm:$0xff pattern:$0x75316420]
    %v2397 = vld.sshfl [vmem:[#allocation1 + $0x10] sm:$0xff pattern:$0x75316420]
    %v2398 = vld.sshfl [vmem:[#allocation1 + $0x20] sm:$0xff pattern:$0x75316420]
    %v2399 = vld.sshfl [vmem:[#allocation1 + $0x30] sm:$0xff pattern:$0x75316420]
    %2400 = vst [vmem:[#allocation1] ss:$2 sm:$0xff] %v1670
    %2401 = vst [vmem:[%s2334] ss:$2 sm:$0xff] %v1582
    %2402 = vst [vmem:[%s2336] ss:$2 sm:$0xff] %v1583
    %2403 = vst [vmem:[%s2338] ss:$2 sm:$0xff] %v1671
    %2404 = vst [vmem:[%s2340] ss:$2 sm:$0xff] %v1584
    %2405 = vst [vmem:[%s2342] ss:$2 sm:$0xff] %v1585
    %2406 = vst [vmem:[%s2344] ss:$2 sm:$0xff] %v1672
    %2407 = vst [vmem:[%s2346] ss:$2 sm:$0xff] %v1586
    %v2408 = vld.sshfl [vmem:[#allocation1] sm:$0xff pattern:$0x75316420]
    %v2409 = vld.sshfl [vmem:[#allocation1 + $0x10] sm:$0xff pattern:$0x75316420]
    %v2410 = vld.sshfl [vmem:[#allocation1 + $0x20] sm:$0xff pattern:$0x75316420]
    %v2411 = vld.sshfl [vmem:[#allocation1 + $0x30] sm:$0xff pattern:$0x75316420]
    %2412 = vst [vmem:[#allocation1] ss:$2 sm:$0xff] %v1587
    %2413 = vst [vmem:[%s2334] ss:$2 sm:$0xff] %v1673
    %2414 = vst [vmem:[%s2336] ss:$2 sm:$0xff] %v1588
    %2415 = vst [vmem:[%s2338] ss:$2 sm:$0xff] %v1589
    %2416 = vst [vmem:[%s2340] ss:$2 sm:$0xff] %v1674
    %2417 = vst [vmem:[%s2342] ss:$2 sm:$0xff] %v1590
    %2418 = vst [vmem:[%s2344] ss:$2 sm:$0xff] %v1591
    %2419 = vst [vmem:[%s2346] ss:$2 sm:$0xff] %v1675
    %v2420 = vld.sshfl [vmem:[#allocation1] sm:$0xff pattern:$0x75316420]
    %v2421 = vld.sshfl [vmem:[#allocation1 + $0x10] sm:$0xff pattern:$0x75316420]
    %v2422 = vld.sshfl [vmem:[#allocation1 + $0x20] sm:$0xff pattern:$0x75316420]
    %v2423 = vld.sshfl [vmem:[#allocation1 + $0x30] sm:$0xff pattern:$0x75316420]
    %2424 = vst [vmem:[#allocation1] ss:$2 sm:$0xff] %v1592
    %2425 = vst [vmem:[%s2334] ss:$2 sm:$0xff] %v1593
    %2426 = vst [vmem:[%s2336] ss:$2 sm:$0xff] %v1676
    %2427 = vst [vmem:[%s2338] ss:$2 sm:$0xff] %v1594
    %2428 = vst [vmem:[%s2340] ss:$2 sm:$0xff] %v1595
    %2429 = vst [vmem:[%s2342] ss:$2 sm:$0xff] %v1677
    %2430 = vst [vmem:[%s2344] ss:$2 sm:$0xff] %v1596
    %2431 = vst [vmem:[%s2346] ss:$2 sm:$0xff] %v1597
    %v2432 = vld.sshfl [vmem:[#allocation1] sm:$0xff pattern:$0x75316420]
    %v2433 = vld.sshfl [vmem:[#allocation1 + $0x10] sm:$0xff pattern:$0x75316420]
    %v2434 = vld.sshfl [vmem:[#allocation1 + $0x20] sm:$0xff pattern:$0x75316420]
    %v2435 = vld.sshfl [vmem:[#allocation1 + $0x30] sm:$0xff pattern:$0x75316420]
    %2436 = vst [vmem:[#allocation1] ss:$2 sm:$0xff] %v1678
    %2437 = vst [vmem:[%s2334] ss:$2 sm:$0xff] %v1598
    %2438 = vst [vmem:[%s2336] ss:$2 sm:$0xff] %v1599
    %2439 = vst [vmem:[%s2338] ss:$2 sm:$0xff] %v1687
    %2440 = vst [vmem:[%s2340] ss:$2 sm:$0xff] %v1600
    %2441 = vst [vmem:[%s2342] ss:$2 sm:$0xff] %v1601
    %2442 = vst [vmem:[%s2344] ss:$2 sm:$0xff] %v2328
    %2443 = vst [vmem:[%s2346] ss:$2 sm:$0xff] %v1602
    %v2444 = vld.sshfl [vmem:[#allocation1] sm:$0xff pattern:$0x75316420]
    %v2445 = vld.sshfl [vmem:[#allocation1 + $0x10] sm:$0xff pattern:$0x75316420]
    %v2446 = vld.sshfl [vmem:[#allocation1 + $0x20] sm:$0xff pattern:$0x75316420]
    %v2447 = vld.sshfl [vmem:[#allocation1 + $0x30] sm:$0xff pattern:$0x75316420]
    %v2448 = vsel %vm1807, %v2348, 0
    %v2450 = vsel %vm1807, %v2349, 0
    %v2452 = vsel %vm1807, %v2350, 0
    %v2454 = vsel %vm1807, %v2351, 0
    %v2456 = vsel %vm1807, %v2360, 0
    %v2458 = vsel %vm1807, %v2361, 0
    %v2460 = vsel %vm1807, %v2362, 0
    %v2462 = vsel %vm1807, %v2363, 0
    %v2464 = vsel %vm1807, %v2372, 0
    %v2466 = vsel %vm1807, %v2373, 0
    %v2468 = vsel %vm1807, %v2374, 0
    %v2470 = vsel %vm1807, %v2375, 0
    %v2472 = vsel %vm1807, %v2384, 0
    %v2474 = vsel %vm1807, %v2385, 0
    %v2476 = vsel %vm1807, %v2386, 0
    %v2478 = vsel %vm1807, %v2387, 0
    %v2480 = vsel %vm1807, %v2396, 0
    %v2482 = vsel %vm1807, %v2397, 0
    %v2484 = vsel %vm1807, %v2398, 0
    %v2486 = vsel %vm1807, %v2399, 0
    %v2488 = vsel %vm1807, %v2408, 0
    %v2490 = vsel %vm1807, %v2409, 0
    %v2492 = vsel %vm1807, %v2410, 0
    %v2494 = vsel %vm1807, %v2411, 0
    %v2496 = vsel %vm1807, %v2420, 0
    %v2498 = vsel %vm1807, %v2421, 0
    %v2500 = vsel %vm1807, %v2422, 0
    %v2502 = vsel %vm1807, %v2423, 0
    %v2504 = vsel %vm1807, %v2432, 0
    %v2506 = vsel %vm1807, %v2433, 0
    %v2508 = vsel %vm1807, %v2434, 0
    %v2510 = vsel %vm1807, %v2435, 0
    %v2512 = vsel %vm1807, %v2444, 0
    %v2514 = vsel %vm1807, %v2445, 0
    %v2516 = vsel %vm1807, %v2446, 0
    %v2518 = vsel %vm1807, %v2447, 0
    %v2521 = vsel %vm1058, %v2332, 0
    %2523 = vmatpush.msra.mxu0 0.0
    %2524 = vmatpush.msra.mxu0 0.0
    %2525 = vmatpush.msra.mxu0 0.0
    %2526 = vmatpush.msra.mxu0 0.0
    %2527 = vmatpush.msra.mxu0 0.0
    %2528 = vmatpush.msra.mxu0 0.0
    %2529 = vmatpush.msra.mxu0 0.0
    %2530 = vmatpush.msra.mxu0 0.0
    %2531 = vmatpush.msra.mxu0 0.0
    %2532 = vmatpush.msra.mxu0 0.0
    %2533 = vmatpush.msra.mxu0 0.0
    %2534 = vmatpush.msra.mxu0 0.0
    %2535 = vmatpush.msra.mxu0 0.0
    %2536 = vmatpush.msra.mxu0 %v2521
    %2537 = vmatpush.msra.mxu0 %v2331
    %2538 = vmatpush.msra.mxu0 %v2330
    %2539 = vmatmul.f32.gmra.mxu0 %v2448
    %v2540 = vpop.f32.mrf.mxu0
    %v2541 = vadd.f32 0.0, %v2540
    %2542 = vmatmul.f32.gmra.mxu0 %v2450
    %v2543 = vpop.f32.mrf.mxu0
    %v2544 = vadd.f32 0.0, %v2543
    %2545 = vmatmul.f32.gmra.mxu0 %v2452
    %v2546 = vpop.f32.mrf.mxu0
    %v2547 = vadd.f32 0.0, %v2546
    %2548 = vmatmul.f32.gmra.mxu0 %v2454
    %v2549 = vpop.f32.mrf.mxu0
    %v2550 = vadd.f32 0.0, %v2549
    %2551 = vmatmul.f32.gmra.mxu0 %v2456
    %v2552 = vpop.f32.mrf.mxu0
    %v2553 = vadd.f32 0.0, %v2552
    %2554 = vmatmul.f32.gmra.mxu0 %v2458
    %v2555 = vpop.f32.mrf.mxu0
    %v2556 = vadd.f32 0.0, %v2555
    %2557 = vmatmul.f32.gmra.mxu0 %v2460
    %v2558 = vpop.f32.mrf.mxu0
    %v2559 = vadd.f32 0.0, %v2558
    %2560 = vmatmul.f32.gmra.mxu0 %v2462
    %v2561 = vpop.f32.mrf.mxu0
    %v2562 = vadd.f32 0.0, %v2561
    %2563 = vmatmul.f32.gmra.mxu0 %v2464
    %v2564 = vpop.f32.mrf.mxu0
    %v2565 = vadd.f32 0.0, %v2564
    %2566 = vmatmul.f32.gmra.mxu0 %v2466
    %v2567 = vpop.f32.mrf.mxu0
    %v2568 = vadd.f32 0.0, %v2567
    %2569 = vmatmul.f32.gmra.mxu0 %v2468
    %v2570 = vpop.f32.mrf.mxu0
    %v2571 = vadd.f32 0.0, %v2570
    %2572 = vmatmul.f32.gmra.mxu0 %v2470
    %v2573 = vpop.f32.mrf.mxu0
    %v2574 = vadd.f32 0.0, %v2573
    %2575 = vmatmul.f32.gmra.mxu0 %v2472
    %v2576 = vpop.f32.mrf.mxu0
    %v2577 = vadd.f32 0.0, %v2576
    %2578 = vmatmul.f32.gmra.mxu0 %v2474
    %v2579 = vpop.f32.mrf.mxu0
    %v2580 = vadd.f32 0.0, %v2579
    %2581 = vmatmul.f32.gmra.mxu0 %v2476
    %v2582 = vpop.f32.mrf.mxu0
    %v2583 = vadd.f32 0.0, %v2582
    %2584 = vmatmul.f32.gmra.mxu0 %v2478
    %v2585 = vpop.f32.mrf.mxu0
    %v2586 = vadd.f32 0.0, %v2585
    %2587 = vmatmul.f32.gmra.mxu0 %v2480
    %v2588 = vpop.f32.mrf.mxu0
    %v2589 = vadd.f32 0.0, %v2588
    %2590 = vmatmul.f32.gmra.mxu0 %v2482
    %v2591 = vpop.f32.mrf.mxu0
    %v2592 = vadd.f32 0.0, %v2591
    %2593 = vmatmul.f32.gmra.mxu0 %v2484
    %v2594 = vpop.f32.mrf.mxu0
    %v2595 = vadd.f32 0.0, %v2594
    %2596 = vmatmul.f32.gmra.mxu0 %v2486
    %v2597 = vpop.f32.mrf.mxu0
    %v2598 = vadd.f32 0.0, %v2597
    %2599 = vmatmul.f32.gmra.mxu0 %v2488
    %v2600 = vpop.f32.mrf.mxu0
    %v2601 = vadd.f32 0.0, %v2600
    %2602 = vmatmul.f32.gmra.mxu0 %v2490
    %v2603 = vpop.f32.mrf.mxu0
    %v2604 = vadd.f32 0.0, %v2603
    %2605 = vmatmul.f32.gmra.mxu0 %v2492
    %v2606 = vpop.f32.mrf.mxu0
    %v2607 = vadd.f32 0.0, %v2606
    %2608 = vmatmul.f32.gmra.mxu0 %v2494
    %v2609 = vpop.f32.mrf.mxu0
    %v2610 = vadd.f32 0.0, %v2609
    %2611 = vmatmul.f32.gmra.mxu0 %v2496
    %v2612 = vpop.f32.mrf.mxu0
    %v2613 = vadd.f32 0.0, %v2612
    %2614 = vmatmul.f32.gmra.mxu0 %v2498
    %v2615 = vpop.f32.mrf.mxu0
    %v2616 = vadd.f32 0.0, %v2615
    %2617 = vmatmul.f32.gmra.mxu0 %v2500
    %v2618 = vpop.f32.mrf.mxu0
    %v2619 = vadd.f32 0.0, %v2618
    %2620 = vmatmul.f32.gmra.mxu0 %v2502
    %v2621 = vpop.f32.mrf.mxu0
    %v2622 = vadd.f32 0.0, %v2621
    %2623 = vmatmul.f32.gmra.mxu0 %v2504
    %v2624 = vpop.f32.mrf.mxu0
    %v2625 = vadd.f32 0.0, %v2624
    %2626 = vmatmul.f32.gmra.mxu0 %v2506
    %v2627 = vpop.f32.mrf.mxu0
    %v2628 = vadd.f32 0.0, %v2627
    %2629 = vmatmul.f32.gmra.mxu0 %v2508
    %v2630 = vpop.f32.mrf.mxu0
    %v2631 = vadd.f32 0.0, %v2630
    %2632 = vmatmul.f32.gmra.mxu0 %v2510
    %v2633 = vpop.f32.mrf.mxu0
    %v2634 = vadd.f32 0.0, %v2633
    %2635 = vmatmul.f32.gmra.mxu0 %v2512
    %v2636 = vpop.f32.mrf.mxu0
    %v2637 = vadd.f32 0.0, %v2636
    %2638 = vmatmul.f32.gmra.mxu0 %v2514
    %v2639 = vpop.f32.mrf.mxu0
    %v2640 = vadd.f32 0.0, %v2639
    %2641 = vmatmul.f32.gmra.mxu0 %v2516
    %v2642 = vpop.f32.mrf.mxu0
    %v2643 = vadd.f32 0.0, %v2642
    %2644 = vmatmul.f32.gmra.mxu0 %v2518
    %v2645 = vpop.f32.mrf.mxu0
    %v2646 = vadd.f32 0.0, %v2645
    %2647 = vdwg.mxu0
    %v2648 = vadd.f32 %v2216, %v2541
    %v2649 = vadd.f32 %v2219, %v2544
    %v2650 = vadd.f32 %v2222, %v2547
    %v2651 = vadd.f32 %v2225, %v2550
    %v2652 = vadd.f32 %v2228, %v2553
    %v2653 = vadd.f32 %v2231, %v2556
    %v2654 = vadd.f32 %v2234, %v2559
    %v2655 = vadd.f32 %v2237, %v2562
    %v2656 = vadd.f32 %v2240, %v2565
    %v2657 = vadd.f32 %v2243, %v2568
    %v2658 = vadd.f32 %v2246, %v2571
    %v2659 = vadd.f32 %v2249, %v2574
    %v2660 = vadd.f32 %v2252, %v2577
    %v2661 = vadd.f32 %v2255, %v2580
    %v2662 = vadd.f32 %v2258, %v2583
    %v2663 = vadd.f32 %v2261, %v2586
    %v2664 = vadd.f32 %v2264, %v2589
    %v2665 = vadd.f32 %v2267, %v2592
    %v2666 = vadd.f32 %v2270, %v2595
    %v2667 = vadd.f32 %v2273, %v2598
    %v2668 = vadd.f32 %v2276, %v2601
    %v2669 = vadd.f32 %v2279, %v2604
    %v2670 = vadd.f32 %v2282, %v2607
    %v2671 = vadd.f32 %v2285, %v2610
    %v2672 = vadd.f32 %v2288, %v2613
    %v2673 = vadd.f32 %v2291, %v2616
    %v2674 = vadd.f32 %v2294, %v2619
    %v2675 = vadd.f32 %v2297, %v2622
    %v2676 = vadd.f32 %v2300, %v2625
    %v2677 = vadd.f32 %v2303, %v2628
    %v2678 = vadd.f32 %v2306, %v2631
    %v2679 = vadd.f32 %v2309, %v2634
    %v2680 = vadd.f32 %v2312, %v2637
    %v2681 = vadd.f32 %v2315, %v2640
    %v2682 = vadd.f32 %v2318, %v2643
    %v2683 = vadd.f32 %v2321, %v2646
    %v2688 = vrot.slane %v1571, 4
    %v2689 = vrot.slane %v1603, 4
    %s2690 = scalar_lea.vmem %s2, 72
    %v2691 = vld [vmem:[%s2690] sm:$0xff]
    %v2692 = vld [vmem:[%s2690 + $0x8] sm:$0xff]
    %v2693 = vld [vmem:[%s2690 + $0x10] sm:$0xf]
    %2694 = vst [vmem:[#allocation1] ss:$2 sm:$0xff] %v1549
    %s2695 = scalar_lea.vmem [#allocation1], 1
    %2696 = vst [vmem:[%s2695] ss:$2 sm:$0xff] %v1658
    %s2697 = scalar_lea.vmem [#allocation1], 16
    %2698 = vst [vmem:[%s2697] ss:$2 sm:$0xff] %v1550
    %s2699 = scalar_lea.vmem [#allocation1], 17
    %2700 = vst [vmem:[%s2699] ss:$2 sm:$0xff] %v1551
    %s2701 = scalar_lea.vmem [#allocation1], 32
    %2702 = vst [vmem:[%s2701] ss:$2 sm:$0xff] %v1659
    %s2703 = scalar_lea.vmem [#allocation1], 33
    %2704 = vst [vmem:[%s2703] ss:$2 sm:$0xff] %v1552
    %s2705 = scalar_lea.vmem [#allocation1], 48
    %2706 = vst [vmem:[%s2705] ss:$2 sm:$0xff] %v1553
    %s2707 = scalar_lea.vmem [#allocation1], 49
    %2708 = vst [vmem:[%s2707] ss:$2 sm:$0xff] %v1660
    %v2709 = vld.sshfl [vmem:[#allocation1] sm:$0xff pattern:$0x75316420]
    %v2710 = vld.sshfl [vmem:[#allocation1 + $0x10] sm:$0xff pattern:$0x75316420]
    %v2711 = vld.sshfl [vmem:[#allocation1 + $0x20] sm:$0xff pattern:$0x75316420]
    %v2712 = vld.sshfl [vmem:[#allocation1 + $0x30] sm:$0xff pattern:$0x75316420]
    %2713 = vst [vmem:[#allocation1] ss:$2 sm:$0xff] %v1554
    %2714 = vst [vmem:[%s2695] ss:$2 sm:$0xff] %v1555
    %2715 = vst [vmem:[%s2697] ss:$2 sm:$0xff] %v1661
    %2716 = vst [vmem:[%s2699] ss:$2 sm:$0xff] %v1556
    %2717 = vst [vmem:[%s2701] ss:$2 sm:$0xff] %v1557
    %2718 = vst [vmem:[%s2703] ss:$2 sm:$0xff] %v1662
    %2719 = vst [vmem:[%s2705] ss:$2 sm:$0xff] %v1558
    %2720 = vst [vmem:[%s2707] ss:$2 sm:$0xff] %v1559
    %v2721 = vld.sshfl [vmem:[#allocation1] sm:$0xff pattern:$0x75316420]
    %v2722 = vld.sshfl [vmem:[#allocation1 + $0x10] sm:$0xff pattern:$0x75316420]
    %v2723 = vld.sshfl [vmem:[#allocation1 + $0x20] sm:$0xff pattern:$0x75316420]
    %v2724 = vld.sshfl [vmem:[#allocation1 + $0x30] sm:$0xff pattern:$0x75316420]
    %2725 = vst [vmem:[#allocation1] ss:$2 sm:$0xff] %v1663
    %2726 = vst [vmem:[%s2695] ss:$2 sm:$0xff] %v1560
    %2727 = vst [vmem:[%s2697] ss:$2 sm:$0xff] %v1561
    %2728 = vst [vmem:[%s2699] ss:$2 sm:$0xff] %v1664
    %2729 = vst [vmem:[%s2701] ss:$2 sm:$0xff] %v1562
    %2730 = vst [vmem:[%s2703] ss:$2 sm:$0xff] %v1563
    %2731 = vst [vmem:[%s2705] ss:$2 sm:$0xff] %v1665
    %2732 = vst [vmem:[%s2707] ss:$2 sm:$0xff] %v1564
    %v2733 = vld.sshfl [vmem:[#allocation1] sm:$0xff pattern:$0x75316420]
    %v2734 = vld.sshfl [vmem:[#allocation1 + $0x10] sm:$0xff pattern:$0x75316420]
    %v2735 = vld.sshfl [vmem:[#allocation1 + $0x20] sm:$0xff pattern:$0x75316420]
    %v2736 = vld.sshfl [vmem:[#allocation1 + $0x30] sm:$0xff pattern:$0x75316420]
    %2737 = vst [vmem:[#allocation1] ss:$2 sm:$0xff] %v1565
    %2738 = vst [vmem:[%s2695] ss:$2 sm:$0xff] %v1666
    %2739 = vst [vmem:[%s2697] ss:$2 sm:$0xff] %v1566
    %2740 = vst [vmem:[%s2699] ss:$2 sm:$0xff] %v1567
    %2741 = vst [vmem:[%s2701] ss:$2 sm:$0xff] %v1686
    %2742 = vst [vmem:[%s2703] ss:$2 sm:$0xff] %v1568
    %2743 = vst [vmem:[%s2705] ss:$2 sm:$0xff] %v1569
    %2744 = vst [vmem:[%s2707] ss:$2 sm:$0xff] %v2327
    %v2745 = vld.sshfl [vmem:[#allocation1] sm:$0xff pattern:$0x75316420]
    %v2746 = vld.sshfl [vmem:[#allocation1 + $0x10] sm:$0xff pattern:$0x75316420]
    %v2747 = vld.sshfl [vmem:[#allocation1 + $0x20] sm:$0xff pattern:$0x75316420]
    %v2748 = vld.sshfl [vmem:[#allocation1 + $0x30] sm:$0xff pattern:$0x75316420]
    %2749 = vst [vmem:[#allocation1] ss:$2 sm:$0xff] %v1570
    %2750 = vst [vmem:[%s2695] ss:$2 sm:$0xff] %v1571
    %2751 = vst [vmem:[%s2697] ss:$2 sm:$0xff] %v2688
    %2752 = vst [vmem:[%s2699] ss:$2 sm:$0xff] %v1572
    %2753 = vst [vmem:[%s2701] ss:$2 sm:$0xff] %v1581
    %2754 = vst [vmem:[%s2703] ss:$2 sm:$0xff] %v1670
    %2755 = vst [vmem:[%s2705] ss:$2 sm:$0xff] %v1582
    %2756 = vst [vmem:[%s2707] ss:$2 sm:$0xff] %v1583
    %v2757 = vld.sshfl [vmem:[#allocation1] sm:$0xff pattern:$0x75316420]
    %v2758 = vld.sshfl [vmem:[#allocation1 + $0x10] sm:$0xff pattern:$0x75316420]
    %v2759 = vld.sshfl [vmem:[#allocation1 + $0x20] sm:$0xff pattern:$0x75316420]
    %v2760 = vld.sshfl [vmem:[#allocation1 + $0x30] sm:$0xff pattern:$0x75316420]
    %2761 = vst [vmem:[#allocation1] ss:$2 sm:$0xff] %v1671
    %2762 = vst [vmem:[%s2695] ss:$2 sm:$0xff] %v1584
    %2763 = vst [vmem:[%s2697] ss:$2 sm:$0xff] %v1585
    %2764 = vst [vmem:[%s2699] ss:$2 sm:$0xff] %v1672
    %2765 = vst [vmem:[%s2701] ss:$2 sm:$0xff] %v1586
    %2766 = vst [vmem:[%s2703] ss:$2 sm:$0xff] %v1587
    %2767 = vst [vmem:[%s2705] ss:$2 sm:$0xff] %v1673
    %2768 = vst [vmem:[%s2707] ss:$2 sm:$0xff] %v1588
    %v2769 = vld.sshfl [vmem:[#allocation1] sm:$0xff pattern:$0x75316420]
    %v2770 = vld.sshfl [vmem:[#allocation1 + $0x10] sm:$0xff pattern:$0x75316420]
    %v2771 = vld.sshfl [vmem:[#allocation1 + $0x20] sm:$0xff pattern:$0x75316420]
    %v2772 = vld.sshfl [vmem:[#allocation1 + $0x30] sm:$0xff pattern:$0x75316420]
    %2773 = vst [vmem:[#allocation1] ss:$2 sm:$0xff] %v1589
    %2774 = vst [vmem:[%s2695] ss:$2 sm:$0xff] %v1674
    %2775 = vst [vmem:[%s2697] ss:$2 sm:$0xff] %v1590
    %2776 = vst [vmem:[%s2699] ss:$2 sm:$0xff] %v1591
    %2777 = vst [vmem:[%s2701] ss:$2 sm:$0xff] %v1675
    %2778 = vst [vmem:[%s2703] ss:$2 sm:$0xff] %v1592
    %2779 = vst [vmem:[%s2705] ss:$2 sm:$0xff] %v1593
    %2780 = vst [vmem:[%s2707] ss:$2 sm:$0xff] %v1676
    %v2781 = vld.sshfl [vmem:[#allocation1] sm:$0xff pattern:$0x75316420]
    %v2782 = vld.sshfl [vmem:[#allocation1 + $0x10] sm:$0xff pattern:$0x75316420]
    %v2783 = vld.sshfl [vmem:[#allocation1 + $0x20] sm:$0xff pattern:$0x75316420]
    %v2784 = vld.sshfl [vmem:[#allocation1 + $0x30] sm:$0xff pattern:$0x75316420]
    %2785 = vst [vmem:[#allocation1] ss:$2 sm:$0xff] %v1594
    %2786 = vst [vmem:[%s2695] ss:$2 sm:$0xff] %v1595
    %2787 = vst [vmem:[%s2697] ss:$2 sm:$0xff] %v1677
    %2788 = vst [vmem:[%s2699] ss:$2 sm:$0xff] %v1596
    %2789 = vst [vmem:[%s2701] ss:$2 sm:$0xff] %v1597
    %2790 = vst [vmem:[%s2703] ss:$2 sm:$0xff] %v1678
    %2791 = vst [vmem:[%s2705] ss:$2 sm:$0xff] %v1598
    %2792 = vst [vmem:[%s2707] ss:$2 sm:$0xff] %v1599
    %v2793 = vld.sshfl [vmem:[#allocation1] sm:$0xff pattern:$0x75316420]
    %v2794 = vld.sshfl [vmem:[#allocation1 + $0x10] sm:$0xff pattern:$0x75316420]
    %v2795 = vld.sshfl [vmem:[#allocation1 + $0x20] sm:$0xff pattern:$0x75316420]
    %v2796 = vld.sshfl [vmem:[#allocation1 + $0x30] sm:$0xff pattern:$0x75316420]
    %2797 = vst [vmem:[#allocation1] ss:$2 sm:$0xff] %v1687
    %2798 = vst [vmem:[%s2695] ss:$2 sm:$0xff] %v1600
    %2799 = vst [vmem:[%s2697] ss:$2 sm:$0xff] %v1601
    %2800 = vst [vmem:[%s2699] ss:$2 sm:$0xff] %v2328
    %2801 = vst [vmem:[%s2701] ss:$2 sm:$0xff] %v1602
    %2802 = vst [vmem:[%s2703] ss:$2 sm:$0xff] %v1603
    %2803 = vst [vmem:[%s2705] ss:$2 sm:$0xff] %v2689
    %2804 = vst [vmem:[%s2707] ss:$2 sm:$0xff] %v1604
    %v2805 = vld.sshfl [vmem:[#allocation1] sm:$0xff pattern:$0x75316420]
    %v2806 = vld.sshfl [vmem:[#allocation1 + $0x10] sm:$0xff pattern:$0x75316420]
    %v2807 = vld.sshfl [vmem:[#allocation1 + $0x20] sm:$0xff pattern:$0x75316420]
    %v2808 = vld.sshfl [vmem:[#allocation1 + $0x30] sm:$0xff pattern:$0x75316420]
    %v2809 = vsel %vm1807, %v2709, 0
    %v2811 = vsel %vm1807, %v2710, 0
    %v2813 = vsel %vm1807, %v2711, 0
    %v2815 = vsel %vm1807, %v2712, 0
    %v2817 = vsel %vm1807, %v2721, 0
    %v2819 = vsel %vm1807, %v2722, 0
    %v2821 = vsel %vm1807, %v2723, 0
    %v2823 = vsel %vm1807, %v2724, 0
    %v2825 = vsel %vm1807, %v2733, 0
    %v2827 = vsel %vm1807, %v2734, 0
    %v2829 = vsel %vm1807, %v2735, 0
    %v2831 = vsel %vm1807, %v2736, 0
    %v2833 = vsel %vm1807, %v2745, 0
    %v2835 = vsel %vm1807, %v2746, 0
    %v2837 = vsel %vm1807, %v2747, 0
    %v2839 = vsel %vm1807, %v2748, 0
    %v2841 = vsel %vm1807, %v2757, 0
    %v2843 = vsel %vm1807, %v2758, 0
    %v2845 = vsel %vm1807, %v2759, 0
    %v2847 = vsel %vm1807, %v2760, 0
    %v2849 = vsel %vm1807, %v2769, 0
    %v2851 = vsel %vm1807, %v2770, 0
    %v2853 = vsel %vm1807, %v2771, 0
    %v2855 = vsel %vm1807, %v2772, 0
    %v2857 = vsel %vm1807, %v2781, 0
    %v2859 = vsel %vm1807, %v2782, 0
    %v2861 = vsel %vm1807, %v2783, 0
    %v2863 = vsel %vm1807, %v2784, 0
    %v2865 = vsel %vm1807, %v2793, 0
    %v2867 = vsel %vm1807, %v2794, 0
    %v2869 = vsel %vm1807, %v2795, 0
    %v2871 = vsel %vm1807, %v2796, 0
    %v2873 = vsel %vm1807, %v2805, 0
    %v2875 = vsel %vm1807, %v2806, 0
    %v2877 = vsel %vm1807, %v2807, 0
    %v2879 = vsel %vm1807, %v2808, 0
    %v2882 = vsel %vm1058, %v2693, 0
    %2884 = vmatpush.msra.mxu0 0.0
    %2885 = vmatpush.msra.mxu0 0.0
    %2886 = vmatpush.msra.mxu0 0.0
    %2887 = vmatpush.msra.mxu0 0.0
    %2888 = vmatpush.msra.mxu0 0.0
    %2889 = vmatpush.msra.mxu0 0.0
    %2890 = vmatpush.msra.mxu0 0.0
    %2891 = vmatpush.msra.mxu0 0.0
    %2892 = vmatpush.msra.mxu0 0.0
    %2893 = vmatpush.msra.mxu0 0.0
    %2894 = vmatpush.msra.mxu0 0.0
    %2895 = vmatpush.msra.mxu0 0.0
    %2896 = vmatpush.msra.mxu0 0.0
    %2897 = vmatpush.msra.mxu0 %v2882
    %2898 = vmatpush.msra.mxu0 %v2692
    %2899 = vmatpush.msra.mxu0 %v2691
    %2900 = vmatmul.f32.gmra.mxu0 %v2809
    %v2901 = vpop.f32.mrf.mxu0
    %v2902 = vadd.f32 0.0, %v2901
    %2903 = vmatmul.f32.gmra.mxu0 %v2811
    %v2904 = vpop.f32.mrf.mxu0
    %v2905 = vadd.f32 0.0, %v2904
    %2906 = vmatmul.f32.gmra.mxu0 %v2813
    %v2907 = vpop.f32.mrf.mxu0
    %v2908 = vadd.f32 0.0, %v2907
    %2909 = vmatmul.f32.gmra.mxu0 %v2815
    %v2910 = vpop.f32.mrf.mxu0
    %v2911 = vadd.f32 0.0, %v2910
    %2912 = vmatmul.f32.gmra.mxu0 %v2817
    %v2913 = vpop.f32.mrf.mxu0
    %v2914 = vadd.f32 0.0, %v2913
    %2915 = vmatmul.f32.gmra.mxu0 %v2819
    %v2916 = vpop.f32.mrf.mxu0
    %v2917 = vadd.f32 0.0, %v2916
    %2918 = vmatmul.f32.gmra.mxu0 %v2821
    %v2919 = vpop.f32.mrf.mxu0
    %v2920 = vadd.f32 0.0, %v2919
    %2921 = vmatmul.f32.gmra.mxu0 %v2823
    %v2922 = vpop.f32.mrf.mxu0
    %v2923 = vadd.f32 0.0, %v2922
    %2924 = vmatmul.f32.gmra.mxu0 %v2825
    %v2925 = vpop.f32.mrf.mxu0
    %v2926 = vadd.f32 0.0, %v2925
    %2927 = vmatmul.f32.gmra.mxu0 %v2827
    %v2928 = vpop.f32.mrf.mxu0
    %v2929 = vadd.f32 0.0, %v2928
    %2930 = vmatmul.f32.gmra.mxu0 %v2829
    %v2931 = vpop.f32.mrf.mxu0
    %v2932 = vadd.f32 0.0, %v2931
    %2933 = vmatmul.f32.gmra.mxu0 %v2831
    %v2934 = vpop.f32.mrf.mxu0
    %v2935 = vadd.f32 0.0, %v2934
    %2936 = vmatmul.f32.gmra.mxu0 %v2833
    %v2937 = vpop.f32.mrf.mxu0
    %v2938 = vadd.f32 0.0, %v2937
    %2939 = vmatmul.f32.gmra.mxu0 %v2835
    %v2940 = vpop.f32.mrf.mxu0
    %v2941 = vadd.f32 0.0, %v2940
    %2942 = vmatmul.f32.gmra.mxu0 %v2837
    %v2943 = vpop.f32.mrf.mxu0
    %v2944 = vadd.f32 0.0, %v2943
    %2945 = vmatmul.f32.gmra.mxu0 %v2839
    %v2946 = vpop.f32.mrf.mxu0
    %v2947 = vadd.f32 0.0, %v2946
    %2948 = vmatmul.f32.gmra.mxu0 %v2841
    %v2949 = vpop.f32.mrf.mxu0
    %v2950 = vadd.f32 0.0, %v2949
    %2951 = vmatmul.f32.gmra.mxu0 %v2843
    %v2952 = vpop.f32.mrf.mxu0
    %v2953 = vadd.f32 0.0, %v2952
    %2954 = vmatmul.f32.gmra.mxu0 %v2845
    %v2955 = vpop.f32.mrf.mxu0
    %v2956 = vadd.f32 0.0, %v2955
    %2957 = vmatmul.f32.gmra.mxu0 %v2847
    %v2958 = vpop.f32.mrf.mxu0
    %v2959 = vadd.f32 0.0, %v2958
    %2960 = vmatmul.f32.gmra.mxu0 %v2849
    %v2961 = vpop.f32.mrf.mxu0
    %v2962 = vadd.f32 0.0, %v2961
    %2963 = vmatmul.f32.gmra.mxu0 %v2851
    %v2964 = vpop.f32.mrf.mxu0
    %v2965 = vadd.f32 0.0, %v2964
    %2966 = vmatmul.f32.gmra.mxu0 %v2853
    %v2967 = vpop.f32.mrf.mxu0
    %v2968 = vadd.f32 0.0, %v2967
    %2969 = vmatmul.f32.gmra.mxu0 %v2855
    %v2970 = vpop.f32.mrf.mxu0
    %v2971 = vadd.f32 0.0, %v2970
    %2972 = vmatmul.f32.gmra.mxu0 %v2857
    %v2973 = vpop.f32.mrf.mxu0
    %v2974 = vadd.f32 0.0, %v2973
    %2975 = vmatmul.f32.gmra.mxu0 %v2859
    %v2976 = vpop.f32.mrf.mxu0
    %v2977 = vadd.f32 0.0, %v2976
    %2978 = vmatmul.f32.gmra.mxu0 %v2861
    %v2979 = vpop.f32.mrf.mxu0
    %v2980 = vadd.f32 0.0, %v2979
    %2981 = vmatmul.f32.gmra.mxu0 %v2863
    %v2982 = vpop.f32.mrf.mxu0
    %v2983 = vadd.f32 0.0, %v2982
    %2984 = vmatmul.f32.gmra.mxu0 %v2865
    %v2985 = vpop.f32.mrf.mxu0
    %v2986 = vadd.f32 0.0, %v2985
    %2987 = vmatmul.f32.gmra.mxu0 %v2867
    %v2988 = vpop.f32.mrf.mxu0
    %v2989 = vadd.f32 0.0, %v2988
    %2990 = vmatmul.f32.gmra.mxu0 %v2869
    %v2991 = vpop.f32.mrf.mxu0
    %v2992 = vadd.f32 0.0, %v2991
    %2993 = vmatmul.f32.gmra.mxu0 %v2871
    %v2994 = vpop.f32.mrf.mxu0
    %v2995 = vadd.f32 0.0, %v2994
    %2996 = vmatmul.f32.gmra.mxu0 %v2873
    %v2997 = vpop.f32.mrf.mxu0
    %v2998 = vadd.f32 0.0, %v2997
    %2999 = vmatmul.f32.gmra.mxu0 %v2875
    %v3000 = vpop.f32.mrf.mxu0
    %v3001 = vadd.f32 0.0, %v3000
    %3002 = vmatmul.f32.gmra.mxu0 %v2877
    %v3003 = vpop.f32.mrf.mxu0
    %v3004 = vadd.f32 0.0, %v3003
    %3005 = vmatmul.f32.gmra.mxu0 %v2879
    %v3006 = vpop.f32.mrf.mxu0
    %v3007 = vadd.f32 0.0, %v3006
    %3008 = vdwg.mxu0
    %v3009 = vadd.f32 %v2648, %v2902
    %v3010 = vadd.f32 %v2649, %v2905
    %v3011 = vadd.f32 %v2650, %v2908
    %v3012 = vadd.f32 %v2651, %v2911
    %v3013 = vadd.f32 %v2652, %v2914
    %v3014 = vadd.f32 %v2653, %v2917
    %v3015 = vadd.f32 %v2654, %v2920
    %v3016 = vadd.f32 %v2655, %v2923
    %v3017 = vadd.f32 %v2656, %v2926
    %v3018 = vadd.f32 %v2657, %v2929
    %v3019 = vadd.f32 %v2658, %v2932
    %v3020 = vadd.f32 %v2659, %v2935
    %v3021 = vadd.f32 %v2660, %v2938
    %v3022 = vadd.f32 %v2661, %v2941
    %v3023 = vadd.f32 %v2662, %v2944
    %v3024 = vadd.f32 %v2663, %v2947
    %v3025 = vadd.f32 %v2664, %v2950
    %v3026 = vadd.f32 %v2665, %v2953
    %v3027 = vadd.f32 %v2666, %v2956
    %v3028 = vadd.f32 %v2667, %v2959
    %v3029 = vadd.f32 %v2668, %v2962
    %v3030 = vadd.f32 %v2669, %v2965
    %v3031 = vadd.f32 %v2670, %v2968
    %v3032 = vadd.f32 %v2671, %v2971
    %v3033 = vadd.f32 %v2672, %v2974
    %v3034 = vadd.f32 %v2673, %v2977
    %v3035 = vadd.f32 %v2674, %v2980
    %v3036 = vadd.f32 %v2675, %v2983
    %v3037 = vadd.f32 %v2676, %v2986
    %v3038 = vadd.f32 %v2677, %v2989
    %v3039 = vadd.f32 %v2678, %v2992
    %v3040 = vadd.f32 %v2679, %v2995
    %v3041 = vadd.f32 %v2680, %v2998
    %v3042 = vadd.f32 %v2681, %v3001
    %v3043 = vadd.f32 %v2682, %v3004
    %v3044 = vadd.f32 %v2683, %v3007
    %v3049 = vrot.slane %v1573, 4
    %v3050 = vrot.slane %v1605, 4
    %s3051 = scalar_lea.vmem %s2, 96
    %v3052 = vld [vmem:[%s3051] sm:$0xff]
    %v3053 = vld [vmem:[%s3051 + $0x8] sm:$0xff]
    %v3054 = vld [vmem:[%s3051 + $0x10] sm:$0xf]
    %3055 = vst [vmem:[#allocation1] ss:$2 sm:$0xff] %v1551
    %s3056 = scalar_lea.vmem [#allocation1], 1
    %3057 = vst [vmem:[%s3056] ss:$2 sm:$0xff] %v1659
    %s3058 = scalar_lea.vmem [#allocation1], 16
    %3059 = vst [vmem:[%s3058] ss:$2 sm:$0xff] %v1552
    %s3060 = scalar_lea.vmem [#allocation1], 17
    %3061 = vst [vmem:[%s3060] ss:$2 sm:$0xff] %v1553
    %s3062 = scalar_lea.vmem [#allocation1], 32
    %3063 = vst [vmem:[%s3062] ss:$2 sm:$0xff] %v1660
    %s3064 = scalar_lea.vmem [#allocation1], 33
    %3065 = vst [vmem:[%s3064] ss:$2 sm:$0xff] %v1554
    %s3066 = scalar_lea.vmem [#allocation1], 48
    %3067 = vst [vmem:[%s3066] ss:$2 sm:$0xff] %v1555
    %s3068 = scalar_lea.vmem [#allocation1], 49
    %3069 = vst [vmem:[%s3068] ss:$2 sm:$0xff] %v1661
    %v3070 = vld.sshfl [vmem:[#allocation1] sm:$0xff pattern:$0x75316420]
    %v3071 = vld.sshfl [vmem:[#allocation1 + $0x10] sm:$0xff pattern:$0x75316420]
    %v3072 = vld.sshfl [vmem:[#allocation1 + $0x20] sm:$0xff pattern:$0x75316420]
    %v3073 = vld.sshfl [vmem:[#allocation1 + $0x30] sm:$0xff pattern:$0x75316420]
    %3074 = vst [vmem:[#allocation1] ss:$2 sm:$0xff] %v1556
    %3075 = vst [vmem:[%s3056] ss:$2 sm:$0xff] %v1557
    %3076 = vst [vmem:[%s3058] ss:$2 sm:$0xff] %v1662
    %3077 = vst [vmem:[%s3060] ss:$2 sm:$0xff] %v1558
    %3078 = vst [vmem:[%s3062] ss:$2 sm:$0xff] %v1559
    %3079 = vst [vmem:[%s3064] ss:$2 sm:$0xff] %v1663
    %3080 = vst [vmem:[%s3066] ss:$2 sm:$0xff] %v1560
    %3081 = vst [vmem:[%s3068] ss:$2 sm:$0xff] %v1561
    %v3082 = vld.sshfl [vmem:[#allocation1] sm:$0xff pattern:$0x75316420]
    %v3083 = vld.sshfl [vmem:[#allocation1 + $0x10] sm:$0xff pattern:$0x75316420]
    %v3084 = vld.sshfl [vmem:[#allocation1 + $0x20] sm:$0xff pattern:$0x75316420]
    %v3085 = vld.sshfl [vmem:[#allocation1 + $0x30] sm:$0xff pattern:$0x75316420]
    %3086 = vst [vmem:[#allocation1] ss:$2 sm:$0xff] %v1664
    %3087 = vst [vmem:[%s3056] ss:$2 sm:$0xff] %v1562
    %3088 = vst [vmem:[%s3058] ss:$2 sm:$0xff] %v1563
    %3089 = vst [vmem:[%s3060] ss:$2 sm:$0xff] %v1665
    %3090 = vst [vmem:[%s3062] ss:$2 sm:$0xff] %v1564
    %3091 = vst [vmem:[%s3064] ss:$2 sm:$0xff] %v1565
    %3092 = vst [vmem:[%s3066] ss:$2 sm:$0xff] %v1666
    %3093 = vst [vmem:[%s3068] ss:$2 sm:$0xff] %v1566
    %v3094 = vld.sshfl [vmem:[#allocation1] sm:$0xff pattern:$0x75316420]
    %v3095 = vld.sshfl [vmem:[#allocation1 + $0x10] sm:$0xff pattern:$0x75316420]
    %v3096 = vld.sshfl [vmem:[#allocation1 + $0x20] sm:$0xff pattern:$0x75316420]
    %v3097 = vld.sshfl [vmem:[#allocation1 + $0x30] sm:$0xff pattern:$0x75316420]
    %3098 = vst [vmem:[#allocation1] ss:$2 sm:$0xff] %v1567
    %3099 = vst [vmem:[%s3056] ss:$2 sm:$0xff] %v1686
    %3100 = vst [vmem:[%s3058] ss:$2 sm:$0xff] %v1568
    %3101 = vst [vmem:[%s3060] ss:$2 sm:$0xff] %v1569
    %3102 = vst [vmem:[%s3062] ss:$2 sm:$0xff] %v2327
    %3103 = vst [vmem:[%s3064] ss:$2 sm:$0xff] %v1570
    %3104 = vst [vmem:[%s3066] ss:$2 sm:$0xff] %v1571
    %3105 = vst [vmem:[%s3068] ss:$2 sm:$0xff] %v2688
    %v3106 = vld.sshfl [vmem:[#allocation1] sm:$0xff pattern:$0x75316420]
    %v3107 = vld.sshfl [vmem:[#allocation1 + $0x10] sm:$0xff pattern:$0x75316420]
    %v3108 = vld.sshfl [vmem:[#allocation1 + $0x20] sm:$0xff pattern:$0x75316420]
    %v3109 = vld.sshfl [vmem:[#allocation1 + $0x30] sm:$0xff pattern:$0x75316420]
    %3110 = vst [vmem:[#allocation1] ss:$2 sm:$0xff] %v1572
    %3111 = vst [vmem:[%s3056] ss:$2 sm:$0xff] %v1573
    %3112 = vst [vmem:[%s3058] ss:$2 sm:$0xff] %v3049
    %3113 = vst [vmem:[%s3060] ss:$2 sm:$0xff] %v1574
    %3114 = vst [vmem:[%s3062] ss:$2 sm:$0xff] %v1583
    %3115 = vst [vmem:[%s3064] ss:$2 sm:$0xff] %v1671
    %3116 = vst [vmem:[%s3066] ss:$2 sm:$0xff] %v1584
    %3117 = vst [vmem:[%s3068] ss:$2 sm:$0xff] %v1585
    %v3118 = vld.sshfl [vmem:[#allocation1] sm:$0xff pattern:$0x75316420]
    %v3119 = vld.sshfl [vmem:[#allocation1 + $0x10] sm:$0xff pattern:$0x75316420]
    %v3120 = vld.sshfl [vmem:[#allocation1 + $0x20] sm:$0xff pattern:$0x75316420]
    %v3121 = vld.sshfl [vmem:[#allocation1 + $0x30] sm:$0xff pattern:$0x75316420]
    %3122 = vst [vmem:[#allocation1] ss:$2 sm:$0xff] %v1672
    %3123 = vst [vmem:[%s3056] ss:$2 sm:$0xff] %v1586
    %3124 = vst [vmem:[%s3058] ss:$2 sm:$0xff] %v1587
    %3125 = vst [vmem:[%s3060] ss:$2 sm:$0xff] %v1673
    %3126 = vst [vmem:[%s3062] ss:$2 sm:$0xff] %v1588
    %3127 = vst [vmem:[%s3064] ss:$2 sm:$0xff] %v1589
    %3128 = vst [vmem:[%s3066] ss:$2 sm:$0xff] %v1674
    %3129 = vst [vmem:[%s3068] ss:$2 sm:$0xff] %v1590
    %v3130 = vld.sshfl [vmem:[#allocation1] sm:$0xff pattern:$0x75316420]
    %v3131 = vld.sshfl [vmem:[#allocation1 + $0x10] sm:$0xff pattern:$0x75316420]
    %v3132 = vld.sshfl [vmem:[#allocation1 + $0x20] sm:$0xff pattern:$0x75316420]
    %v3133 = vld.sshfl [vmem:[#allocation1 + $0x30] sm:$0xff pattern:$0x75316420]
    %3134 = vst [vmem:[#allocation1] ss:$2 sm:$0xff] %v1591
    %3135 = vst [vmem:[%s3056] ss:$2 sm:$0xff] %v1675
    %3136 = vst [vmem:[%s3058] ss:$2 sm:$0xff] %v1592
    %3137 = vst [vmem:[%s3060] ss:$2 sm:$0xff] %v1593
    %3138 = vst [vmem:[%s3062] ss:$2 sm:$0xff] %v1676
    %3139 = vst [vmem:[%s3064] ss:$2 sm:$0xff] %v1594
    %3140 = vst [vmem:[%s3066] ss:$2 sm:$0xff] %v1595
    %3141 = vst [vmem:[%s3068] ss:$2 sm:$0xff] %v1677
    %v3142 = vld.sshfl [vmem:[#allocation1] sm:$0xff pattern:$0x75316420]
    %v3143 = vld.sshfl [vmem:[#allocation1 + $0x10] sm:$0xff pattern:$0x75316420]
    %v3144 = vld.sshfl [vmem:[#allocation1 + $0x20] sm:$0xff pattern:$0x75316420]
    %v3145 = vld.sshfl [vmem:[#allocation1 + $0x30] sm:$0xff pattern:$0x75316420]
    %3146 = vst [vmem:[#allocation1] ss:$2 sm:$0xff] %v1596
    %3147 = vst [vmem:[%s3056] ss:$2 sm:$0xff] %v1597
    %3148 = vst [vmem:[%s3058] ss:$2 sm:$0xff] %v1678
    %3149 = vst [vmem:[%s3060] ss:$2 sm:$0xff] %v1598
    %3150 = vst [vmem:[%s3062] ss:$2 sm:$0xff] %v1599
    %3151 = vst [vmem:[%s3064] ss:$2 sm:$0xff] %v1687
    %3152 = vst [vmem:[%s3066] ss:$2 sm:$0xff] %v1600
    %3153 = vst [vmem:[%s3068] ss:$2 sm:$0xff] %v1601
    %v3154 = vld.sshfl [vmem:[#allocation1] sm:$0xff pattern:$0x75316420]
    %v3155 = vld.sshfl [vmem:[#allocation1 + $0x10] sm:$0xff pattern:$0x75316420]
    %v3156 = vld.sshfl [vmem:[#allocation1 + $0x20] sm:$0xff pattern:$0x75316420]
    %v3157 = vld.sshfl [vmem:[#allocation1 + $0x30] sm:$0xff pattern:$0x75316420]
    %3158 = vst [vmem:[#allocation1] ss:$2 sm:$0xff] %v2328
    %3159 = vst [vmem:[%s3056] ss:$2 sm:$0xff] %v1602
    %3160 = vst [vmem:[%s3058] ss:$2 sm:$0xff] %v1603
    %3161 = vst [vmem:[%s3060] ss:$2 sm:$0xff] %v2689
    %3162 = vst [vmem:[%s3062] ss:$2 sm:$0xff] %v1604
    %3163 = vst [vmem:[%s3064] ss:$2 sm:$0xff] %v1605
    %3164 = vst [vmem:[%s3066] ss:$2 sm:$0xff] %v3050
    %3165 = vst [vmem:[%s3068] ss:$2 sm:$0xff] %v1606
    %v3166 = vld.sshfl [vmem:[#allocation1] sm:$0xff pattern:$0x75316420]
    %v3167 = vld.sshfl [vmem:[#allocation1 + $0x10] sm:$0xff pattern:$0x75316420]
    %v3168 = vld.sshfl [vmem:[#allocation1 + $0x20] sm:$0xff pattern:$0x75316420]
    %v3169 = vld.sshfl [vmem:[#allocation1 + $0x30] sm:$0xff pattern:$0x75316420]
    %v3170 = vsel %vm1807, %v3070, 0
    %v3172 = vsel %vm1807, %v3071, 0
    %v3174 = vsel %vm1807, %v3072, 0
    %v3176 = vsel %vm1807, %v3073, 0
    %v3178 = vsel %vm1807, %v3082, 0
    %v3180 = vsel %vm1807, %v3083, 0
    %v3182 = vsel %vm1807, %v3084, 0
    %v3184 = vsel %vm1807, %v3085, 0
    %v3186 = vsel %vm1807, %v3094, 0
    %v3188 = vsel %vm1807, %v3095, 0
    %v3190 = vsel %vm1807, %v3096, 0
    %v3192 = vsel %vm1807, %v3097, 0
    %v3194 = vsel %vm1807, %v3106, 0
    %v3196 = vsel %vm1807, %v3107, 0
    %v3198 = vsel %vm1807, %v3108, 0
    %v3200 = vsel %vm1807, %v3109, 0
    %v3202 = vsel %vm1807, %v3118, 0
    %v3204 = vsel %vm1807, %v3119, 0
    %v3206 = vsel %vm1807, %v3120, 0
    %v3208 = vsel %vm1807, %v3121, 0
    %v3210 = vsel %vm1807, %v3130, 0
    %v3212 = vsel %vm1807, %v3131, 0
    %v3214 = vsel %vm1807, %v3132, 0
    %v3216 = vsel %vm1807, %v3133, 0
    %v3218 = vsel %vm1807, %v3142, 0
    %v3220 = vsel %vm1807, %v3143, 0
    %v3222 = vsel %vm1807, %v3144, 0
    %v3224 = vsel %vm1807, %v3145, 0
    %v3226 = vsel %vm1807, %v3154, 0
    %v3228 = vsel %vm1807, %v3155, 0
    %v3230 = vsel %vm1807, %v3156, 0
    %v3232 = vsel %vm1807, %v3157, 0
    %v3234 = vsel %vm1807, %v3166, 0
    %v3236 = vsel %vm1807, %v3167, 0
    %v3238 = vsel %vm1807, %v3168, 0
    %v3240 = vsel %vm1807, %v3169, 0
    %v3243 = vsel %vm1058, %v3054, 0
    %3245 = vmatpush.msra.mxu0 0.0
    %3246 = vmatpush.msra.mxu0 0.0
    %3247 = vmatpush.msra.mxu0 0.0
    %3248 = vmatpush.msra.mxu0 0.0
    %3249 = vmatpush.msra.mxu0 0.0
    %3250 = vmatpush.msra.mxu0 0.0
    %3251 = vmatpush.msra.mxu0 0.0
    %3252 = vmatpush.msra.mxu0 0.0
    %3253 = vmatpush.msra.mxu0 0.0
    %3254 = vmatpush.msra.mxu0 0.0
    %3255 = vmatpush.msra.mxu0 0.0
    %3256 = vmatpush.msra.mxu0 0.0
    %3257 = vmatpush.msra.mxu0 0.0
    %3258 = vmatpush.msra.mxu0 %v3243
    %3259 = vmatpush.msra.mxu0 %v3053
    %3260 = vmatpush.msra.mxu0 %v3052
    %3261 = vmatmul.f32.gmra.mxu0 %v3170
    %v3262 = vpop.f32.mrf.mxu0
    %v3263 = vadd.f32 0.0, %v3262
    %3264 = vmatmul.f32.gmra.mxu0 %v3172
    %v3265 = vpop.f32.mrf.mxu0
    %v3266 = vadd.f32 0.0, %v3265
    %3267 = vmatmul.f32.gmra.mxu0 %v3174
    %v3268 = vpop.f32.mrf.mxu0
    %v3269 = vadd.f32 0.0, %v3268
    %3270 = vmatmul.f32.gmra.mxu0 %v3176
    %v3271 = vpop.f32.mrf.mxu0
    %v3272 = vadd.f32 0.0, %v3271
    %3273 = vmatmul.f32.gmra.mxu0 %v3178
    %v3274 = vpop.f32.mrf.mxu0
    %v3275 = vadd.f32 0.0, %v3274
    %3276 = vmatmul.f32.gmra.mxu0 %v3180
    %v3277 = vpop.f32.mrf.mxu0
    %v3278 = vadd.f32 0.0, %v3277
    %3279 = vmatmul.f32.gmra.mxu0 %v3182
    %v3280 = vpop.f32.mrf.mxu0
    %v3281 = vadd.f32 0.0, %v3280
    %3282 = vmatmul.f32.gmra.mxu0 %v3184
    %v3283 = vpop.f32.mrf.mxu0
    %v3284 = vadd.f32 0.0, %v3283
    %3285 = vmatmul.f32.gmra.mxu0 %v3186
    %v3286 = vpop.f32.mrf.mxu0
    %v3287 = vadd.f32 0.0, %v3286
    %3288 = vmatmul.f32.gmra.mxu0 %v3188
    %v3289 = vpop.f32.mrf.mxu0
    %v3290 = vadd.f32 0.0, %v3289
    %3291 = vmatmul.f32.gmra.mxu0 %v3190
    %v3292 = vpop.f32.mrf.mxu0
    %v3293 = vadd.f32 0.0, %v3292
    %3294 = vmatmul.f32.gmra.mxu0 %v3192
    %v3295 = vpop.f32.mrf.mxu0
    %v3296 = vadd.f32 0.0, %v3295
    %3297 = vmatmul.f32.gmra.mxu0 %v3194
    %v3298 = vpop.f32.mrf.mxu0
    %v3299 = vadd.f32 0.0, %v3298
    %3300 = vmatmul.f32.gmra.mxu0 %v3196
    %v3301 = vpop.f32.mrf.mxu0
    %v3302 = vadd.f32 0.0, %v3301
    %3303 = vmatmul.f32.gmra.mxu0 %v3198
    %v3304 = vpop.f32.mrf.mxu0
    %v3305 = vadd.f32 0.0, %v3304
    %3306 = vmatmul.f32.gmra.mxu0 %v3200
    %v3307 = vpop.f32.mrf.mxu0
    %v3308 = vadd.f32 0.0, %v3307
    %3309 = vmatmul.f32.gmra.mxu0 %v3202
    %v3310 = vpop.f32.mrf.mxu0
    %v3311 = vadd.f32 0.0, %v3310
    %3312 = vmatmul.f32.gmra.mxu0 %v3204
    %v3313 = vpop.f32.mrf.mxu0
    %v3314 = vadd.f32 0.0, %v3313
    %3315 = vmatmul.f32.gmra.mxu0 %v3206
    %v3316 = vpop.f32.mrf.mxu0
    %v3317 = vadd.f32 0.0, %v3316
    %3318 = vmatmul.f32.gmra.mxu0 %v3208
    %v3319 = vpop.f32.mrf.mxu0
    %v3320 = vadd.f32 0.0, %v3319
    %3321 = vmatmul.f32.gmra.mxu0 %v3210
    %v3322 = vpop.f32.mrf.mxu0
    %v3323 = vadd.f32 0.0, %v3322
    %3324 = vmatmul.f32.gmra.mxu0 %v3212
    %v3325 = vpop.f32.mrf.mxu0
    %v3326 = vadd.f32 0.0, %v3325
    %3327 = vmatmul.f32.gmra.mxu0 %v3214
    %v3328 = vpop.f32.mrf.mxu0
    %v3329 = vadd.f32 0.0, %v3328
    %3330 = vmatmul.f32.gmra.mxu0 %v3216
    %v3331 = vpop.f32.mrf.mxu0
    %v3332 = vadd.f32 0.0, %v3331
    %3333 = vmatmul.f32.gmra.mxu0 %v3218
    %v3334 = vpop.f32.mrf.mxu0
    %v3335 = vadd.f32 0.0, %v3334
    %3336 = vmatmul.f32.gmra.mxu0 %v3220
    %v3337 = vpop.f32.mrf.mxu0
    %v3338 = vadd.f32 0.0, %v3337
    %3339 = vmatmul.f32.gmra.mxu0 %v3222
    %v3340 = vpop.f32.mrf.mxu0
    %v3341 = vadd.f32 0.0, %v3340
    %3342 = vmatmul.f32.gmra.mxu0 %v3224
    %v3343 = vpop.f32.mrf.mxu0
    %v3344 = vadd.f32 0.0, %v3343
    %3345 = vmatmul.f32.gmra.mxu0 %v3226
    %v3346 = vpop.f32.mrf.mxu0
    %v3347 = vadd.f32 0.0, %v3346
    %3348 = vmatmul.f32.gmra.mxu0 %v3228
    %v3349 = vpop.f32.mrf.mxu0
    %v3350 = vadd.f32 0.0, %v3349
    %3351 = vmatmul.f32.gmra.mxu0 %v3230
    %v3352 = vpop.f32.mrf.mxu0
    %v3353 = vadd.f32 0.0, %v3352
    %3354 = vmatmul.f32.gmra.mxu0 %v3232
    %v3355 = vpop.f32.mrf.mxu0
    %v3356 = vadd.f32 0.0, %v3355
    %3357 = vmatmul.f32.gmra.mxu0 %v3234
    %v3358 = vpop.f32.mrf.mxu0
    %v3359 = vadd.f32 0.0, %v3358
    %3360 = vmatmul.f32.gmra.mxu0 %v3236
    %v3361 = vpop.f32.mrf.mxu0
    %v3362 = vadd.f32 0.0, %v3361
    %3363 = vmatmul.f32.gmra.mxu0 %v3238
    %v3364 = vpop.f32.mrf.mxu0
    %v3365 = vadd.f32 0.0, %v3364
    %3366 = vmatmul.f32.gmra.mxu0 %v3240
    %v3367 = vpop.f32.mrf.mxu0
    %v3368 = vadd.f32 0.0, %v3367
    %3369 = vdwg.mxu0
    %v3370 = vadd.f32 %v3009, %v3263
    %v3371 = vadd.f32 %v3010, %v3266
    %v3372 = vadd.f32 %v3011, %v3269
    %v3373 = vadd.f32 %v3012, %v3272
    %v3374 = vadd.f32 %v3013, %v3275
    %v3375 = vadd.f32 %v3014, %v3278
    %v3376 = vadd.f32 %v3015, %v3281
    %v3377 = vadd.f32 %v3016, %v3284
    %v3378 = vadd.f32 %v3017, %v3287
    %v3379 = vadd.f32 %v3018, %v3290
    %v3380 = vadd.f32 %v3019, %v3293
    %v3381 = vadd.f32 %v3020, %v3296
    %v3382 = vadd.f32 %v3021, %v3299
    %v3383 = vadd.f32 %v3022, %v3302
    %v3384 = vadd.f32 %v3023, %v3305
    %v3385 = vadd.f32 %v3024, %v3308
    %v3386 = vadd.f32 %v3025, %v3311
    %v3387 = vadd.f32 %v3026, %v3314
    %v3388 = vadd.f32 %v3027, %v3317
    %v3389 = vadd.f32 %v3028, %v3320
    %v3390 = vadd.f32 %v3029, %v3323
    %v3391 = vadd.f32 %v3030, %v3326
    %v3392 = vadd.f32 %v3031, %v3329
    %v3393 = vadd.f32 %v3032, %v3332
    %v3394 = vadd.f32 %v3033, %v3335
    %v3395 = vadd.f32 %v3034, %v3338
    %v3396 = vadd.f32 %v3035, %v3341
    %v3397 = vadd.f32 %v3036, %v3344
    %v3398 = vadd.f32 %v3037, %v3347
    %v3399 = vadd.f32 %v3038, %v3350
    %v3400 = vadd.f32 %v3039, %v3353
    %v3401 = vadd.f32 %v3040, %v3356
    %v3402 = vadd.f32 %v3041, %v3359
    %v3403 = vadd.f32 %v3042, %v3362
    %v3404 = vadd.f32 %v3043, %v3365
    %v3405 = vadd.f32 %v3044, %v3368
    %v3406 = vld [vmem:[%s3] sm:$0x1]
    %v3408 = vperm.slane %v3406, 0
    %v3410 = vadd.f32 %v3370, %v3408
    %v3411 = vadd.f32 %v3371, %v3408
    %v3412 = vadd.f32 %v3372, %v3408
    %v3413 = vadd.f32 %v3373, %v3408
    %v3414 = vadd.f32 %v3374, %v3408
    %v3415 = vadd.f32 %v3375, %v3408
    %v3416 = vadd.f32 %v3376, %v3408
    %v3417 = vadd.f32 %v3377, %v3408
    %v3418 = vadd.f32 %v3378, %v3408
    %v3419 = vadd.f32 %v3379, %v3408
    %v3420 = vadd.f32 %v3380, %v3408
    %v3421 = vadd.f32 %v3381, %v3408
    %v3422 = vadd.f32 %v3382, %v3408
    %v3423 = vadd.f32 %v3383, %v3408
    %v3424 = vadd.f32 %v3384, %v3408
    %v3425 = vadd.f32 %v3385, %v3408
    %v3426 = vadd.f32 %v3386, %v3408
    %v3427 = vadd.f32 %v3387, %v3408
    %v3428 = vadd.f32 %v3388, %v3408
    %v3429 = vadd.f32 %v3389, %v3408
    %v3430 = vadd.f32 %v3390, %v3408
    %v3431 = vadd.f32 %v3391, %v3408
    %v3432 = vadd.f32 %v3392, %v3408
    %v3433 = vadd.f32 %v3393, %v3408
    %v3434 = vadd.f32 %v3394, %v3408
    %v3435 = vadd.f32 %v3395, %v3408
    %v3436 = vadd.f32 %v3396, %v3408
    %v3437 = vadd.f32 %v3397, %v3408
    %v3438 = vadd.f32 %v3398, %v3408
    %v3439 = vadd.f32 %v3399, %v3408
    %v3440 = vadd.f32 %v3400, %v3408
    %v3441 = vadd.f32 %v3401, %v3408
    %v3442 = vadd.f32 %v3402, %v3408
    %v3443 = vadd.f32 %v3403, %v3408
    %v3444 = vadd.f32 %v3404, %v3408
    %v3445 = vadd.f32 %v3405, %v3408
    %v3446 = vmax.f32 %v3410, 0.0
    %v3447 = vmax.f32 %v3411, 0.0
    %v3448 = vmax.f32 %v3412, 0.0
    %v3449 = vmax.f32 %v3413, 0.0
    %v3450 = vmax.f32 %v3414, 0.0
    %v3451 = vmax.f32 %v3415, 0.0
    %v3452 = vmax.f32 %v3416, 0.0
    %v3453 = vmax.f32 %v3417, 0.0
    %v3454 = vmax.f32 %v3418, 0.0
    %v3455 = vmax.f32 %v3419, 0.0
    %v3456 = vmax.f32 %v3420, 0.0
    %v3457 = vmax.f32 %v3421, 0.0
    %v3458 = vmax.f32 %v3422, 0.0
    %v3459 = vmax.f32 %v3423, 0.0
    %v3460 = vmax.f32 %v3424, 0.0
    %v3461 = vmax.f32 %v3425, 0.0
    %v3462 = vmax.f32 %v3426, 0.0
    %v3463 = vmax.f32 %v3427, 0.0
    %v3464 = vmax.f32 %v3428, 0.0
    %v3465 = vmax.f32 %v3429, 0.0
    %v3466 = vmax.f32 %v3430, 0.0
    %v3467 = vmax.f32 %v3431, 0.0
    %v3468 = vmax.f32 %v3432, 0.0
    %v3469 = vmax.f32 %v3433, 0.0
    %v3470 = vmax.f32 %v3434, 0.0
    %v3471 = vmax.f32 %v3435, 0.0
    %v3472 = vmax.f32 %v3436, 0.0
    %v3473 = vmax.f32 %v3437, 0.0
    %v3474 = vmax.f32 %v3438, 0.0
    %v3475 = vmax.f32 %v3439, 0.0
    %v3476 = vmax.f32 %v3440, 0.0
    %v3477 = vmax.f32 %v3441, 0.0
    %v3478 = vmax.f32 %v3442, 0.0
    %v3479 = vmax.f32 %v3443, 0.0
    %v3480 = vmax.f32 %v3444, 0.0
    %v3481 = vmax.f32 %v3445, 0.0
    %v3518 = vrot.slane %v3446, 2
    %v3519 = vrot.slane %v3446, 4
    %v3520 = vrot.slane %v3446, 6
    %v3521 = vrot.slane %v3447, 2
    %v3522 = vrot.slane %v3447, 4
    %v3523 = vrot.slane %v3447, 6
    %v3524 = vrot.slane %v3448, 2
    %v3525 = vrot.slane %v3448, 4
    %v3526 = vrot.slane %v3448, 6
    %v3527 = vrot.slane %v3449, 2
    %v3528 = vrot.slane %v3449, 4
    %v3529 = vrot.slane %v3449, 6
    %v3530 = vrot.slane %v3450, 2
    %v3531 = vrot.slane %v3450, 4
    %v3532 = vrot.slane %v3450, 6
    %v3533 = vrot.slane %v3451, 2
    %v3534 = vrot.slane %v3451, 4
    %v3535 = vrot.slane %v3451, 6
    %v3536 = vrot.slane %v3452, 2
    %v3537 = vrot.slane %v3452, 4
    %v3538 = vrot.slane %v3452, 6
    %v3539 = vrot.slane %v3453, 2
    %v3540 = vrot.slane %v3453, 4
    %v3541 = vrot.slane %v3453, 6
    %v3542 = vrot.slane %v3454, 2
    %v3543 = vrot.slane %v3454, 4
    %v3544 = vrot.slane %v3454, 6
    %v3545 = vrot.slane %v3455, 2
    %v3546 = vrot.slane %v3455, 4
    %v3547 = vrot.slane %v3455, 6
    %v3548 = vrot.slane %v3456, 2
    %v3549 = vrot.slane %v3456, 4
    %v3550 = vrot.slane %v3456, 6
    %v3551 = vrot.slane %v3457, 2
    %v3552 = vrot.slane %v3457, 4
    %v3553 = vrot.slane %v3457, 6
    %v3554 = vrot.slane %v3458, 2
    %v3555 = vrot.slane %v3458, 4
    %v3556 = vrot.slane %v3458, 6
    %v3557 = vrot.slane %v3459, 2
    %v3558 = vrot.slane %v3459, 4
    %v3559 = vrot.slane %v3459, 6
    %v3560 = vrot.slane %v3460, 2
    %v3561 = vrot.slane %v3460, 4
    %v3562 = vrot.slane %v3460, 6
    %v3563 = vrot.slane %v3461, 2
    %v3564 = vrot.slane %v3461, 4
    %v3565 = vrot.slane %v3461, 6
    %v3566 = vrot.slane %v3462, 2
    %v3567 = vrot.slane %v3462, 4
    %v3568 = vrot.slane %v3462, 6
    %v3569 = vrot.slane %v3463, 2
    %v3570 = vrot.slane %v3463, 4
    %v3571 = vrot.slane %v3463, 6
    %v3572 = vrot.slane %v3464, 2
    %v3573 = vrot.slane %v3464, 4
    %v3574 = vrot.slane %v3464, 6
    %v3575 = vrot.slane %v3465, 2
    %v3576 = vrot.slane %v3465, 4
    %v3577 = vrot.slane %v3465, 6
    %v3578 = vrot.slane %v3466, 2
    %v3579 = vrot.slane %v3466, 4
    %v3580 = vrot.slane %v3466, 6
    %v3581 = vrot.slane %v3467, 2
    %v3582 = vrot.slane %v3467, 4
    %v3583 = vrot.slane %v3467, 6
    %v3584 = vrot.slane %v3468, 2
    %v3585 = vrot.slane %v3468, 4
    %v3586 = vrot.slane %v3468, 6
    %v3587 = vrot.slane %v3469, 2
    %v3588 = vrot.slane %v3469, 4
    %v3589 = vrot.slane %v3469, 6
    %v3590 = vrot.slane %v3470, 2
    %v3591 = vrot.slane %v3470, 4
    %v3592 = vrot.slane %v3470, 6
    %v3593 = vrot.slane %v3471, 2
    %v3594 = vrot.slane %v3471, 4
    %v3595 = vrot.slane %v3471, 6
    %v3596 = vrot.slane %v3472, 2
    %v3597 = vrot.slane %v3472, 4
    %v3598 = vrot.slane %v3472, 6
    %v3599 = vrot.slane %v3473, 2
    %v3600 = vrot.slane %v3473, 4
    %v3601 = vrot.slane %v3473, 6
    %v3602 = vrot.slane %v3474, 2
    %v3603 = vrot.slane %v3474, 4
    %v3604 = vrot.slane %v3474, 6
    %v3605 = vrot.slane %v3475, 2
    %v3606 = vrot.slane %v3475, 4
    %v3607 = vrot.slane %v3475, 6
    %v3608 = vrot.slane %v3476, 2
    %v3609 = vrot.slane %v3476, 4
    %v3610 = vrot.slane %v3476, 6
    %v3611 = vrot.slane %v3477, 2
    %v3612 = vrot.slane %v3477, 4
    %v3613 = vrot.slane %v3477, 6
    %v3614 = vrot.slane %v3478, 2
    %v3615 = vrot.slane %v3478, 4
    %v3616 = vrot.slane %v3478, 6
    %v3617 = vrot.slane %v3479, 2
    %v3618 = vrot.slane %v3479, 4
    %v3619 = vrot.slane %v3479, 6
    %v3620 = vrot.slane %v3480, 2
    %v3621 = vrot.slane %v3480, 4
    %v3622 = vrot.slane %v3480, 6
    %v3623 = vrot.slane %v3481, 2
    %v3624 = vrot.slane %v3481, 4
    %v3625 = vrot.slane %v3481, 6
    %v3734 = vrot.slane %v3446, 7
    %v3735 = vrot.slane %v3734, 2
    %v3736 = vrot.slane %v3518, 7
    %v3737 = vrot.slane %v3736, 2
    %v3738 = vrot.slane %v3519, 7
    %v3739 = vrot.slane %v3738, 2
    %v3740 = vrot.slane %v3520, 7
    %v3741 = vrot.slane %v3740, 2
    %v3742 = vrot.slane %v3447, 7
    %v3743 = vrot.slane %v3742, 2
    %v3744 = vrot.slane %v3521, 7
    %v3745 = vrot.slane %v3744, 2
    %v3746 = vrot.slane %v3522, 7
    %v3747 = vrot.slane %v3746, 2
    %v3748 = vrot.slane %v3523, 7
    %v3749 = vrot.slane %v3748, 2
    %v3750 = vrot.slane %v3448, 7
    %v3751 = vrot.slane %v3750, 2
    %v3752 = vrot.slane %v3524, 7
    %v3753 = vrot.slane %v3752, 2
    %v3754 = vrot.slane %v3525, 7
    %v3755 = vrot.slane %v3754, 2
    %v3756 = vrot.slane %v3526, 7
    %v3757 = vrot.slane %v3756, 2
    %v3758 = vrot.slane %v3449, 7
    %v3759 = vrot.slane %v3758, 2
    %v3760 = vrot.slane %v3527, 7
    %v3761 = vrot.slane %v3760, 2
    %v3762 = vrot.slane %v3528, 7
    %v3763 = vrot.slane %v3762, 2
    %v3764 = vrot.slane %v3529, 7
    %v3765 = vrot.slane %v3764, 2
    %v3766 = vrot.slane %v3450, 7
    %v3767 = vrot.slane %v3766, 2
    %v3768 = vrot.slane %v3530, 7
    %v3769 = vrot.slane %v3768, 2
    %v3770 = vrot.slane %v3531, 7
    %v3771 = vrot.slane %v3770, 2
    %v3772 = vrot.slane %v3532, 7
    %v3773 = vrot.slane %v3772, 2
    %v3774 = vrot.slane %v3451, 7
    %v3775 = vrot.slane %v3774, 2
    %v3776 = vrot.slane %v3533, 7
    %v3777 = vrot.slane %v3776, 2
    %v3778 = vrot.slane %v3534, 7
    %v3779 = vrot.slane %v3778, 2
    %v3780 = vrot.slane %v3535, 7
    %v3781 = vrot.slane %v3780, 2
    %v3782 = vrot.slane %v3452, 7
    %v3783 = vrot.slane %v3782, 2
    %v3784 = vrot.slane %v3536, 7
    %v3785 = vrot.slane %v3784, 2
    %v3786 = vrot.slane %v3537, 7
    %v3787 = vrot.slane %v3786, 2
    %v3788 = vrot.slane %v3538, 7
    %v3789 = vrot.slane %v3788, 2
    %v3790 = vrot.slane %v3453, 7
    %v3791 = vrot.slane %v3790, 2
    %v3792 = vrot.slane %v3539, 7
    %v3793 = vrot.slane %v3792, 2
    %v3794 = vrot.slane %v3540, 7
    %v3795 = vrot.slane %v3794, 2
    %v3796 = vrot.slane %v3541, 7
    %v3797 = vrot.slane %v3796, 2
    %v3798 = vrot.slane %v3454, 7
    %v3799 = vrot.slane %v3798, 2
    %v3800 = vrot.slane %v3542, 7
    %v3801 = vrot.slane %v3800, 2
    %v3802 = vrot.slane %v3543, 7
    %v3803 = vrot.slane %v3802, 2
    %v3804 = vrot.slane %v3544, 7
    %v3805 = vrot.slane %v3804, 2
    %v3806 = vrot.slane %v3455, 7
    %v3807 = vrot.slane %v3806, 2
    %v3808 = vrot.slane %v3545, 7
    %v3809 = vrot.slane %v3808, 2
    %v3810 = vrot.slane %v3546, 7
    %v3811 = vrot.slane %v3810, 2
    %v3812 = vrot.slane %v3547, 7
    %v3813 = vrot.slane %v3812, 2
    %v3814 = vrot.slane %v3456, 7
    %v3815 = vrot.slane %v3814, 2
    %v3816 = vrot.slane %v3548, 7
    %v3817 = vrot.slane %v3816, 2
    %v3818 = vrot.slane %v3549, 7
    %v3819 = vrot.slane %v3818, 2
    %v3820 = vrot.slane %v3550, 7
    %v3821 = vrot.slane %v3820, 2
    %v3822 = vrot.slane %v3457, 7
    %v3823 = vrot.slane %v3822, 2
    %v3824 = vrot.slane %v3551, 7
    %v3825 = vrot.slane %v3824, 2
    %v3826 = vrot.slane %v3552, 7
    %v3827 = vrot.slane %v3826, 2
    %v3828 = vrot.slane %v3553, 7
    %v3829 = vrot.slane %v3828, 2
    %v3830 = vrot.slane %v3458, 7
    %v3831 = vrot.slane %v3830, 2
    %v3832 = vrot.slane %v3554, 7
    %v3833 = vrot.slane %v3832, 2
    %v3834 = vrot.slane %v3555, 7
    %v3835 = vrot.slane %v3834, 2
    %v3836 = vrot.slane %v3556, 7
    %v3837 = vrot.slane %v3836, 2
    %v3838 = vrot.slane %v3459, 7
    %v3839 = vrot.slane %v3838, 2
    %v3840 = vrot.slane %v3557, 7
    %v3841 = vrot.slane %v3840, 2
    %v3842 = vrot.slane %v3558, 7
    %v3843 = vrot.slane %v3842, 2
    %v3844 = vrot.slane %v3559, 7
    %v3845 = vrot.slane %v3844, 2
    %v3846 = vrot.slane %v3460, 7
    %v3847 = vrot.slane %v3846, 2
    %v3848 = vrot.slane %v3560, 7
    %v3849 = vrot.slane %v3848, 2
    %v3850 = vrot.slane %v3561, 7
    %v3851 = vrot.slane %v3850, 2
    %v3852 = vrot.slane %v3562, 7
    %v3853 = vrot.slane %v3852, 2
    %v3854 = vrot.slane %v3461, 7
    %v3855 = vrot.slane %v3854, 2
    %v3856 = vrot.slane %v3563, 7
    %v3857 = vrot.slane %v3856, 2
    %v3858 = vrot.slane %v3564, 7
    %v3859 = vrot.slane %v3858, 2
    %v3860 = vrot.slane %v3565, 7
    %v3861 = vrot.slane %v3860, 2
    %v3862 = vrot.slane %v3462, 7
    %v3863 = vrot.slane %v3862, 2
    %v3864 = vrot.slane %v3566, 7
    %v3865 = vrot.slane %v3864, 2
    %v3866 = vrot.slane %v3567, 7
    %v3867 = vrot.slane %v3866, 2
    %v3868 = vrot.slane %v3568, 7
    %v3869 = vrot.slane %v3868, 2
    %v3870 = vrot.slane %v3463, 7
    %v3871 = vrot.slane %v3870, 2
    %v3872 = vrot.slane %v3569, 7
    %v3873 = vrot.slane %v3872, 2
    %v3874 = vrot.slane %v3570, 7
    %v3875 = vrot.slane %v3874, 2
    %v3876 = vrot.slane %v3571, 7
    %v3877 = vrot.slane %v3876, 2
    %v3878 = vrot.slane %v3464, 7
    %v3879 = vrot.slane %v3878, 2
    %v3880 = vrot.slane %v3572, 7
    %v3881 = vrot.slane %v3880, 2
    %v3882 = vrot.slane %v3573, 7
    %v3883 = vrot.slane %v3882, 2
    %v3884 = vrot.slane %v3574, 7
    %v3885 = vrot.slane %v3884, 2
    %v3886 = vrot.slane %v3465, 7
    %v3887 = vrot.slane %v3886, 2
    %v3888 = vrot.slane %v3575, 7
    %v3889 = vrot.slane %v3888, 2
    %v3890 = vrot.slane %v3576, 7
    %v3891 = vrot.slane %v3890, 2
    %v3892 = vrot.slane %v3577, 7
    %v3893 = vrot.slane %v3892, 2
    %v3894 = vrot.slane %v3466, 7
    %v3895 = vrot.slane %v3894, 2
    %v3896 = vrot.slane %v3578, 7
    %v3897 = vrot.slane %v3896, 2
    %v3898 = vrot.slane %v3579, 7
    %v3899 = vrot.slane %v3898, 2
    %v3900 = vrot.slane %v3580, 7
    %v3901 = vrot.slane %v3900, 2
    %v3902 = vrot.slane %v3467, 7
    %v3903 = vrot.slane %v3902, 2
    %v3904 = vrot.slane %v3581, 7
    %v3905 = vrot.slane %v3904, 2
    %v3906 = vrot.slane %v3582, 7
    %v3907 = vrot.slane %v3906, 2
    %v3908 = vrot.slane %v3583, 7
    %v3909 = vrot.slane %v3908, 2
    %v3910 = vrot.slane %v3468, 7
    %v3911 = vrot.slane %v3910, 2
    %v3912 = vrot.slane %v3584, 7
    %v3913 = vrot.slane %v3912, 2
    %v3914 = vrot.slane %v3585, 7
    %v3915 = vrot.slane %v3914, 2
    %v3916 = vrot.slane %v3586, 7
    %v3917 = vrot.slane %v3916, 2
    %v3918 = vrot.slane %v3469, 7
    %v3919 = vrot.slane %v3918, 2
    %v3920 = vrot.slane %v3587, 7
    %v3921 = vrot.slane %v3920, 2
    %v3922 = vrot.slane %v3588, 7
    %v3923 = vrot.slane %v3922, 2
    %v3924 = vrot.slane %v3589, 7
    %v3925 = vrot.slane %v3924, 2
    %v3926 = vrot.slane %v3470, 7
    %v3927 = vrot.slane %v3926, 2
    %v3928 = vrot.slane %v3590, 7
    %v3929 = vrot.slane %v3928, 2
    %v3930 = vrot.slane %v3591, 7
    %v3931 = vrot.slane %v3930, 2
    %v3932 = vrot.slane %v3592, 7
    %v3933 = vrot.slane %v3932, 2
    %v3934 = vrot.slane %v3471, 7
    %v3935 = vrot.slane %v3934, 2
    %v3936 = vrot.slane %v3593, 7
    %v3937 = vrot.slane %v3936, 2
    %v3938 = vrot.slane %v3594, 7
    %v3939 = vrot.slane %v3938, 2
    %v3940 = vrot.slane %v3595, 7
    %v3941 = vrot.slane %v3940, 2
    %v3942 = vrot.slane %v3472, 7
    %v3943 = vrot.slane %v3942, 2
    %v3944 = vrot.slane %v3596, 7
    %v3945 = vrot.slane %v3944, 2
    %v3946 = vrot.slane %v3597, 7
    %v3947 = vrot.slane %v3946, 2
    %v3948 = vrot.slane %v3598, 7
    %v3949 = vrot.slane %v3948, 2
    %v3950 = vrot.slane %v3473, 7
    %v3951 = vrot.slane %v3950, 2
    %v3952 = vrot.slane %v3599, 7
    %v3953 = vrot.slane %v3952, 2
    %v3954 = vrot.slane %v3600, 7
    %v3955 = vrot.slane %v3954, 2
    %v3956 = vrot.slane %v3601, 7
    %v3957 = vrot.slane %v3956, 2
    %v3958 = vrot.slane %v3474, 7
    %v3959 = vrot.slane %v3958, 2
    %v3960 = vrot.slane %v3602, 7
    %v3961 = vrot.slane %v3960, 2
    %v3962 = vrot.slane %v3603, 7
    %v3963 = vrot.slane %v3962, 2
    %v3964 = vrot.slane %v3604, 7
    %v3965 = vrot.slane %v3964, 2
    %v3966 = vrot.slane %v3475, 7
    %v3967 = vrot.slane %v3966, 2
    %v3968 = vrot.slane %v3605, 7
    %v3969 = vrot.slane %v3968, 2
    %v3970 = vrot.slane %v3606, 7
    %v3971 = vrot.slane %v3970, 2
    %v3972 = vrot.slane %v3607, 7
    %v3973 = vrot.slane %v3972, 2
    %v3974 = vrot.slane %v3476, 7
    %v3975 = vrot.slane %v3974, 2
    %v3976 = vrot.slane %v3608, 7
    %v3977 = vrot.slane %v3976, 2
    %v3978 = vrot.slane %v3609, 7
    %v3979 = vrot.slane %v3978, 2
    %v3980 = vrot.slane %v3610, 7
    %v3981 = vrot.slane %v3980, 2
    %v3982 = vrot.slane %v3477, 7
    %v3983 = vrot.slane %v3982, 2
    %v3984 = vrot.slane %v3611, 7
    %v3985 = vrot.slane %v3984, 2
    %v3986 = vrot.slane %v3612, 7
    %v3987 = vrot.slane %v3986, 2
    %v3988 = vrot.slane %v3613, 7
    %v3989 = vrot.slane %v3988, 2
    %v3990 = vrot.slane %v3478, 7
    %v3991 = vrot.slane %v3990, 2
    %v3992 = vrot.slane %v3614, 7
    %v3993 = vrot.slane %v3992, 2
    %v3994 = vrot.slane %v3615, 7
    %v3995 = vrot.slane %v3994, 2
    %v3996 = vrot.slane %v3616, 7
    %v3997 = vrot.slane %v3996, 2
    %v3998 = vrot.slane %v3479, 7
    %v3999 = vrot.slane %v3998, 2
    %v4000 = vrot.slane %v3617, 7
    %v4001 = vrot.slane %v4000, 2
    %v4002 = vrot.slane %v3618, 7
    %v4003 = vrot.slane %v4002, 2
    %v4004 = vrot.slane %v3619, 7
    %v4005 = vrot.slane %v4004, 2
    %v4006 = vrot.slane %v3480, 7
    %v4007 = vrot.slane %v4006, 2
    %v4008 = vrot.slane %v3620, 7
    %v4009 = vrot.slane %v4008, 2
    %v4010 = vrot.slane %v3621, 7
    %v4011 = vrot.slane %v4010, 2
    %v4012 = vrot.slane %v3622, 7
    %v4013 = vrot.slane %v4012, 2
    %v4014 = vrot.slane %v3481, 7
    %v4015 = vrot.slane %v4014, 2
    %v4016 = vrot.slane %v3623, 7
    %v4017 = vrot.slane %v4016, 2
    %v4018 = vrot.slane %v3624, 7
    %v4019 = vrot.slane %v4018, 2
    %v4020 = vrot.slane %v3625, 7
    %v4021 = vrot.slane %v4020, 2
    %v4166 = vmax.f32 %v3446, %v3735
    %v4167 = vmax.f32 %v3518, %v3737
    %v4168 = vmax.f32 %v3519, %v3739
    %v4169 = vmax.f32 %v3520, %v3741
    %v4170 = vmax.f32 %v3447, %v3743
    %v4171 = vmax.f32 %v3521, %v3745
    %v4172 = vmax.f32 %v3522, %v3747
    %v4173 = vmax.f32 %v3523, %v3749
    %v4174 = vmax.f32 %v3448, %v3751
    %v4175 = vmax.f32 %v3524, %v3753
    %v4176 = vmax.f32 %v3525, %v3755
    %v4177 = vmax.f32 %v3526, %v3757
    %v4178 = vmax.f32 %v3449, %v3759
    %v4179 = vmax.f32 %v3527, %v3761
    %v4180 = vmax.f32 %v3528, %v3763
    %v4181 = vmax.f32 %v3529, %v3765
    %v4182 = vmax.f32 %v3450, %v3767
    %v4183 = vmax.f32 %v3530, %v3769
    %v4184 = vmax.f32 %v3531, %v3771
    %v4185 = vmax.f32 %v3532, %v3773
    %v4186 = vmax.f32 %v3451, %v3775
    %v4187 = vmax.f32 %v3533, %v3777
    %v4188 = vmax.f32 %v3534, %v3779
    %v4189 = vmax.f32 %v3535, %v3781
    %v4190 = vmax.f32 %v3452, %v3783
    %v4191 = vmax.f32 %v3536, %v3785
    %v4192 = vmax.f32 %v3537, %v3787
    %v4193 = vmax.f32 %v3538, %v3789
    %v4194 = vmax.f32 %v3453, %v3791
    %v4195 = vmax.f32 %v3539, %v3793
    %v4196 = vmax.f32 %v3540, %v3795
    %v4197 = vmax.f32 %v3541, %v3797
    %v4198 = vmax.f32 %v3454, %v3799
    %v4199 = vmax.f32 %v3542, %v3801
    %v4200 = vmax.f32 %v3543, %v3803
    %v4201 = vmax.f32 %v3544, %v3805
    %v4202 = vmax.f32 %v3455, %v3807
    %v4203 = vmax.f32 %v3545, %v3809
    %v4204 = vmax.f32 %v3546, %v3811
    %v4205 = vmax.f32 %v3547, %v3813
    %v4206 = vmax.f32 %v3456, %v3815
    %v4207 = vmax.f32 %v3548, %v3817
    %v4208 = vmax.f32 %v3549, %v3819
    %v4209 = vmax.f32 %v3550, %v3821
    %v4210 = vmax.f32 %v3457, %v3823
    %v4211 = vmax.f32 %v3551, %v3825
    %v4212 = vmax.f32 %v3552, %v3827
    %v4213 = vmax.f32 %v3553, %v3829
    %v4214 = vmax.f32 %v3458, %v3831
    %v4215 = vmax.f32 %v3554, %v3833
    %v4216 = vmax.f32 %v3555, %v3835
    %v4217 = vmax.f32 %v3556, %v3837
    %v4218 = vmax.f32 %v3459, %v3839
    %v4219 = vmax.f32 %v3557, %v3841
    %v4220 = vmax.f32 %v3558, %v3843
    %v4221 = vmax.f32 %v3559, %v3845
    %v4222 = vmax.f32 %v3460, %v3847
    %v4223 = vmax.f32 %v3560, %v3849
    %v4224 = vmax.f32 %v3561, %v3851
    %v4225 = vmax.f32 %v3562, %v3853
    %v4226 = vmax.f32 %v3461, %v3855
    %v4227 = vmax.f32 %v3563, %v3857
    %v4228 = vmax.f32 %v3564, %v3859
    %v4229 = vmax.f32 %v3565, %v3861
    %v4230 = vmax.f32 %v3462, %v3863
    %v4231 = vmax.f32 %v3566, %v3865
    %v4232 = vmax.f32 %v3567, %v3867
    %v4233 = vmax.f32 %v3568, %v3869
    %v4234 = vmax.f32 %v3463, %v3871
    %v4235 = vmax.f32 %v3569, %v3873
    %v4236 = vmax.f32 %v3570, %v3875
    %v4237 = vmax.f32 %v3571, %v3877
    %v4238 = vmax.f32 %v3464, %v3879
    %v4239 = vmax.f32 %v3572, %v3881
    %v4240 = vmax.f32 %v3573, %v3883
    %v4241 = vmax.f32 %v3574, %v3885
    %v4242 = vmax.f32 %v3465, %v3887
    %v4243 = vmax.f32 %v3575, %v3889
    %v4244 = vmax.f32 %v3576, %v3891
    %v4245 = vmax.f32 %v3577, %v3893
    %v4246 = vmax.f32 %v3466, %v3895
    %v4247 = vmax.f32 %v3578, %v3897
    %v4248 = vmax.f32 %v3579, %v3899
    %v4249 = vmax.f32 %v3580, %v3901
    %v4250 = vmax.f32 %v3467, %v3903
    %v4251 = vmax.f32 %v3581, %v3905
    %v4252 = vmax.f32 %v3582, %v3907
    %v4253 = vmax.f32 %v3583, %v3909
    %v4254 = vmax.f32 %v3468, %v3911
    %v4255 = vmax.f32 %v3584, %v3913
    %v4256 = vmax.f32 %v3585, %v3915
    %v4257 = vmax.f32 %v3586, %v3917
    %v4258 = vmax.f32 %v3469, %v3919
    %v4259 = vmax.f32 %v3587, %v3921
    %v4260 = vmax.f32 %v3588, %v3923
    %v4261 = vmax.f32 %v3589, %v3925
    %v4262 = vmax.f32 %v3470, %v3927
    %v4263 = vmax.f32 %v3590, %v3929
    %v4264 = vmax.f32 %v3591, %v3931
    %v4265 = vmax.f32 %v3592, %v3933
    %v4266 = vmax.f32 %v3471, %v3935
    %v4267 = vmax.f32 %v3593, %v3937
    %v4268 = vmax.f32 %v3594, %v3939
    %v4269 = vmax.f32 %v3595, %v3941
    %v4270 = vmax.f32 %v3472, %v3943
    %v4271 = vmax.f32 %v3596, %v3945
    %v4272 = vmax.f32 %v3597, %v3947
    %v4273 = vmax.f32 %v3598, %v3949
    %v4274 = vmax.f32 %v3473, %v3951
    %v4275 = vmax.f32 %v3599, %v3953
    %v4276 = vmax.f32 %v3600, %v3955
    %v4277 = vmax.f32 %v3601, %v3957
    %v4278 = vmax.f32 %v3474, %v3959
    %v4279 = vmax.f32 %v3602, %v3961
    %v4280 = vmax.f32 %v3603, %v3963
    %v4281 = vmax.f32 %v3604, %v3965
    %v4282 = vmax.f32 %v3475, %v3967
    %v4283 = vmax.f32 %v3605, %v3969
    %v4284 = vmax.f32 %v3606, %v3971
    %v4285 = vmax.f32 %v3607, %v3973
    %v4286 = vmax.f32 %v3476, %v3975
    %v4287 = vmax.f32 %v3608, %v3977
    %v4288 = vmax.f32 %v3609, %v3979
    %v4289 = vmax.f32 %v3610, %v3981
    %v4290 = vmax.f32 %v3477, %v3983
    %v4291 = vmax.f32 %v3611, %v3985
    %v4292 = vmax.f32 %v3612, %v3987
    %v4293 = vmax.f32 %v3613, %v3989
    %v4294 = vmax.f32 %v3478, %v3991
    %v4295 = vmax.f32 %v3614, %v3993
    %v4296 = vmax.f32 %v3615, %v3995
    %v4297 = vmax.f32 %v3616, %v3997
    %v4298 = vmax.f32 %v3479, %v3999
    %v4299 = vmax.f32 %v3617, %v4001
    %v4300 = vmax.f32 %v3618, %v4003
    %v4301 = vmax.f32 %v3619, %v4005
    %v4302 = vmax.f32 %v3480, %v4007
    %v4303 = vmax.f32 %v3620, %v4009
    %v4304 = vmax.f32 %v3621, %v4011
    %v4305 = vmax.f32 %v3622, %v4013
    %v4306 = vmax.f32 %v3481, %v4015
    %v4307 = vmax.f32 %v3623, %v4017
    %v4308 = vmax.f32 %v3624, %v4019
    %v4309 = vmax.f32 %v3625, %v4021
    %v4310 = vmax.f32 %v4166, %v4172
    %v4311 = vmax.f32 %v4167, %v4173
    %v4312 = vmax.f32 %v4168, %v4174
    %v4313 = vmax.f32 %v4169, %v4175
    %v4314 = vmax.f32 %v4170, %v4176
    %v4315 = vmax.f32 %v4171, %v4177
    %v4316 = vmax.f32 %v4178, %v4184
    %v4317 = vmax.f32 %v4179, %v4185
    %v4318 = vmax.f32 %v4180, %v4186
    %v4319 = vmax.f32 %v4181, %v4187
    %v4320 = vmax.f32 %v4182, %v4188
    %v4321 = vmax.f32 %v4183, %v4189
    %v4322 = vmax.f32 %v4190, %v4196
    %v4323 = vmax.f32 %v4191, %v4197
    %v4324 = vmax.f32 %v4192, %v4198
    %v4325 = vmax.f32 %v4193, %v4199
    %v4326 = vmax.f32 %v4194, %v4200
    %v4327 = vmax.f32 %v4195, %v4201
    %v4328 = vmax.f32 %v4202, %v4208
    %v4329 = vmax.f32 %v4203, %v4209
    %v4330 = vmax.f32 %v4204, %v4210
    %v4331 = vmax.f32 %v4205, %v4211
    %v4332 = vmax.f32 %v4206, %v4212
    %v4333 = vmax.f32 %v4207, %v4213
    %v4334 = vmax.f32 %v4214, %v4220
    %v4335 = vmax.f32 %v4215, %v4221
    %v4336 = vmax.f32 %v4216, %v4222
    %v4337 = vmax.f32 %v4217, %v4223
    %v4338 = vmax.f32 %v4218, %v4224
    %v4339 = vmax.f32 %v4219, %v4225
    %v4340 = vmax.f32 %v4226, %v4232
    %v4341 = vmax.f32 %v4227, %v4233
    %v4342 = vmax.f32 %v4228, %v4234
    %v4343 = vmax.f32 %v4229, %v4235
    %v4344 = vmax.f32 %v4230, %v4236
    %v4345 = vmax.f32 %v4231, %v4237
    %v4346 = vmax.f32 %v4238, %v4244
    %v4347 = vmax.f32 %v4239, %v4245
    %v4348 = vmax.f32 %v4240, %v4246
    %v4349 = vmax.f32 %v4241, %v4247
    %v4350 = vmax.f32 %v4242, %v4248
    %v4351 = vmax.f32 %v4243, %v4249
    %v4352 = vmax.f32 %v4250, %v4256
    %v4353 = vmax.f32 %v4251, %v4257
    %v4354 = vmax.f32 %v4252, %v4258
    %v4355 = vmax.f32 %v4253, %v4259
    %v4356 = vmax.f32 %v4254, %v4260
    %v4357 = vmax.f32 %v4255, %v4261
    %v4358 = vmax.f32 %v4262, %v4268
    %v4359 = vmax.f32 %v4263, %v4269
    %v4360 = vmax.f32 %v4264, %v4270
    %v4361 = vmax.f32 %v4265, %v4271
    %v4362 = vmax.f32 %v4266, %v4272
    %v4363 = vmax.f32 %v4267, %v4273
    %v4364 = vmax.f32 %v4274, %v4280
    %v4365 = vmax.f32 %v4275, %v4281
    %v4366 = vmax.f32 %v4276, %v4282
    %v4367 = vmax.f32 %v4277, %v4283
    %v4368 = vmax.f32 %v4278, %v4284
    %v4369 = vmax.f32 %v4279, %v4285
    %v4370 = vmax.f32 %v4286, %v4292
    %v4371 = vmax.f32 %v4287, %v4293
    %v4372 = vmax.f32 %v4288, %v4294
    %v4373 = vmax.f32 %v4289, %v4295
    %v4374 = vmax.f32 %v4290, %v4296
    %v4375 = vmax.f32 %v4291, %v4297
    %v4376 = vmax.f32 %v4298, %v4304
    %v4377 = vmax.f32 %v4299, %v4305
    %v4378 = vmax.f32 %v4300, %v4306
    %v4379 = vmax.f32 %v4301, %v4307
    %v4380 = vmax.f32 %v4302, %v4308
    %v4381 = vmax.f32 %v4303, %v4309
    %v4430 = vperm.slane %v4310, 0
    %v4431 = vperm.slane %v4311, 0
    %v4432 = vperm.slane %v4312, 0
    %v4433 = vperm.slane %v4313, 0
    %v4434 = vperm.slane %v4316, 0
    %v4435 = vperm.slane %v4317, 0
    %v4436 = vperm.slane %v4318, 0
    %v4437 = vperm.slane %v4319, 0
    %v4438 = vperm.slane %v4322, 0
    %v4439 = vperm.slane %v4323, 0
    %v4440 = vperm.slane %v4324, 0
    %v4441 = vperm.slane %v4325, 0
    %v4442 = vperm.slane %v4328, 0
    %v4443 = vperm.slane %v4329, 0
    %v4444 = vperm.slane %v4330, 0
    %v4445 = vperm.slane %v4331, 0
    %v4446 = vperm.slane %v4334, 0
    %v4447 = vperm.slane %v4335, 0
    %v4448 = vperm.slane %v4336, 0
    %v4449 = vperm.slane %v4337, 0
    %v4450 = vperm.slane %v4340, 0
    %v4451 = vperm.slane %v4341, 0
    %v4452 = vperm.slane %v4342, 0
    %v4453 = vperm.slane %v4343, 0
    %v4454 = vperm.slane %v4346, 0
    %v4455 = vperm.slane %v4347, 0
    %v4456 = vperm.slane %v4348, 0
    %v4457 = vperm.slane %v4349, 0
    %v4458 = vperm.slane %v4352, 0
    %v4459 = vperm.slane %v4353, 0
    %v4460 = vperm.slane %v4354, 0
    %v4461 = vperm.slane %v4355, 0
    %v4462 = vperm.slane %v4358, 0
    %v4463 = vperm.slane %v4359, 0
    %v4464 = vperm.slane %v4360, 0
    %v4465 = vperm.slane %v4361, 0
    %v4466 = vperm.slane %v4364, 0
    %v4467 = vperm.slane %v4365, 0
    %v4468 = vperm.slane %v4366, 0
    %v4469 = vperm.slane %v4367, 0
    %v4470 = vperm.slane %v4370, 0
    %v4471 = vperm.slane %v4371, 0
    %v4472 = vperm.slane %v4372, 0
    %v4473 = vperm.slane %v4373, 0
    %v4474 = vperm.slane %v4376, 0
    %v4475 = vperm.slane %v4377, 0
    %v4476 = vperm.slane %v4378, 0
    %v4477 = vperm.slane %v4379, 0
    %vm4478 = vcmask 1041409
    %v4479 = vsel %vm4478, %v4431, %v4430
    %vm4480 = vcmask 1042434
    %v4481 = vsel %vm4480, %v4432, %v4479
    %vm4482 = vcmask 1043459
    %v4483 = vsel %vm4482, %v4433, %v4481
    %v4484 = vsel %vm4478, %v4435, %v4434
    %v4485 = vsel %vm4480, %v4436, %v4484
    %v4486 = vsel %vm4482, %v4437, %v4485
    %v4487 = vsel %vm4478, %v4439, %v4438
    %v4488 = vsel %vm4480, %v4440, %v4487
    %v4489 = vsel %vm4482, %v4441, %v4488
    %v4490 = vsel %vm4478, %v4443, %v4442
    %v4491 = vsel %vm4480, %v4444, %v4490
    %v4492 = vsel %vm4482, %v4445, %v4491
    %v4493 = vsel %vm4478, %v4447, %v4446
    %v4494 = vsel %vm4480, %v4448, %v4493
    %v4495 = vsel %vm4482, %v4449, %v4494
    %v4496 = vsel %vm4478, %v4451, %v4450
    %v4497 = vsel %vm4480, %v4452, %v4496
    %v4498 = vsel %vm4482, %v4453, %v4497
    %v4499 = vsel %vm4478, %v4455, %v4454
    %v4500 = vsel %vm4480, %v4456, %v4499
    %v4501 = vsel %vm4482, %v4457, %v4500
    %v4502 = vsel %vm4478, %v4459, %v4458
    %v4503 = vsel %vm4480, %v4460, %v4502
    %v4504 = vsel %vm4482, %v4461, %v4503
    %v4505 = vsel %vm4478, %v4463, %v4462
    %v4506 = vsel %vm4480, %v4464, %v4505
    %v4507 = vsel %vm4482, %v4465, %v4506
    %v4508 = vsel %vm4478, %v4467, %v4466
    %v4509 = vsel %vm4480, %v4468, %v4508
    %v4510 = vsel %vm4482, %v4469, %v4509
    %v4511 = vsel %vm4478, %v4471, %v4470
    %v4512 = vsel %vm4480, %v4472, %v4511
    %v4513 = vsel %vm4482, %v4473, %v4512
    %v4514 = vsel %vm4478, %v4475, %v4474
    %v4515 = vsel %vm4480, %v4476, %v4514
    %v4516 = vsel %vm4482, %v4477, %v4515
    %v4541 = vperm.slane %v4314, 0
    %v4542 = vperm.slane %v4320, 0
    %v4543 = vperm.slane %v4326, 0
    %v4544 = vperm.slane %v4332, 0
    %v4545 = vperm.slane %v4338, 0
    %v4546 = vperm.slane %v4344, 0
    %v4547 = vperm.slane %v4350, 0
    %v4548 = vperm.slane %v4356, 0
    %v4549 = vperm.slane %v4362, 0
    %v4550 = vperm.slane %v4368, 0
    %v4551 = vperm.slane %v4374, 0
    %v4552 = vperm.slane %v4380, 0
    %v4553 = vsel %vm4478, %v4432, %v4431
    %v4554 = vsel %vm4480, %v4433, %v4553
    %v4555 = vsel %vm4482, %v4541, %v4554
    %v4556 = vsel %vm4478, %v4436, %v4435
    %v4557 = vsel %vm4480, %v4437, %v4556
    %v4558 = vsel %vm4482, %v4542, %v4557
    %v4559 = vsel %vm4478, %v4440, %v4439
    %v4560 = vsel %vm4480, %v4441, %v4559
    %v4561 = vsel %vm4482, %v4543, %v4560
    %v4562 = vsel %vm4478, %v4444, %v4443
    %v4563 = vsel %vm4480, %v4445, %v4562
    %v4564 = vsel %vm4482, %v4544, %v4563
    %v4565 = vsel %vm4478, %v4448, %v4447
    %v4566 = vsel %vm4480, %v4449, %v4565
    %v4567 = vsel %vm4482, %v4545, %v4566
    %v4568 = vsel %vm4478, %v4452, %v4451
    %v4569 = vsel %vm4480, %v4453, %v4568
    %v4570 = vsel %vm4482, %v4546, %v4569
    %v4571 = vsel %vm4478, %v4456, %v4455
    %v4572 = vsel %vm4480, %v4457, %v4571
    %v4573 = vsel %vm4482, %v4547, %v4572
    %v4574 = vsel %vm4478, %v4460, %v4459
    %v4575 = vsel %vm4480, %v4461, %v4574
    %v4576 = vsel %vm4482, %v4548, %v4575
    %v4577 = vsel %vm4478, %v4464, %v4463
    %v4578 = vsel %vm4480, %v4465, %v4577
    %v4579 = vsel %vm4482, %v4549, %v4578
    %v4580 = vsel %vm4478, %v4468, %v4467
    %v4581 = vsel %vm4480, %v4469, %v4580
    %v4582 = vsel %vm4482, %v4550, %v4581
    %v4583 = vsel %vm4478, %v4472, %v4471
    %v4584 = vsel %vm4480, %v4473, %v4583
    %v4585 = vsel %vm4482, %v4551, %v4584
    %v4586 = vsel %vm4478, %v4476, %v4475
    %v4587 = vsel %vm4480, %v4477, %v4586
    %v4588 = vsel %vm4482, %v4552, %v4587
    %4589 = vrot.lane.b32.xlu0 %v4555, 32
    %v4590 = vpop.permute.xlu0 %4589
    %4591 = vrot.lane.b32.xlu0 %v4558, 32
    %v4592 = vpop.permute.xlu0 %4591
    %4593 = vrot.lane.b32.xlu0 %v4561, 32
    %v4594 = vpop.permute.xlu0 %4593
    %4595 = vrot.lane.b32.xlu0 %v4564, 32
    %v4596 = vpop.permute.xlu0 %4595
    %4597 = vrot.lane.b32.xlu0 %v4567, 32
    %v4598 = vpop.permute.xlu0 %4597
    %4599 = vrot.lane.b32.xlu0 %v4570, 32
    %v4600 = vpop.permute.xlu0 %4599
    %4601 = vrot.lane.b32.xlu0 %v4573, 32
    %v4602 = vpop.permute.xlu0 %4601
    %4603 = vrot.lane.b32.xlu0 %v4576, 32
    %v4604 = vpop.permute.xlu0 %4603
    %4605 = vrot.lane.b32.xlu0 %v4579, 32
    %v4606 = vpop.permute.xlu0 %4605
    %4607 = vrot.lane.b32.xlu0 %v4582, 32
    %v4608 = vpop.permute.xlu0 %4607
    %4609 = vrot.lane.b32.xlu0 %v4585, 32
    %v4610 = vpop.permute.xlu0 %4609
    %4611 = vrot.lane.b32.xlu0 %v4588, 32
    %v4612 = vpop.permute.xlu0 %4611
    %v4637 = vperm.slane %v4315, 0
    %v4638 = vperm.slane %v4321, 0
    %v4639 = vperm.slane %v4327, 0
    %v4640 = vperm.slane %v4333, 0
    %v4641 = vperm.slane %v4339, 0
    %v4642 = vperm.slane %v4345, 0
    %v4643 = vperm.slane %v4351, 0
    %v4644 = vperm.slane %v4357, 0
    %v4645 = vperm.slane %v4363, 0
    %v4646 = vperm.slane %v4369, 0
    %v4647 = vperm.slane %v4375, 0
    %v4648 = vperm.slane %v4381, 0
    %v4649 = vsel %vm4478, %v4433, %v4432
    %v4650 = vsel %vm4480, %v4541, %v4649
    %v4651 = vsel %vm4482, %v4637, %v4650
    %v4652 = vsel %vm4478, %v4437, %v4436
    %v4653 = vsel %vm4480, %v4542, %v4652
    %v4654 = vsel %vm4482, %v4638, %v4653
    %v4655 = vsel %vm4478, %v4441, %v4440
    %v4656 = vsel %vm4480, %v4543, %v4655
    %v4657 = vsel %vm4482, %v4639, %v4656
    %v4658 = vsel %vm4478, %v4445, %v4444
    %v4659 = vsel %vm4480, %v4544, %v4658
    %v4660 = vsel %vm4482, %v4640, %v4659
    %v4661 = vsel %vm4478, %v4449, %v4448
    %v4662 = vsel %vm4480, %v4545, %v4661
    %v4663 = vsel %vm4482, %v4641, %v4662
    %v4664 = vsel %vm4478, %v4453, %v4452
    %v4665 = vsel %vm4480, %v4546, %v4664
    %v4666 = vsel %vm4482, %v4642, %v4665
    %v4667 = vsel %vm4478, %v4457, %v4456
    %v4668 = vsel %vm4480, %v4547, %v4667
    %v4669 = vsel %vm4482, %v4643, %v4668
    %v4670 = vsel %vm4478, %v4461, %v4460
    %v4671 = vsel %vm4480, %v4548, %v4670
    %v4672 = vsel %vm4482, %v4644, %v4671
    %v4673 = vsel %vm4478, %v4465, %v4464
    %v4674 = vsel %vm4480, %v4549, %v4673
    %v4675 = vsel %vm4482, %v4645, %v4674
    %v4676 = vsel %vm4478, %v4469, %v4468
    %v4677 = vsel %vm4480, %v4550, %v4676
    %v4678 = vsel %vm4482, %v4646, %v4677
    %v4679 = vsel %vm4478, %v4473, %v4472
    %v4680 = vsel %vm4480, %v4551, %v4679
    %v4681 = vsel %vm4482, %v4647, %v4680
    %v4682 = vsel %vm4478, %v4477, %v4476
    %v4683 = vsel %vm4480, %v4552, %v4682
    %v4684 = vsel %vm4482, %v4648, %v4683
    %4685 = vrot.lane.b32.xlu0 %v4651, 64
    %v4686 = vpop.permute.xlu0 %4685
    %4687 = vrot.lane.b32.xlu0 %v4654, 64
    %v4688 = vpop.permute.xlu0 %4687
    %4689 = vrot.lane.b32.xlu0 %v4657, 64
    %v4690 = vpop.permute.xlu0 %4689
    %4691 = vrot.lane.b32.xlu0 %v4660, 64
    %v4692 = vpop.permute.xlu0 %4691
    %4693 = vrot.lane.b32.xlu0 %v4663, 64
    %v4694 = vpop.permute.xlu0 %4693
    %4695 = vrot.lane.b32.xlu0 %v4666, 64
    %v4696 = vpop.permute.xlu0 %4695
    %4697 = vrot.lane.b32.xlu0 %v4669, 64
    %v4698 = vpop.permute.xlu0 %4697
    %4699 = vrot.lane.b32.xlu0 %v4672, 64
    %v4700 = vpop.permute.xlu0 %4699
    %4701 = vrot.lane.b32.xlu0 %v4675, 64
    %v4702 = vpop.permute.xlu0 %4701
    %4703 = vrot.lane.b32.xlu0 %v4678, 64
    %v4704 = vpop.permute.xlu0 %4703
    %4705 = vrot.lane.b32.xlu0 %v4681, 64
    %v4706 = vpop.permute.xlu0 %4705
    %4707 = vrot.lane.b32.xlu0 %v4684, 64
    %v4708 = vpop.permute.xlu0 %4707
    %vm4721 = vcmask 261120
    %v4722 = vsel %vm4721, %v4483, %v4590
    %v4723 = vsel %vm4721, %v4486, %v4592
    %v4724 = vsel %vm4721, %v4489, %v4594
    %v4725 = vsel %vm4721, %v4492, %v4596
    %v4726 = vsel %vm4721, %v4495, %v4598
    %v4727 = vsel %vm4721, %v4498, %v4600
    %v4728 = vsel %vm4721, %v4501, %v4602
    %v4729 = vsel %vm4721, %v4504, %v4604
    %v4730 = vsel %vm4721, %v4507, %v4606
    %v4731 = vsel %vm4721, %v4510, %v4608
    %v4732 = vsel %vm4721, %v4513, %v4610
    %v4733 = vsel %vm4721, %v4516, %v4612
    %vm4734 = vcmask 523264
    %v4735 = vsel %vm4734, %v4722, %v4686
    %v4736 = vsel %vm4734, %v4723, %v4688
    %v4737 = vsel %vm4734, %v4724, %v4690
    %v4738 = vsel %vm4734, %v4725, %v4692
    %v4739 = vsel %vm4734, %v4726, %v4694
    %v4740 = vsel %vm4734, %v4727, %v4696
    %v4741 = vsel %vm4734, %v4728, %v4698
    %v4742 = vsel %vm4734, %v4729, %v4700
    %v4743 = vsel %vm4734, %v4730, %v4702
    %v4744 = vsel %vm4734, %v4731, %v4704
    %v4745 = vsel %vm4734, %v4732, %v4706
    %v4746 = vsel %vm4734, %v4733, %v4708
    %v4747 = vld [vmem:[%s4] sm:$0xff]
    %v4748 = vld [vmem:[%s4 + $0x8] sm:$0xff]
    %v4749 = vld [vmem:[%s4 + $0x10] sm:$0xff]
    %v4750 = vld [vmem:[%s4 + $0x18] sm:$0xff]
    %v4751 = vld [vmem:[%s4 + $0x20] sm:$0xff]
    %v4752 = vld [vmem:[%s4 + $0x28] sm:$0xff]
    %v4753 = vld [vmem:[%s4 + $0x30] sm:$0xff]
    %v4754 = vld [vmem:[%s4 + $0x38] sm:$0xff]
    %v4755 = vld [vmem:[%s4 + $0x40] sm:$0xff]
    %v4756 = vld [vmem:[%s4 + $0x48] sm:$0xff]
    %v4757 = vld [vmem:[%s4 + $0x50] sm:$0xff]
    %v4758 = vld [vmem:[%s4 + $0x58] sm:$0xff]
    %s4759 = scalar_lea.vmem %s4, 96
    %v4760 = vld [vmem:[%s4759] sm:$0xff]
    %v4761 = vld [vmem:[%s4759 + $0x8] sm:$0xff]
    %v4762 = vld [vmem:[%s4759 + $0x10] sm:$0xff]
    %v4763 = vld [vmem:[%s4759 + $0x18] sm:$0xff]
    %v4764 = vld [vmem:[%s4759 + $0x20] sm:$0xff]
    %v4765 = vld [vmem:[%s4759 + $0x28] sm:$0xff]
    %v4766 = vld [vmem:[%s4759 + $0x30] sm:$0xff]
    %v4767 = vld [vmem:[%s4759 + $0x38] sm:$0xff]
    %v4768 = vld [vmem:[%s4759 + $0x40] sm:$0xff]
    %v4769 = vld [vmem:[%s4759 + $0x48] sm:$0xff]
    %v4770 = vld [vmem:[%s4759 + $0x50] sm:$0xff]
    %v4771 = vld [vmem:[%s4759 + $0x58] sm:$0xff]
    %4780 = vst [vmem:[#allocation1] ss:$2 sm:$0xff] %v4736
    %s4781 = scalar_lea.vmem [#allocation1], 1
    %4782 = vst [vmem:[%s4781] ss:$2 sm:$0xff] %v4737
    %s4783 = scalar_lea.vmem [#allocation1], 16
    %4784 = vst [vmem:[%s4783] ss:$2 sm:$0xff] %v4738
    %s4785 = scalar_lea.vmem [#allocation1], 17
    %4786 = vst [vmem:[%s4785] ss:$2 sm:$0xff] %v4739
    %s4787 = scalar_lea.vmem [#allocation1], 32
    %4788 = vst [vmem:[%s4787] ss:$2 sm:$0xff] %v4742
    %s4789 = scalar_lea.vmem [#allocation1], 33
    %4790 = vst [vmem:[%s4789] ss:$2 sm:$0xff] %v4743
    %s4791 = scalar_lea.vmem [#allocation1], 48
    %4792 = vst [vmem:[%s4791] ss:$2 sm:$0xff] %v4744
    %s4793 = scalar_lea.vmem [#allocation1], 49
    %4794 = vst [vmem:[%s4793] ss:$2 sm:$0xff] %v4745
    %v4795 = vld.sshfl [vmem:[#allocation1] sm:$0xff pattern:$0x75316420]
    %v4796 = vld.sshfl [vmem:[#allocation1 + $0x10] sm:$0xff pattern:$0x75316420]
    %v4797 = vld.sshfl [vmem:[#allocation1 + $0x20] sm:$0xff pattern:$0x75316420]
    %v4798 = vld.sshfl [vmem:[#allocation1 + $0x30] sm:$0xff pattern:$0x75316420]
    %vm4799 = vcmask 785408
    %v4800 = vsel %vm4799, %v4795, 0
    %v4802 = vsel %vm4799, %v4796, 0
    %v4804 = vsel %vm4799, %v4797, 0
    %v4806 = vsel %vm4799, %v4798, 0
    %4808 = vmatpush.msra.mxu0 0.0
    %4809 = vmatpush.msra.mxu0 0.0
    %4810 = vmatpush.msra.mxu0 0.0
    %4811 = vmatpush.msra.mxu0 0.0
    %4812 = vmatpush.msra.mxu0 %v4771
    %4813 = vmatpush.msra.mxu0 %v4770
    %4814 = vmatpush.msra.mxu0 %v4769
    %4815 = vmatpush.msra.mxu0 %v4768
    %4816 = vmatpush.msra.mxu0 %v4767
    %4817 = vmatpush.msra.mxu0 %v4766
    %4818 = vmatpush.msra.mxu0 %v4765
    %4819 = vmatpush.msra.mxu0 %v4764
    %4820 = vmatpush.msra.mxu0 %v4763
    %4821 = vmatpush.msra.mxu0 %v4762
    %4822 = vmatpush.msra.mxu0 %v4761
    %4823 = vmatpush.msra.mxu0 %v4760
    %4824 = vmatmul.f32.gmra.mxu0 %v4800
    %v4825 = vpop.f32.mrf.mxu0
    %v4826 = vadd.f32 0.0, %v4825
    %4827 = vmatmul.f32.gmra.mxu0 %v4802
    %v4828 = vpop.f32.mrf.mxu0
    %v4829 = vadd.f32 0.0, %v4828
    %4830 = vmatmul.f32.gmra.mxu0 %v4804
    %v4831 = vpop.f32.mrf.mxu0
    %v4832 = vadd.f32 0.0, %v4831
    %4833 = vmatmul.f32.gmra.mxu0 %v4806
    %v4834 = vpop.f32.mrf.mxu0
    %v4835 = vadd.f32 0.0, %v4834
    %4836 = vdwg.mxu0
    %4839 = vst [vmem:[#allocation1] ss:$2 sm:$0xff] %v4735
    %s4840 = scalar_lea.vmem [#allocation1], 1
    %4841 = vst [vmem:[%s4840] ss:$2 sm:$0xff] %v4736
    %s4842 = scalar_lea.vmem [#allocation1], 16
    %4843 = vst [vmem:[%s4842] ss:$2 sm:$0xff] %v4737
    %s4844 = scalar_lea.vmem [#allocation1], 17
    %4845 = vst [vmem:[%s4844] ss:$2 sm:$0xff] %v4738
    %s4846 = scalar_lea.vmem [#allocation1], 32
    %4847 = vst [vmem:[%s4846] ss:$2 sm:$0xff] %v4741
    %s4848 = scalar_lea.vmem [#allocation1], 33
    %4849 = vst [vmem:[%s4848] ss:$2 sm:$0xff] %v4742
    %s4850 = scalar_lea.vmem [#allocation1], 48
    %4851 = vst [vmem:[%s4850] ss:$2 sm:$0xff] %v4743
    %s4852 = scalar_lea.vmem [#allocation1], 49
    %4853 = vst [vmem:[%s4852] ss:$2 sm:$0xff] %v4744
    %v4854 = vld.sshfl [vmem:[#allocation1] sm:$0xff pattern:$0x75316420]
    %v4855 = vld.sshfl [vmem:[#allocation1 + $0x10] sm:$0xff pattern:$0x75316420]
    %v4856 = vld.sshfl [vmem:[#allocation1 + $0x20] sm:$0xff pattern:$0x75316420]
    %v4857 = vld.sshfl [vmem:[#allocation1 + $0x30] sm:$0xff pattern:$0x75316420]
    %v4858 = vsel %vm4799, %v4854, 0
    %v4860 = vsel %vm4799, %v4855, 0
    %v4862 = vsel %vm4799, %v4856, 0
    %v4864 = vsel %vm4799, %v4857, 0
    %4866 = vmatpush.msra.mxu0 0.0
    %4867 = vmatpush.msra.mxu0 0.0
    %4868 = vmatpush.msra.mxu0 0.0
    %4869 = vmatpush.msra.mxu0 0.0
    %4870 = vmatpush.msra.mxu0 %v4758
    %4871 = vmatpush.msra.mxu0 %v4757
    %4872 = vmatpush.msra.mxu0 %v4756
    %4873 = vmatpush.msra.mxu0 %v4755
    %4874 = vmatpush.msra.mxu0 %v4754
    %4875 = vmatpush.msra.mxu0 %v4753
    %4876 = vmatpush.msra.mxu0 %v4752
    %4877 = vmatpush.msra.mxu0 %v4751
    %4878 = vmatpush.msra.mxu0 %v4750
    %4879 = vmatpush.msra.mxu0 %v4749
    %4880 = vmatpush.msra.mxu0 %v4748
    %4881 = vmatpush.msra.mxu0 %v4747
    %4882 = vmatmul.f32.gmra.mxu0 %v4858
    %v4883 = vpop.f32.mrf.mxu0
    %v4884 = vadd.f32 %v4826, %v4883
    %4885 = vmatmul.f32.gmra.mxu0 %v4860
    %v4886 = vpop.f32.mrf.mxu0
    %v4887 = vadd.f32 %v4829, %v4886
    %4888 = vmatmul.f32.gmra.mxu0 %v4862
    %v4889 = vpop.f32.mrf.mxu0
    %v4890 = vadd.f32 %v4832, %v4889
    %4891 = vmatmul.f32.gmra.mxu0 %v4864
    %v4892 = vpop.f32.mrf.mxu0
    %v4893 = vadd.f32 %v4835, %v4892
    %4894 = vdwg.mxu0
    %s4895 = scalar_lea.vmem %s4, 192
    %v4896 = vld [vmem:[%s4895] sm:$0xff]
    %v4897 = vld [vmem:[%s4895 + $0x8] sm:$0xff]
    %v4898 = vld [vmem:[%s4895 + $0x10] sm:$0xff]
    %v4899 = vld [vmem:[%s4895 + $0x18] sm:$0xff]
    %v4900 = vld [vmem:[%s4895 + $0x20] sm:$0xff]
    %v4901 = vld [vmem:[%s4895 + $0x28] sm:$0xff]
    %v4902 = vld [vmem:[%s4895 + $0x30] sm:$0xff]
    %v4903 = vld [vmem:[%s4895 + $0x38] sm:$0xff]
    %v4904 = vld [vmem:[%s4895 + $0x40] sm:$0xff]
    %v4905 = vld [vmem:[%s4895 + $0x48] sm:$0xff]
    %v4906 = vld [vmem:[%s4895 + $0x50] sm:$0xff]
    %v4907 = vld [vmem:[%s4895 + $0x58] sm:$0xff]
    %4910 = vst [vmem:[#allocation1] ss:$2 sm:$0xff] %v4737
    %s4911 = scalar_lea.vmem [#allocation1], 1
    %4912 = vst [vmem:[%s4911] ss:$2 sm:$0xff] %v4738
    %s4913 = scalar_lea.vmem [#allocation1], 16
    %4914 = vst [vmem:[%s4913] ss:$2 sm:$0xff] %v4739
    %s4915 = scalar_lea.vmem [#allocation1], 17
    %4916 = vst [vmem:[%s4915] ss:$2 sm:$0xff] %v4740
    %s4917 = scalar_lea.vmem [#allocation1], 32
    %4918 = vst [vmem:[%s4917] ss:$2 sm:$0xff] %v4743
    %s4919 = scalar_lea.vmem [#allocation1], 33
    %4920 = vst [vmem:[%s4919] ss:$2 sm:$0xff] %v4744
    %s4921 = scalar_lea.vmem [#allocation1], 48
    %4922 = vst [vmem:[%s4921] ss:$2 sm:$0xff] %v4745
    %s4923 = scalar_lea.vmem [#allocation1], 49
    %4924 = vst [vmem:[%s4923] ss:$2 sm:$0xff] %v4746
    %v4925 = vld.sshfl [vmem:[#allocation1] sm:$0xff pattern:$0x75316420]
    %v4926 = vld.sshfl [vmem:[#allocation1 + $0x10] sm:$0xff pattern:$0x75316420]
    %v4927 = vld.sshfl [vmem:[#allocation1 + $0x20] sm:$0xff pattern:$0x75316420]
    %v4928 = vld.sshfl [vmem:[#allocation1 + $0x30] sm:$0xff pattern:$0x75316420]
    %v4929 = vsel %vm4799, %v4925, 0
    %v4931 = vsel %vm4799, %v4926, 0
    %v4933 = vsel %vm4799, %v4927, 0
    %v4935 = vsel %vm4799, %v4928, 0
    %4937 = vmatpush.msra.mxu0 0.0
    %4938 = vmatpush.msra.mxu0 0.0
    %4939 = vmatpush.msra.mxu0 0.0
    %4940 = vmatpush.msra.mxu0 0.0
    %4941 = vmatpush.msra.mxu0 %v4907
    %4942 = vmatpush.msra.mxu0 %v4906
    %4943 = vmatpush.msra.mxu0 %v4905
    %4944 = vmatpush.msra.mxu0 %v4904
    %4945 = vmatpush.msra.mxu0 %v4903
    %4946 = vmatpush.msra.mxu0 %v4902
    %4947 = vmatpush.msra.mxu0 %v4901
    %4948 = vmatpush.msra.mxu0 %v4900
    %4949 = vmatpush.msra.mxu0 %v4899
    %4950 = vmatpush.msra.mxu0 %v4898
    %4951 = vmatpush.msra.mxu0 %v4897
    %4952 = vmatpush.msra.mxu0 %v4896
    %4953 = vmatmul.f32.gmra.mxu0 %v4929
    %v4954 = vpop.f32.mrf.mxu0
    %v4955 = vadd.f32 0.0, %v4954
    %4956 = vmatmul.f32.gmra.mxu0 %v4931
    %v4957 = vpop.f32.mrf.mxu0
    %v4958 = vadd.f32 0.0, %v4957
    %4959 = vmatmul.f32.gmra.mxu0 %v4933
    %v4960 = vpop.f32.mrf.mxu0
    %v4961 = vadd.f32 0.0, %v4960
    %4962 = vmatmul.f32.gmra.mxu0 %v4935
    %v4963 = vpop.f32.mrf.mxu0
    %v4964 = vadd.f32 0.0, %v4963
    %4965 = vdwg.mxu0
    %v4966 = vadd.f32 %v4884, %v4955
    %v4967 = vadd.f32 %v4887, %v4958
    %v4968 = vadd.f32 %v4890, %v4961
    %v4969 = vadd.f32 %v4893, %v4964
    %v4970 = vld [vmem:[%s5] sm:$0x1]
    %v4972 = vperm.slane %v4970, 0
    %v4974 = vadd.f32 %v4966, %v4972
    %v4975 = vadd.f32 %v4967, %v4972
    %v4976 = vadd.f32 %v4968, %v4972
    %v4977 = vadd.f32 %v4969, %v4972
    %v4978 = vmax.f32 %v4974, 0.0
    %v4979 = vmax.f32 %v4975, 0.0
    %v4980 = vmax.f32 %v4976, 0.0
    %v4981 = vmax.f32 %v4977, 0.0
    %v4986 = vrot.slane %v4978, 2
    %v4987 = vrot.slane %v4978, 4
    %v4988 = vrot.slane %v4978, 6
    %v4989 = vrot.slane %v4979, 2
    %v4990 = vrot.slane %v4979, 4
    %v4991 = vrot.slane %v4979, 6
    %v4992 = vrot.slane %v4980, 2
    %v4993 = vrot.slane %v4980, 4
    %v4994 = vrot.slane %v4980, 6
    %v4995 = vrot.slane %v4981, 2
    %v4996 = vrot.slane %v4981, 4
    %v4997 = vrot.slane %v4981, 6
    %v5010 = vrot.slane %v4978, 7
    %v5011 = vrot.slane %v5010, 2
    %v5012 = vrot.slane %v4986, 7
    %v5013 = vrot.slane %v5012, 2
    %v5014 = vrot.slane %v4987, 7
    %v5015 = vrot.slane %v5014, 2
    %v5016 = vrot.slane %v4988, 7
    %v5017 = vrot.slane %v5016, 2
    %v5018 = vrot.slane %v4979, 7
    %v5019 = vrot.slane %v5018, 2
    %v5020 = vrot.slane %v4989, 7
    %v5021 = vrot.slane %v5020, 2
    %v5022 = vrot.slane %v4990, 7
    %v5023 = vrot.slane %v5022, 2
    %v5024 = vrot.slane %v4991, 7
    %v5025 = vrot.slane %v5024, 2
    %v5026 = vrot.slane %v4980, 7
    %v5027 = vrot.slane %v5026, 2
    %v5028 = vrot.slane %v4992, 7
    %v5029 = vrot.slane %v5028, 2
    %v5030 = vrot.slane %v4993, 7
    %v5031 = vrot.slane %v5030, 2
    %v5032 = vrot.slane %v4994, 7
    %v5033 = vrot.slane %v5032, 2
    %v5034 = vrot.slane %v4981, 7
    %v5035 = vrot.slane %v5034, 2
    %v5036 = vrot.slane %v4995, 7
    %v5037 = vrot.slane %v5036, 2
    %v5038 = vrot.slane %v4996, 7
    %v5039 = vrot.slane %v5038, 2
    %v5040 = vrot.slane %v4997, 7
    %v5041 = vrot.slane %v5040, 2
    %v5058 = vmax.f32 %v4978, %v5011
    %v5059 = vmax.f32 %v4986, %v5013
    %v5060 = vmax.f32 %v4987, %v5015
    %v5061 = vmax.f32 %v4988, %v5017
    %v5062 = vmax.f32 %v4979, %v5019
    %v5063 = vmax.f32 %v4989, %v5021
    %v5064 = vmax.f32 %v4990, %v5023
    %v5065 = vmax.f32 %v4991, %v5025
    %v5066 = vmax.f32 %v4980, %v5027
    %v5067 = vmax.f32 %v4992, %v5029
    %v5068 = vmax.f32 %v4993, %v5031
    %v5069 = vmax.f32 %v4994, %v5033
    %v5070 = vmax.f32 %v4981, %v5035
    %v5071 = vmax.f32 %v4995, %v5037
    %v5072 = vmax.f32 %v4996, %v5039
    %v5073 = vmax.f32 %v4997, %v5041
    %v5074 = vmax.f32 %v5058, %v5060
    %v5075 = vmax.f32 %v5059, %v5061
    %v5076 = vmax.f32 %v5062, %v5064
    %v5077 = vmax.f32 %v5063, %v5065
    %v5078 = vmax.f32 %v5066, %v5068
    %v5079 = vmax.f32 %v5067, %v5069
    %v5080 = vmax.f32 %v5070, %v5072
    %v5081 = vmax.f32 %v5071, %v5073
    %v5082 = vld [vmem:[%s6] sm:$0xff]
    %v5083 = vld [vmem:[%s6 + $0x8] sm:$0xff]
    %v5084 = vld [vmem:[%s6 + $0x10] sm:$0xff]
    %v5085 = vld [vmem:[%s6 + $0x18] sm:$0xff]
    %v5086 = vld [vmem:[%s6 + $0x20] sm:$0xff]
    %v5087 = vld [vmem:[%s6 + $0x28] sm:$0xff]
    %v5088 = vld [vmem:[%s6 + $0x30] sm:$0xff]
    %v5089 = vld [vmem:[%s6 + $0x38] sm:$0xff]
    %s5090 = scalar_lea.vmem %s6, 64
    %v5091 = vld [vmem:[%s5090] sm:$0xff]
    %v5092 = vld [vmem:[%s5090 + $0x8] sm:$0xff]
    %v5093 = vld [vmem:[%s5090 + $0x10] sm:$0xff]
    %v5094 = vld [vmem:[%s5090 + $0x18] sm:$0xff]
    %v5095 = vld [vmem:[%s5090 + $0x20] sm:$0xff]
    %v5096 = vld [vmem:[%s5090 + $0x28] sm:$0xff]
    %v5097 = vld [vmem:[%s5090 + $0x30] sm:$0xff]
    %v5098 = vld [vmem:[%s5090 + $0x38] sm:$0xff]
    %v5101 = vperm.slane %v5075, 0
    %v5102 = vperm.slane %v5079, 0
    %v5103 = vsel %vm4478, %v5102, %v5101
    %v5104 = vsel %vm4734, %v5103, 0
    %5106 = vmatpush.msra.mxu0 0.0
    %5107 = vmatpush.msra.mxu0 0.0
    %5108 = vmatpush.msra.mxu0 0.0
    %5109 = vmatpush.msra.mxu0 0.0
    %5110 = vmatpush.msra.mxu0 0.0
    %5111 = vmatpush.msra.mxu0 0.0
    %5112 = vmatpush.msra.mxu0 0.0
    %5113 = vmatpush.msra.mxu0 0.0
    %5114 = vmatpush.msra.mxu0 %v5098
    %5115 = vmatpush.msra.mxu0 %v5097
    %5116 = vmatpush.msra.mxu0 %v5096
    %5117 = vmatpush.msra.mxu0 %v5095
    %5118 = vmatpush.msra.mxu0 %v5094
    %5119 = vmatpush.msra.mxu0 %v5093
    %5120 = vmatpush.msra.mxu0 %v5092
    %5121 = vmatpush.msra.mxu0 %v5091
    %5122 = vmatmul.f32.gmra.mxu0 %v5104
    %v5123 = vpop.f32.mrf.mxu0
    %v5124 = vadd.f32 0.0, %v5123
    %5125 = vdwg.mxu0
    %v5128 = vperm.slane %v5074, 0
    %v5129 = vperm.slane %v5078, 0
    %v5130 = vsel %vm4478, %v5129, %v5128
    %v5131 = vsel %vm4734, %v5130, 0
    %5133 = vmatpush.msra.mxu0 0.0
    %5134 = vmatpush.msra.mxu0 0.0
    %5135 = vmatpush.msra.mxu0 0.0
    %5136 = vmatpush.msra.mxu0 0.0
    %5137 = vmatpush.msra.mxu0 0.0
    %5138 = vmatpush.msra.mxu0 0.0
    %5139 = vmatpush.msra.mxu0 0.0
    %5140 = vmatpush.msra.mxu0 0.0
    %5141 = vmatpush.msra.mxu0 %v5089
    %5142 = vmatpush.msra.mxu0 %v5088
    %5143 = vmatpush.msra.mxu0 %v5087
    %5144 = vmatpush.msra.mxu0 %v5086
    %5145 = vmatpush.msra.mxu0 %v5085
    %5146 = vmatpush.msra.mxu0 %v5084
    %5147 = vmatpush.msra.mxu0 %v5083
    %5148 = vmatpush.msra.mxu0 %v5082
    %5149 = vmatmul.f32.gmra.mxu0 %v5131
    %v5150 = vpop.f32.mrf.mxu0
    %v5151 = vadd.f32 %v5124, %v5150
    %5152 = vdwg.mxu0
    %s5153 = scalar_lea.vmem %s6, 128
    %v5154 = vld [vmem:[%s5153] sm:$0xff]
    %v5155 = vld [vmem:[%s5153 + $0x8] sm:$0xff]
    %v5156 = vld [vmem:[%s5153 + $0x10] sm:$0xff]
    %v5157 = vld [vmem:[%s5153 + $0x18] sm:$0xff]
    %v5158 = vld [vmem:[%s5153 + $0x20] sm:$0xff]
    %v5159 = vld [vmem:[%s5153 + $0x28] sm:$0xff]
    %v5160 = vld [vmem:[%s5153 + $0x30] sm:$0xff]
    %v5161 = vld [vmem:[%s5153 + $0x38] sm:$0xff]
    %v5164 = vperm.slane %v5076, 0
    %v5165 = vperm.slane %v5080, 0
    %v5166 = vsel %vm4478, %v5165, %v5164
    %v5167 = vsel %vm4734, %v5166, 0
    %5169 = vmatpush.msra.mxu0 0.0
    %5170 = vmatpush.msra.mxu0 0.0
    %5171 = vmatpush.msra.mxu0 0.0
    %5172 = vmatpush.msra.mxu0 0.0
    %5173 = vmatpush.msra.mxu0 0.0
    %5174 = vmatpush.msra.mxu0 0.0
    %5175 = vmatpush.msra.mxu0 0.0
    %5176 = vmatpush.msra.mxu0 0.0
    %5177 = vmatpush.msra.mxu0 %v5161
    %5178 = vmatpush.msra.mxu0 %v5160
    %5179 = vmatpush.msra.mxu0 %v5159
    %5180 = vmatpush.msra.mxu0 %v5158
    %5181 = vmatpush.msra.mxu0 %v5157
    %5182 = vmatpush.msra.mxu0 %v5156
    %5183 = vmatpush.msra.mxu0 %v5155
    %5184 = vmatpush.msra.mxu0 %v5154
    %5185 = vmatmul.f32.gmra.mxu0 %v5167
    %v5186 = vpop.f32.mrf.mxu0
    %v5187 = vadd.f32 0.0, %v5186
    %5188 = vdwg.mxu0
    %v5189 = vadd.f32 %v5151, %v5187
    %s5190 = scalar_lea.vmem %s6, 192
    %v5191 = vld [vmem:[%s5190] sm:$0xff]
    %v5192 = vld [vmem:[%s5190 + $0x8] sm:$0xff]
    %v5193 = vld [vmem:[%s5190 + $0x10] sm:$0xff]
    %v5194 = vld [vmem:[%s5190 + $0x18] sm:$0xff]
    %v5195 = vld [vmem:[%s5190 + $0x20] sm:$0xff]
    %v5196 = vld [vmem:[%s5190 + $0x28] sm:$0xff]
    %v5197 = vld [vmem:[%s5190 + $0x30] sm:$0xff]
    %v5198 = vld [vmem:[%s5190 + $0x38] sm:$0xff]
    %v5201 = vperm.slane %v5077, 0
    %v5202 = vperm.slane %v5081, 0
    %v5203 = vsel %vm4478, %v5202, %v5201
    %v5204 = vsel %vm4734, %v5203, 0
    %5206 = vmatpush.msra.mxu0 0.0
    %5207 = vmatpush.msra.mxu0 0.0
    %5208 = vmatpush.msra.mxu0 0.0
    %5209 = vmatpush.msra.mxu0 0.0
    %5210 = vmatpush.msra.mxu0 0.0
    %5211 = vmatpush.msra.mxu0 0.0
    %5212 = vmatpush.msra.mxu0 0.0
    %5213 = vmatpush.msra.mxu0 0.0
    %5214 = vmatpush.msra.mxu0 %v5198
    %5215 = vmatpush.msra.mxu0 %v5197
    %5216 = vmatpush.msra.mxu0 %v5196
    %5217 = vmatpush.msra.mxu0 %v5195
    %5218 = vmatpush.msra.mxu0 %v5194
    %5219 = vmatpush.msra.mxu0 %v5193
    %5220 = vmatpush.msra.mxu0 %v5192
    %5221 = vmatpush.msra.mxu0 %v5191
    %5222 = vmatmul.f32.gmra.mxu0 %v5204
    %v5223 = vpop.f32.mrf.mxu0
    %v5224 = vadd.f32 0.0, %v5223
    %5225 = vdwg.mxu0
    %v5226 = vadd.f32 %v5189, %v5224
    %v5227 = vld [vmem:[%s7] sm:$0x1]
    %v5229 = vperm.slane %v5227, 0
    %v5231 = vadd.f32 %v5226, %v5229
    %v5232 = vmax.f32 %v5231, 0.0
    %v5233 = vld [vmem:[%s1] sm:$0x3]
    %v5234 = vld [vmem:[%s8] sm:$0xff]
    %v5235 = vld [vmem:[%s8 + $0x8] sm:$0xff]
    %v5236 = vld [vmem:[%s8 + $0x10] sm:$0xff]
    %v5237 = vld [vmem:[%s8 + $0x18] sm:$0xff]
    %v5238 = vld [vmem:[%s9] sm:$0x1]
    %v5240 = vperm.slane %v5238, 0
    %v5243 = vsel %vm4721, %v5233, 0
    %5245 = vmatpush.msra.mxu0 0.0
    %5246 = vmatpush.msra.mxu0 0.0
    %5247 = vmatpush.msra.mxu0 0.0
    %5248 = vmatpush.msra.mxu0 0.0
    %5249 = vmatpush.msra.mxu0 0.0
    %5250 = vmatpush.msra.mxu0 0.0
    %5251 = vmatpush.msra.mxu0 0.0
    %5252 = vmatpush.msra.mxu0 0.0
    %5253 = vmatpush.msra.mxu0 0.0
    %5254 = vmatpush.msra.mxu0 0.0
    %5255 = vmatpush.msra.mxu0 0.0
    %5256 = vmatpush.msra.mxu0 0.0
    %5257 = vmatpush.msra.mxu0 %v5237
    %5258 = vmatpush.msra.mxu0 %v5236
    %5259 = vmatpush.msra.mxu0 %v5235
    %5260 = vmatpush.msra.mxu0 %v5234
    %5261 = vmatmul.f32.gmra.mxu0 %v5243
    %v5262 = vpop.f32.mrf.mxu0
    %v5263 = vadd.f32 %v5240, %v5262
    %5264 = vdwg.mxu0
    %v5265 = vmax.f32 %v5263, 0.0
    %v5266 = vld [vmem:[%s10] sm:$0xff]
    %v5267 = vld [vmem:[%s10 + $0x8] sm:$0xff]
    %v5268 = vld [vmem:[%s10 + $0x10] sm:$0xff]
    %v5269 = vld [vmem:[%s10 + $0x18] sm:$0xff]
    %v5270 = vld [vmem:[%s10 + $0x20] sm:$0xff]
    %v5271 = vld [vmem:[%s10 + $0x28] sm:$0xff]
    %v5272 = vld [vmem:[%s10 + $0x30] sm:$0xff]
    %v5273 = vld [vmem:[%s10 + $0x38] sm:$0xff]
    %v5274 = vld [vmem:[%s10 + $0x40] sm:$0xff]
    %v5275 = vld [vmem:[%s10 + $0x48] sm:$0xff]
    %v5276 = vld [vmem:[%s10 + $0x50] sm:$0xff]
    %v5277 = vld [vmem:[%s10 + $0x58] sm:$0xff]
    %v5278 = vld [vmem:[%s10 + $0x60] sm:$0xff]
    %v5279 = vld [vmem:[%s10 + $0x68] sm:$0xff]
    %v5280 = vld [vmem:[%s10 + $0x70] sm:$0xff]
    %v5281 = vld [vmem:[%s10 + $0x78] sm:$0xff]
    %v5282 = vld [vmem:[%s11] sm:$0x1]
    %v5284 = vperm.slane %v5282, 0
    %5286 = vmatpush.msra.mxu0 %v5281
    %5287 = vmatpush.msra.mxu0 %v5280
    %5288 = vmatpush.msra.mxu0 %v5279
    %5289 = vmatpush.msra.mxu0 %v5278
    %5290 = vmatpush.msra.mxu0 %v5277
    %5291 = vmatpush.msra.mxu0 %v5276
    %5292 = vmatpush.msra.mxu0 %v5275
    %5293 = vmatpush.msra.mxu0 %v5274
    %5294 = vmatpush.msra.mxu0 %v5273
    %5295 = vmatpush.msra.mxu0 %v5272
    %5296 = vmatpush.msra.mxu0 %v5271
    %5297 = vmatpush.msra.mxu0 %v5270
    %5298 = vmatpush.msra.mxu0 %v5269
    %5299 = vmatpush.msra.mxu0 %v5268
    %5300 = vmatpush.msra.mxu0 %v5267
    %5301 = vmatpush.msra.mxu0 %v5266
    %5302 = vmatmul.f32.gmra.mxu0 %v5265
    %v5303 = vpop.f32.mrf.mxu0
    %v5304 = vadd.f32 %v5284, %v5303
    %5305 = vdwg.mxu0
    %v5306 = vmax.f32 %v5304, 0.0
    %v5307 = vld [vmem:[%s12] sm:$0xff]
    %v5308 = vld [vmem:[%s12 + $0x8] sm:$0xff]
    %v5309 = vld [vmem:[%s12 + $0x10] sm:$0xff]
    %v5310 = vld [vmem:[%s12 + $0x18] sm:$0xff]
    %v5311 = vld [vmem:[%s12 + $0x20] sm:$0xff]
    %v5312 = vld [vmem:[%s12 + $0x28] sm:$0xff]
    %v5313 = vld [vmem:[%s12 + $0x30] sm:$0xff]
    %v5314 = vld [vmem:[%s12 + $0x38] sm:$0xff]
    %v5315 = vld [vmem:[%s13] sm:$0xff]
    %v5316 = vld [vmem:[%s13 + $0x8] sm:$0xff]
    %v5317 = vld [vmem:[%s13 + $0x10] sm:$0xff]
    %v5318 = vld [vmem:[%s13 + $0x18] sm:$0xff]
    %v5319 = vld [vmem:[%s13 + $0x20] sm:$0xff]
    %v5320 = vld [vmem:[%s13 + $0x28] sm:$0xff]
    %v5321 = vld [vmem:[%s13 + $0x30] sm:$0xff]
    %v5322 = vld [vmem:[%s13 + $0x38] sm:$0xff]
    %v5324 = vsel %vm4734, %v5306, 0
    %5326 = vmatpush.msra.mxu0 0.0
    %5327 = vmatpush.msra.mxu0 0.0
    %5328 = vmatpush.msra.mxu0 0.0
    %5329 = vmatpush.msra.mxu0 0.0
    %5330 = vmatpush.msra.mxu0 0.0
    %5331 = vmatpush.msra.mxu0 0.0
    %5332 = vmatpush.msra.mxu0 0.0
    %5333 = vmatpush.msra.mxu0 0.0
    %5334 = vmatpush.msra.mxu0 %v5322
    %5335 = vmatpush.msra.mxu0 %v5321
    %5336 = vmatpush.msra.mxu0 %v5320
    %5337 = vmatpush.msra.mxu0 %v5319
    %5338 = vmatpush.msra.mxu0 %v5318
    %5339 = vmatpush.msra.mxu0 %v5317
    %5340 = vmatpush.msra.mxu0 %v5316
    %5341 = vmatpush.msra.mxu0 %v5315
    %5342 = vmatmul.f32.gmra.mxu0 %v5324
    %v5343 = vpop.f32.mrf.mxu0
    %v5344 = vadd.f32 0.0, %v5343
    %5345 = vdwg.mxu0
    %v5347 = vsel %vm4734, %v5232, 0
    %5349 = vmatpush.msra.mxu0 0.0
    %5350 = vmatpush.msra.mxu0 0.0
    %5351 = vmatpush.msra.mxu0 0.0
    %5352 = vmatpush.msra.mxu0 0.0
    %5353 = vmatpush.msra.mxu0 0.0
    %5354 = vmatpush.msra.mxu0 0.0
    %5355 = vmatpush.msra.mxu0 0.0
    %5356 = vmatpush.msra.mxu0 0.0
    %5357 = vmatpush.msra.mxu0 %v5314
    %5358 = vmatpush.msra.mxu0 %v5313
    %5359 = vmatpush.msra.mxu0 %v5312
    %5360 = vmatpush.msra.mxu0 %v5311
    %5361 = vmatpush.msra.mxu0 %v5310
    %5362 = vmatpush.msra.mxu0 %v5309
    %5363 = vmatpush.msra.mxu0 %v5308
    %5364 = vmatpush.msra.mxu0 %v5307
    %5365 = vmatmul.f32.gmra.mxu0 %v5347
    %v5366 = vpop.f32.mrf.mxu0
    %v5367 = vadd.f32 %v5344, %v5366
    %5368 = vdwg.mxu0
    %v5369 = vld [vmem:[%s14] sm:$0x1]
    %v5371 = vperm.slane %v5369, 0
    %v5373 = vadd.f32 %v5367, %v5371
    %v5374 = vmax.f32 %v5373, 0.0
    %v5375 = vld [vmem:[%s15] sm:$0xff]
    %v5376 = vld [vmem:[%s15 + $0x8] sm:$0xff]
    %v5377 = vld [vmem:[%s15 + $0x10] sm:$0xff]
    %v5378 = vld [vmem:[%s15 + $0x18] sm:$0xff]
    %v5379 = vld [vmem:[%s15 + $0x20] sm:$0xff]
    %v5380 = vld [vmem:[%s15 + $0x28] sm:$0xff]
    %v5381 = vld [vmem:[%s15 + $0x30] sm:$0xff]
    %v5382 = vld [vmem:[%s15 + $0x38] sm:$0xff]
    %v5383 = vld [vmem:[%s15 + $0x40] sm:$0xff]
    %v5384 = vld [vmem:[%s15 + $0x48] sm:$0xff]
    %v5385 = vld [vmem:[%s15 + $0x50] sm:$0xff]
    %v5386 = vld [vmem:[%s15 + $0x58] sm:$0xff]
    %v5387 = vld [vmem:[%s15 + $0x60] sm:$0xff]
    %v5388 = vld [vmem:[%s15 + $0x68] sm:$0xff]
    %v5389 = vld [vmem:[%s15 + $0x70] sm:$0xff]
    %v5390 = vld [vmem:[%s15 + $0x78] sm:$0xff]
    %v5391 = vld [vmem:[%s16] sm:$0x1]
    %v5393 = vperm.slane %v5391, 0
    %5395 = vmatpush.msra.mxu0 %v5390
    %5396 = vmatpush.msra.mxu0 %v5389
    %5397 = vmatpush.msra.mxu0 %v5388
    %5398 = vmatpush.msra.mxu0 %v5387
    %5399 = vmatpush.msra.mxu0 %v5386
    %5400 = vmatpush.msra.mxu0 %v5385
    %5401 = vmatpush.msra.mxu0 %v5384
    %5402 = vmatpush.msra.mxu0 %v5383
    %5403 = vmatpush.msra.mxu0 %v5382
    %5404 = vmatpush.msra.mxu0 %v5381
    %5405 = vmatpush.msra.mxu0 %v5380
    %5406 = vmatpush.msra.mxu0 %v5379
    %5407 = vmatpush.msra.mxu0 %v5378
    %5408 = vmatpush.msra.mxu0 %v5377
    %5409 = vmatpush.msra.mxu0 %v5376
    %5410 = vmatpush.msra.mxu0 %v5375
    %5411 = vmatmul.f32.gmra.mxu0 %v5374
    %v5412 = vpop.f32.mrf.mxu0
    %v5413 = vadd.f32 %v5393, %v5412
    %5414 = vdwg.mxu0
    %v5415 = vmax.f32 %v5413, 0.0
    %v5416 = vld [vmem:[%s17] sm:$0xff]
    %v5417 = vld [vmem:[%s17 + $0x8] sm:$0xff]
    %v5418 = vld [vmem:[%s17 + $0x10] sm:$0xff]
    %v5419 = vld [vmem:[%s17 + $0x18] sm:$0xff]
    %v5420 = vld [vmem:[%s17 + $0x20] sm:$0xff]
    %v5421 = vld [vmem:[%s17 + $0x28] sm:$0xff]
    %v5422 = vld [vmem:[%s17 + $0x30] sm:$0xff]
    %v5423 = vld [vmem:[%s17 + $0x38] sm:$0xff]
    %v5424 = vld [vmem:[%s18] sm:$0x1]
    %v5426 = vperm.slane %v5424, 0
    %v5429 = vsel %vm4734, %v5415, 0
    %5431 = vmatpush.msra.mxu0 0.0
    %5432 = vmatpush.msra.mxu0 0.0
    %5433 = vmatpush.msra.mxu0 0.0
    %5434 = vmatpush.msra.mxu0 0.0
    %5435 = vmatpush.msra.mxu0 0.0
    %5436 = vmatpush.msra.mxu0 0.0
    %5437 = vmatpush.msra.mxu0 0.0
    %5438 = vmatpush.msra.mxu0 0.0
    %5439 = vmatpush.msra.mxu0 %v5423
    %5440 = vmatpush.msra.mxu0 %v5422
    %5441 = vmatpush.msra.mxu0 %v5421
    %5442 = vmatpush.msra.mxu0 %v5420
    %5443 = vmatpush.msra.mxu0 %v5419
    %5444 = vmatpush.msra.mxu0 %v5418
    %5445 = vmatpush.msra.mxu0 %v5417
    %5446 = vmatpush.msra.mxu0 %v5416
    %5447 = vmatmul.f32.gmra.mxu0 %v5429
    %v5448 = vpop.f32.mrf.mxu0
    %v5449 = vadd.f32 %v5426, %v5448
    %5450 = vdwg.mxu0
    %v5451 = vtanh.pop %v5449
    %vm5452 = vcmask 9216
    %5453 = vst.msk [vmem:[#allocation2] sm:$0x3] %vm5452, %v5451
    // Predicated region
    $region78: #{forward_pallas.1} parent=1 // pred_check
      _
    $region79: #{forward_pallas.1} parent=1 // pred_check_branch
      %5455 = sbr.rel (0) target = $region81
    $region80: #{forward_pallas.1} parent=1 // pred_region
      %5457 = vsyncadd [#allocation3], 0
      %s5459 = sshll.u32 [#allocation2], 4
      %s5460 = int_to_ptr.vmem [resolvable:$true] %s5459
      %s5461 = sshll.u32 %s19, 4
      %s5462 = int_to_ptr.hbm [resolvable:$true] %s5461
      %5464 = dma.vmem_to_hbm [thread:$0]  %s5460, 32, %s5462, [#allocation3]
    $region81: #{forward_pallas.1} parent=1 // pred_fallthru
      _
    // Predicated region
    $region82: #{forward_pallas.1} parent=1 // pred_check
      _
    $region83: #{forward_pallas.1} parent=1 // pred_check_branch
      %5466 = sbr.rel (0) target = $region85
    $region84: #{forward_pallas.1} parent=1 // pred_region
      %5468 = dma.done [#allocation3], 32
    $region85: #{forward_pallas.1} parent=1 // pred_fallthru
      _
    %5469 = vsyncpa [#allocation3], 1

</llo_original>
